<compile_context>
chip_gen: v7x
topology: tpu7x:2x2x1
jax: 0.10.0
libtpu: 0.0.40
codegen_flags: <defaults>
</compile_context>

<pallas_src>
import math

import jax
import jax.numpy as jnp
import numpy as np
from jax.experimental import pallas as pl
from jax.experimental.pallas import tpu as pltpu


def _two_tensorcores() -> bool:
    """True on chips whose 'parallel' grid axes shard across 2 TensorCores (v7x)."""
    try:
        kind = jax.devices()[0].device_kind.lower()
    except Exception:
        return False
    return "v7" in kind


def _make_fused_conv_kernel(Nb, Cout, tap_offsets, SW, tanh):
    def kernel(x_ref, w_ref, b_ref, o_ref):
        # x_ref: (Nb, Cin, Lpad)   zero-padded, row-flattened input (f32)
        # w_ref: (KH*KW, Cout, Cin) per-tap weight matrices
        # b_ref: (Cout, 1)
        # o_ref: (Nb, Cout, SW)    SW = Ho*Wp "virtual padded-width" rows
        bias = jnp.broadcast_to(b_ref[...], (Cout, SW))   # hoisted: ONE broadcast
        for n in range(Nb):                                # static unroll, Nb tiny
            acc = bias                                     # bias folded into accumulation
            for t, off in enumerate(tap_offsets):          # KH*KW shifted matmuls (in-VMEM)
                acc = acc + jnp.dot(
                    w_ref[t], x_ref[n, :, off:off + SW],
                    preferred_element_type=jnp.float32)
            acc = jnp.tanh(acc) if tanh else jnp.maximum(acc, 0.0)
            o_ref[n] = acc.astype(o_ref.dtype)
    return kernel


def gaussian_subnet_block(x_nchw, weight_oihw, bias, *, tanh=False):
    """Conv2d(kernel k, stride 1, padding=1 if k>1 else 0) + Tanh/ReLU, f32."""
    N, Cin, H, W = x_nchw.shape
    Cout, Cin_w, KH, KW = weight_oihw.shape
    assert Cin == Cin_w
    pad = 1 if KH > 1 else 0                  # matches nn.Conv2d(..., padding=1 if k>1 else 0)
    Hp, Wp = H + 2 * pad, W + 2 * pad
    Ho, Wo = Hp - KH + 1, Wp - KW + 1
    SW = Ho * Wp                              # accumulator/output width (padded-width rows)
    max_off = (KH - 1) * Wp + (KW - 1)        # largest tap shift
    rows = math.ceil((max_off + SW) / Wp)     # extra zero rows so every tap slice is in-bounds
    Lpad = rows * Wp

    # --- glue: one pad + free reshape (no im2col expansion in HBM) -----------
    x = jnp.pad(x_nchw.astype(jnp.float32),
                ((0, 0), (0, 0), (pad, rows - H - pad), (pad, pad)))
    x_flat = x.reshape(N, Cin, Lpad)
    w_taps = jnp.transpose(weight_oihw.astype(jnp.float32),
                           (2, 3, 0, 1)).reshape(KH * KW, Cout, Cin)
    b2d = bias.reshape(Cout, 1).astype(jnp.float32)
    tap_offsets = tuple(kh * Wp + kw for kh in range(KH) for kw in range(KW))

    # Grid: batch-parallel split only where it helps (2 TCs on v7x); a single
    # step on single-TC v5e/v6e avoids a pure-overhead pipeline step.
    n_grid = 2 if (_two_tensorcores() and N >= 2 and N % 2 == 0) else 1
    Nb = N // n_grid

    # TODO(synk): for real image sizes add a spatial (row-block) grid axis so the
    # per-step block stays within a per-generation VMEM budget (v7x: 64 MiB phys).
    blk_bytes = 4 * (Nb * Cin * Lpad + KH * KW * Cout * Cin + Cout + Nb * Cout * SW)
    assert 2 * blk_bytes < 16 * 1024 * 1024, "block too large for default VMEM budget"

    flops = 2 * N * Cout * Cin * KH * KW * Ho * Wo
    bytes_accessed = 4 * (N * Cin * Lpad + KH * KW * Cout * Cin + Cout + N * Cout * SW)
    cost = pl.CostEstimate(flops=flops,
                           transcendentals=(N * Cout * Ho * Wo if tanh else 0),
                           bytes_accessed=bytes_accessed)

    out = pl.pallas_call(
        _make_fused_conv_kernel(Nb, Cout, tap_offsets, SW, tanh),
        out_shape=jax.ShapeDtypeStruct((N, Cout, SW), jnp.float32),
        grid=(n_grid,),
        in_specs=[
            pl.BlockSpec((Nb, Cin, Lpad), lambda i: (i, 0, 0)),
            pl.BlockSpec((KH * KW, Cout, Cin), lambda i: (0, 0, 0)),
            pl.BlockSpec((Cout, 1), lambda i: (0, 0)),
        ],
        out_specs=pl.BlockSpec((Nb, Cout, SW), lambda i: (i, 0, 0)),
        compiler_params=pltpu.CompilerParams(dimension_semantics=("parallel",)),
        cost_estimate=cost,
    )(x_flat, w_taps, b2d)

    # Drop the KW-1 junk columns of each padded-width row; reshape is free.
    return out.reshape(N, Cout, Ho, Wp)[:, :, :, :Wo]


def _reference(x_nchw, weight_oihw, bias, tanh):
    """Pure-JAX reference matching torch's Conv2d + activation."""
    K = weight_oihw.shape[2]
    pad = 1 if K > 1 else 0
    y = jax.lax.conv_general_dilated(
        x_nchw, weight_oihw, window_strides=(1, 1),
        padding=[(pad, pad), (pad, pad)],
        dimension_numbers=("NCHW", "OIHW", "NCHW"))
    y = y + bias.reshape(1, -1, 1, 1)
    return jnp.tanh(y) if tanh else jnp.maximum(y, 0.0)


if __name__ == "__main__":
    key = jax.random.PRNGKey(0)
    N, Cin, H, W = 2, 4, 16, 16
    kx, kw1, kw2 = jax.random.split(key, 3)
    x = jax.random.normal(kx, (N, Cin, H, W), jnp.float32)

    ok = True

    # Case 1: kernel=3, ReLU; kaiming_normal_ init (std = sqrt(2/fan_in)), bias=0
    Cout1, K1 = 8, 3
    fan_in1 = Cin * K1 * K1
    w_relu = jax.random.normal(kw1, (Cout1, Cin, K1, K1), jnp.float32) * np.sqrt(2.0 / fan_in1)
    b_relu = jnp.zeros((Cout1,), jnp.float32)
    y1 = gaussian_subnet_block(x, w_relu, b_relu, tanh=False)
    jax.block_until_ready(y1)
    y1_ref = _reference(x, w_relu, b_relu, False)
    ok &= bool(np.allclose(np.asarray(y1), np.asarray(y1_ref), atol=1e-4, rtol=1e-4))

    # Case 2: kernel=1, Tanh; xavier_normal_ with gain('tanh')=5/3, bias=0
    Cout2, K2 = 6, 1
    fan_in2, fan_out2 = Cin * K2 * K2, Cout2 * K2 * K2
    std2 = (5.0 / 3.0) * np.sqrt(2.0 / (fan_in2 + fan_out2))
    w_tanh = jax.random.normal(kw2, (Cout2, Cin, K2, K2), jnp.float32) * std2
    b_tanh = jnp.zeros((Cout2,), jnp.float32)
    y2 = gaussian_subnet_block(x, w_tanh, b_tanh, tanh=True)
    jax.block_until_ready(y2)
    y2_ref = _reference(x, w_tanh, b_tanh, True)
    ok &= bool(np.allclose(np.asarray(y2), np.asarray(y2_ref), atol=1e-4, rtol=1e-4))

    if ok:
        print("KERNEL_OK")
    else:
        raise SystemExit("mismatch vs reference")
</pallas_src>

<mosaic_0001>
module attributes {stable_mosaic.version = 11 : i64} {
  func.func @kernel(%arg0: i32, %arg1: memref<2x4x342xf32, #tpu.memory_space<vmem>>, %arg2: memref<9x8x4xf32, #tpu.memory_space<vmem>>, %arg3: memref<8x1xf32, #tpu.memory_space<vmem>>, %arg4: memref<2x8x288xf32, #tpu.memory_space<vmem>>) attributes {dimension_semantics = [#tpu.dimension_semantics<parallel>], iteration_bounds = array<i64: 1>, scalar_prefetch = 0 : i64, scratch_operands = 0 : i64, tpu.core_type = #tpu.core_type<tc>, window_params = [{transform_indices = @transform_0, window_bounds = array<i64: 2, 4, 342>}, {pipeline_mode = #tpu.pipeline_mode<synchronous>, transform_indices = @transform_1, window_bounds = array<i64: 9, 8, 4>}, {pipeline_mode = #tpu.pipeline_mode<synchronous>, transform_indices = @transform_2, window_bounds = array<i64: 8, 1>}, {transform_indices = @transform_3, window_bounds = array<i64: 2, 8, 288>}]} {
    %c0 = arith.constant 0 : index
    %c0_0 = arith.constant 0 : index
    %0 = vector.load %arg3[%c0, %c0_0] : memref<8x1xf32, #tpu.memory_space<vmem>>, vector<8x1xf32>
    %1 = vector.shape_cast %0 : vector<8x1xf32> to vector<8x1xf32>
    %2 = vector.broadcast %1 : vector<8x1xf32> to vector<8x288xf32>
    %c0_1 = arith.constant 0 : index
    %c0_2 = arith.constant 0 : index
    %c0_3 = arith.constant 0 : index
    %3 = vector.load %arg2[%c0_1, %c0_2, %c0_3] : memref<9x8x4xf32, #tpu.memory_space<vmem>>, vector<1x8x4xf32>
    %4 = vector.shape_cast %3 : vector<1x8x4xf32> to vector<8x4xf32>
    %c0_4 = arith.constant 0 : index
    %c0_5 = arith.constant 0 : index
    %c0_6 = arith.constant 0 : index
    %5 = vector.load %arg1[%c0_4, %c0_5, %c0_6] : memref<2x4x342xf32, #tpu.memory_space<vmem>>, vector<1x4x288xf32>
    %6 = vector.shape_cast %5 : vector<1x4x288xf32> to vector<4x288xf32>
    %cst = arith.constant dense<0.000000e+00> : vector<8x288xf32>
    %7 = tpu.matmul %4, %6, %cst {dimension_numbers = #tpu.dot_dimension_numbers<[1], [0], [0], [1], [0, 0, 1, 1], [], []>} : vector<8x4xf32>, vector<4x288xf32>, vector<8x288xf32> -> vector<8x288xf32>
    %8 = arith.addf %2, %7 : vector<8x288xf32>
    %c1 = arith.constant 1 : index
    %c0_7 = arith.constant 0 : index
    %c0_8 = arith.constant 0 : index
    %9 = vector.load %arg2[%c1, %c0_7, %c0_8] : memref<9x8x4xf32, #tpu.memory_space<vmem>>, vector<1x8x4xf32>
    %10 = vector.shape_cast %9 : vector<1x8x4xf32> to vector<8x4xf32>
    %c0_9 = arith.constant 0 : index
    %c0_10 = arith.constant 0 : index
    %c1_11 = arith.constant 1 : index
    %11 = vector.load %arg1[%c0_9, %c0_10, %c1_11] : memref<2x4x342xf32, #tpu.memory_space<vmem>>, vector<1x4x288xf32>
    %12 = vector.shape_cast %11 : vector<1x4x288xf32> to vector<4x288xf32>
    %cst_12 = arith.constant dense<0.000000e+00> : vector<8x288xf32>
    %13 = tpu.matmul %10, %12, %cst_12 {dimension_numbers = #tpu.dot_dimension_numbers<[1], [0], [0], [1], [0, 0, 1, 1], [], []>} : vector<8x4xf32>, vector<4x288xf32>, vector<8x288xf32> -> vector<8x288xf32>
    %14 = arith.addf %8, %13 : vector<8x288xf32>
    %c2 = arith.constant 2 : index
    %c0_13 = arith.constant 0 : index
    %c0_14 = arith.constant 0 : index
    %15 = vector.load %arg2[%c2, %c0_13, %c0_14] : memref<9x8x4xf32, #tpu.memory_space<vmem>>, vector<1x8x4xf32>
    %16 = vector.shape_cast %15 : vector<1x8x4xf32> to vector<8x4xf32>
    %c0_15 = arith.constant 0 : index
    %c0_16 = arith.constant 0 : index
    %c2_17 = arith.constant 2 : index
    %17 = vector.load %arg1[%c0_15, %c0_16, %c2_17] : memref<2x4x342xf32, #tpu.memory_space<vmem>>, vector<1x4x288xf32>
    %18 = vector.shape_cast %17 : vector<1x4x288xf32> to vector<4x288xf32>
    %cst_18 = arith.constant dense<0.000000e+00> : vector<8x288xf32>
    %19 = tpu.matmul %16, %18, %cst_18 {dimension_numbers = #tpu.dot_dimension_numbers<[1], [0], [0], [1], [0, 0, 1, 1], [], []>} : vector<8x4xf32>, vector<4x288xf32>, vector<8x288xf32> -> vector<8x288xf32>
    %20 = arith.addf %14, %19 : vector<8x288xf32>
    %c3 = arith.constant 3 : index
    %c0_19 = arith.constant 0 : index
    %c0_20 = arith.constant 0 : index
    %21 = vector.load %arg2[%c3, %c0_19, %c0_20] : memref<9x8x4xf32, #tpu.memory_space<vmem>>, vector<1x8x4xf32>
    %22 = vector.shape_cast %21 : vector<1x8x4xf32> to vector<8x4xf32>
    %c0_21 = arith.constant 0 : index
    %c0_22 = arith.constant 0 : index
    %c18 = arith.constant 18 : index
    %23 = vector.load %arg1[%c0_21, %c0_22, %c18] : memref<2x4x342xf32, #tpu.memory_space<vmem>>, vector<1x4x288xf32>
    %24 = vector.shape_cast %23 : vector<1x4x288xf32> to vector<4x288xf32>
    %cst_23 = arith.constant dense<0.000000e+00> : vector<8x288xf32>
    %25 = tpu.matmul %22, %24, %cst_23 {dimension_numbers = #tpu.dot_dimension_numbers<[1], [0], [0], [1], [0, 0, 1, 1], [], []>} : vector<8x4xf32>, vector<4x288xf32>, vector<8x288xf32> -> vector<8x288xf32>
    %26 = arith.addf %20, %25 : vector<8x288xf32>
    %c4 = arith.constant 4 : index
    %c0_24 = arith.constant 0 : index
    %c0_25 = arith.constant 0 : index
    %27 = vector.load %arg2[%c4, %c0_24, %c0_25] : memref<9x8x4xf32, #tpu.memory_space<vmem>>, vector<1x8x4xf32>
    %28 = vector.shape_cast %27 : vector<1x8x4xf32> to vector<8x4xf32>
    %c0_26 = arith.constant 0 : index
    %c0_27 = arith.constant 0 : index
    %c19 = arith.constant 19 : index
    %29 = vector.load %arg1[%c0_26, %c0_27, %c19] : memref<2x4x342xf32, #tpu.memory_space<vmem>>, vector<1x4x288xf32>
    %30 = vector.shape_cast %29 : vector<1x4x288xf32> to vector<4x288xf32>
    %cst_28 = arith.constant dense<0.000000e+00> : vector<8x288xf32>
    %31 = tpu.matmul %28, %30, %cst_28 {dimension_numbers = #tpu.dot_dimension_numbers<[1], [0], [0], [1], [0, 0, 1, 1], [], []>} : vector<8x4xf32>, vector<4x288xf32>, vector<8x288xf32> -> vector<8x288xf32>
    %32 = arith.addf %26, %31 : vector<8x288xf32>
    %c5 = arith.constant 5 : index
    %c0_29 = arith.constant 0 : index
    %c0_30 = arith.constant 0 : index
    %33 = vector.load %arg2[%c5, %c0_29, %c0_30] : memref<9x8x4xf32, #tpu.memory_space<vmem>>, vector<1x8x4xf32>
    %34 = vector.shape_cast %33 : vector<1x8x4xf32> to vector<8x4xf32>
    %c0_31 = arith.constant 0 : index
    %c0_32 = arith.constant 0 : index
    %c20 = arith.constant 20 : index
    %35 = vector.load %arg1[%c0_31, %c0_32, %c20] : memref<2x4x342xf32, #tpu.memory_space<vmem>>, vector<1x4x288xf32>
    %36 = vector.shape_cast %35 : vector<1x4x288xf32> to vector<4x288xf32>
    %cst_33 = arith.constant dense<0.000000e+00> : vector<8x288xf32>
    %37 = tpu.matmul %34, %36, %cst_33 {dimension_numbers = #tpu.dot_dimension_numbers<[1], [0], [0], [1], [0, 0, 1, 1], [], []>} : vector<8x4xf32>, vector<4x288xf32>, vector<8x288xf32> -> vector<8x288xf32>
    %38 = arith.addf %32, %37 : vector<8x288xf32>
    %c6 = arith.constant 6 : index
    %c0_34 = arith.constant 0 : index
    %c0_35 = arith.constant 0 : index
    %39 = vector.load %arg2[%c6, %c0_34, %c0_35] : memref<9x8x4xf32, #tpu.memory_space<vmem>>, vector<1x8x4xf32>
    %40 = vector.shape_cast %39 : vector<1x8x4xf32> to vector<8x4xf32>
    %c0_36 = arith.constant 0 : index
    %c0_37 = arith.constant 0 : index
    %c36 = arith.constant 36 : index
    %41 = vector.load %arg1[%c0_36, %c0_37, %c36] : memref<2x4x342xf32, #tpu.memory_space<vmem>>, vector<1x4x288xf32>
    %42 = vector.shape_cast %41 : vector<1x4x288xf32> to vector<4x288xf32>
    %cst_38 = arith.constant dense<0.000000e+00> : vector<8x288xf32>
    %43 = tpu.matmul %40, %42, %cst_38 {dimension_numbers = #tpu.dot_dimension_numbers<[1], [0], [0], [1], [0, 0, 1, 1], [], []>} : vector<8x4xf32>, vector<4x288xf32>, vector<8x288xf32> -> vector<8x288xf32>
    %44 = arith.addf %38, %43 : vector<8x288xf32>
    %c7 = arith.constant 7 : index
    %c0_39 = arith.constant 0 : index
    %c0_40 = arith.constant 0 : index
    %45 = vector.load %arg2[%c7, %c0_39, %c0_40] : memref<9x8x4xf32, #tpu.memory_space<vmem>>, vector<1x8x4xf32>
    %46 = vector.shape_cast %45 : vector<1x8x4xf32> to vector<8x4xf32>
    %c0_41 = arith.constant 0 : index
    %c0_42 = arith.constant 0 : index
    %c37 = arith.constant 37 : index
    %47 = vector.load %arg1[%c0_41, %c0_42, %c37] : memref<2x4x342xf32, #tpu.memory_space<vmem>>, vector<1x4x288xf32>
    %48 = vector.shape_cast %47 : vector<1x4x288xf32> to vector<4x288xf32>
    %cst_43 = arith.constant dense<0.000000e+00> : vector<8x288xf32>
    %49 = tpu.matmul %46, %48, %cst_43 {dimension_numbers = #tpu.dot_dimension_numbers<[1], [0], [0], [1], [0, 0, 1, 1], [], []>} : vector<8x4xf32>, vector<4x288xf32>, vector<8x288xf32> -> vector<8x288xf32>
    %50 = arith.addf %44, %49 : vector<8x288xf32>
    %c8 = arith.constant 8 : index
    %c0_44 = arith.constant 0 : index
    %c0_45 = arith.constant 0 : index
    %51 = vector.load %arg2[%c8, %c0_44, %c0_45] : memref<9x8x4xf32, #tpu.memory_space<vmem>>, vector<1x8x4xf32>
    %52 = vector.shape_cast %51 : vector<1x8x4xf32> to vector<8x4xf32>
    %c0_46 = arith.constant 0 : index
    %c0_47 = arith.constant 0 : index
    %c38 = arith.constant 38 : index
    %53 = vector.load %arg1[%c0_46, %c0_47, %c38] : memref<2x4x342xf32, #tpu.memory_space<vmem>>, vector<1x4x288xf32>
    %54 = vector.shape_cast %53 : vector<1x4x288xf32> to vector<4x288xf32>
    %cst_48 = arith.constant dense<0.000000e+00> : vector<8x288xf32>
    %55 = tpu.matmul %52, %54, %cst_48 {dimension_numbers = #tpu.dot_dimension_numbers<[1], [0], [0], [1], [0, 0, 1, 1], [], []>} : vector<8x4xf32>, vector<4x288xf32>, vector<8x288xf32> -> vector<8x288xf32>
    %56 = arith.addf %50, %55 : vector<8x288xf32>
    %cst_49 = arith.constant 0.000000e+00 : f32
    %57 = vector.broadcast %cst_49 : f32 to vector<8x288xf32>
    %58 = arith.maximumf %56, %57 : vector<8x288xf32>
    %c0_50 = arith.constant 0 : index
    %c0_51 = arith.constant 0 : index
    %c0_52 = arith.constant 0 : index
    %59 = vector.load %arg4[%c0_50, %c0_51, %c0_52] : memref<2x8x288xf32, #tpu.memory_space<vmem>>, vector<1x8x288xf32>
    %60 = vector.shape_cast %59 : vector<1x8x288xf32> to vector<8x288xf32>
    %61 = vector.shape_cast %58 : vector<8x288xf32> to vector<1x8x288xf32>
    tpu.vector_store %arg4[%c0_50, %c0_51, %c0_52], %61 {strides = array<i32>} : memref<2x8x288xf32, #tpu.memory_space<vmem>>, vector<1x8x288xf32>,
    %c0_53 = arith.constant 0 : index
    %c0_54 = arith.constant 0 : index
    %c0_55 = arith.constant 0 : index
    %62 = vector.load %arg2[%c0_53, %c0_54, %c0_55] : memref<9x8x4xf32, #tpu.memory_space<vmem>>, vector<1x8x4xf32>
    %63 = vector.shape_cast %62 : vector<1x8x4xf32> to vector<8x4xf32>
    %c1_56 = arith.constant 1 : index
    %c0_57 = arith.constant 0 : index
    %c0_58 = arith.constant 0 : index
    %64 = vector.load %arg1[%c1_56, %c0_57, %c0_58] : memref<2x4x342xf32, #tpu.memory_space<vmem>>, vector<1x4x288xf32>
    %65 = vector.shape_cast %64 : vector<1x4x288xf32> to vector<4x288xf32>
    %cst_59 = arith.constant dense<0.000000e+00> : vector<8x288xf32>
    %66 = tpu.matmul %63, %65, %cst_59 {dimension_numbers = #tpu.dot_dimension_numbers<[1], [0], [0], [1], [0, 0, 1, 1], [], []>} : vector<8x4xf32>, vector<4x288xf32>, vector<8x288xf32> -> vector<8x288xf32>
    %67 = arith.addf %2, %66 : vector<8x288xf32>
    %c1_60 = arith.constant 1 : index
    %c0_61 = arith.constant 0 : index
    %c0_62 = arith.constant 0 : index
    %68 = vector.load %arg2[%c1_60, %c0_61, %c0_62] : memref<9x8x4xf32, #tpu.memory_space<vmem>>, vector<1x8x4xf32>
    %69 = vector.shape_cast %68 : vector<1x8x4xf32> to vector<8x4xf32>
    %c1_63 = arith.constant 1 : index
    %c0_64 = arith.constant 0 : index
    %c1_65 = arith.constant 1 : index
    %70 = vector.load %arg1[%c1_63, %c0_64, %c1_65] : memref<2x4x342xf32, #tpu.memory_space<vmem>>, vector<1x4x288xf32>
    %71 = vector.shape_cast %70 : vector<1x4x288xf32> to vector<4x288xf32>
    %cst_66 = arith.constant dense<0.000000e+00> : vector<8x288xf32>
    %72 = tpu.matmul %69, %71, %cst_66 {dimension_numbers = #tpu.dot_dimension_numbers<[1], [0], [0], [1], [0, 0, 1, 1], [], []>} : vector<8x4xf32>, vector<4x288xf32>, vector<8x288xf32> -> vector<8x288xf32>
    %73 = arith.addf %67, %72 : vector<8x288xf32>
    %c2_67 = arith.constant 2 : index
    %c0_68 = arith.constant 0 : index
    %c0_69 = arith.constant 0 : index
    %74 = vector.load %arg2[%c2_67, %c0_68, %c0_69] : memref<9x8x4xf32, #tpu.memory_space<vmem>>, vector<1x8x4xf32>
    %75 = vector.shape_cast %74 : vector<1x8x4xf32> to vector<8x4xf32>
    %c1_70 = arith.constant 1 : index
    %c0_71 = arith.constant 0 : index
    %c2_72 = arith.constant 2 : index
    %76 = vector.load %arg1[%c1_70, %c0_71, %c2_72] : memref<2x4x342xf32, #tpu.memory_space<vmem>>, vector<1x4x288xf32>
    %77 = vector.shape_cast %76 : vector<1x4x288xf32> to vector<4x288xf32>
    %cst_73 = arith.constant dense<0.000000e+00> : vector<8x288xf32>
    %78 = tpu.matmul %75, %77, %cst_73 {dimension_numbers = #tpu.dot_dimension_numbers<[1], [0], [0], [1], [0, 0, 1, 1], [], []>} : vector<8x4xf32>, vector<4x288xf32>, vector<8x288xf32> -> vector<8x288xf32>
    %79 = arith.addf %73, %78 : vector<8x288xf32>
    %c3_74 = arith.constant 3 : index
    %c0_75 = arith.constant 0 : index
    %c0_76 = arith.constant 0 : index
    %80 = vector.load %arg2[%c3_74, %c0_75, %c0_76] : memref<9x8x4xf32, #tpu.memory_space<vmem>>, vector<1x8x4xf32>
    %81 = vector.shape_cast %80 : vector<1x8x4xf32> to vector<8x4xf32>
    %c1_77 = arith.constant 1 : index
    %c0_78 = arith.constant 0 : index
    %c18_79 = arith.constant 18 : index
    %82 = vector.load %arg1[%c1_77, %c0_78, %c18_79] : memref<2x4x342xf32, #tpu.memory_space<vmem>>, vector<1x4x288xf32>
    %83 = vector.shape_cast %82 : vector<1x4x288xf32> to vector<4x288xf32>
    %cst_80 = arith.constant dense<0.000000e+00> : vector<8x288xf32>
    %84 = tpu.matmul %81, %83, %cst_80 {dimension_numbers = #tpu.dot_dimension_numbers<[1], [0], [0], [1], [0, 0, 1, 1], [], []>} : vector<8x4xf32>, vector<4x288xf32>, vector<8x288xf32> -> vector<8x288xf32>
    %85 = arith.addf %79, %84 : vector<8x288xf32>
    %c4_81 = arith.constant 4 : index
    %c0_82 = arith.constant 0 : index
    %c0_83 = arith.constant 0 : index
    %86 = vector.load %arg2[%c4_81, %c0_82, %c0_83] : memref<9x8x4xf32, #tpu.memory_space<vmem>>, vector<1x8x4xf32>
    %87 = vector.shape_cast %86 : vector<1x8x4xf32> to vector<8x4xf32>
    %c1_84 = arith.constant 1 : index
    %c0_85 = arith.constant 0 : index
    %c19_86 = arith.constant 19 : index
    %88 = vector.load %arg1[%c1_84, %c0_85, %c19_86] : memref<2x4x342xf32, #tpu.memory_space<vmem>>, vector<1x4x288xf32>
    %89 = vector.shape_cast %88 : vector<1x4x288xf32> to vector<4x288xf32>
    %cst_87 = arith.constant dense<0.000000e+00> : vector<8x288xf32>
    %90 = tpu.matmul %87, %89, %cst_87 {dimension_numbers = #tpu.dot_dimension_numbers<[1], [0], [0], [1], [0, 0, 1, 1], [], []>} : vector<8x4xf32>, vector<4x288xf32>, vector<8x288xf32> -> vector<8x288xf32>
    %91 = arith.addf %85, %90 : vector<8x288xf32>
    %c5_88 = arith.constant 5 : index
    %c0_89 = arith.constant 0 : index
    %c0_90 = arith.constant 0 : index
    %92 = vector.load %arg2[%c5_88, %c0_89, %c0_90] : memref<9x8x4xf32, #tpu.memory_space<vmem>>, vector<1x8x4xf32>
    %93 = vector.shape_cast %92 : vector<1x8x4xf32> to vector<8x4xf32>
    %c1_91 = arith.constant 1 : index
    %c0_92 = arith.constant 0 : index
    %c20_93 = arith.constant 20 : index
    %94 = vector.load %arg1[%c1_91, %c0_92, %c20_93] : memref<2x4x342xf32, #tpu.memory_space<vmem>>, vector<1x4x288xf32>
    %95 = vector.shape_cast %94 : vector<1x4x288xf32> to vector<4x288xf32>
    %cst_94 = arith.constant dense<0.000000e+00> : vector<8x288xf32>
    %96 = tpu.matmul %93, %95, %cst_94 {dimension_numbers = #tpu.dot_dimension_numbers<[1], [0], [0], [1], [0, 0, 1, 1], [], []>} : vector<8x4xf32>, vector<4x288xf32>, vector<8x288xf32> -> vector<8x288xf32>
    %97 = arith.addf %91, %96 : vector<8x288xf32>
    %c6_95 = arith.constant 6 : index
    %c0_96 = arith.constant 0 : index
    %c0_97 = arith.constant 0 : index
    %98 = vector.load %arg2[%c6_95, %c0_96, %c0_97] : memref<9x8x4xf32, #tpu.memory_space<vmem>>, vector<1x8x4xf32>
    %99 = vector.shape_cast %98 : vector<1x8x4xf32> to vector<8x4xf32>
    %c1_98 = arith.constant 1 : index
    %c0_99 = arith.constant 0 : index
    %c36_100 = arith.constant 36 : index
    %100 = vector.load %arg1[%c1_98, %c0_99, %c36_100] : memref<2x4x342xf32, #tpu.memory_space<vmem>>, vector<1x4x288xf32>
    %101 = vector.shape_cast %100 : vector<1x4x288xf32> to vector<4x288xf32>
    %cst_101 = arith.constant dense<0.000000e+00> : vector<8x288xf32>
    %102 = tpu.matmul %99, %101, %cst_101 {dimension_numbers = #tpu.dot_dimension_numbers<[1], [0], [0], [1], [0, 0, 1, 1], [], []>} : vector<8x4xf32>, vector<4x288xf32>, vector<8x288xf32> -> vector<8x288xf32>
    %103 = arith.addf %97, %102 : vector<8x288xf32>
    %c7_102 = arith.constant 7 : index
    %c0_103 = arith.constant 0 : index
    %c0_104 = arith.constant 0 : index
    %104 = vector.load %arg2[%c7_102, %c0_103, %c0_104] : memref<9x8x4xf32, #tpu.memory_space<vmem>>, vector<1x8x4xf32>
    %105 = vector.shape_cast %104 : vector<1x8x4xf32> to vector<8x4xf32>
    %c1_105 = arith.constant 1 : index
    %c0_106 = arith.constant 0 : index
    %c37_107 = arith.constant 37 : index
    %106 = vector.load %arg1[%c1_105, %c0_106, %c37_107] : memref<2x4x342xf32, #tpu.memory_space<vmem>>, vector<1x4x288xf32>
    %107 = vector.shape_cast %106 : vector<1x4x288xf32> to vector<4x288xf32>
    %cst_108 = arith.constant dense<0.000000e+00> : vector<8x288xf32>
    %108 = tpu.matmul %105, %107, %cst_108 {dimension_numbers = #tpu.dot_dimension_numbers<[1], [0], [0], [1], [0, 0, 1, 1], [], []>} : vector<8x4xf32>, vector<4x288xf32>, vector<8x288xf32> -> vector<8x288xf32>
    %109 = arith.addf %103, %108 : vector<8x288xf32>
    %c8_109 = arith.constant 8 : index
    %c0_110 = arith.constant 0 : index
    %c0_111 = arith.constant 0 : index
    %110 = vector.load %arg2[%c8_109, %c0_110, %c0_111] : memref<9x8x4xf32, #tpu.memory_space<vmem>>, vector<1x8x4xf32>
    %111 = vector.shape_cast %110 : vector<1x8x4xf32> to vector<8x4xf32>
    %c1_112 = arith.constant 1 : index
    %c0_113 = arith.constant 0 : index
    %c38_114 = arith.constant 38 : index
    %112 = vector.load %arg1[%c1_112, %c0_113, %c38_114] : memref<2x4x342xf32, #tpu.memory_space<vmem>>, vector<1x4x288xf32>
    %113 = vector.shape_cast %112 : vector<1x4x288xf32> to vector<4x288xf32>
    %cst_115 = arith.constant dense<0.000000e+00> : vector<8x288xf32>
    %114 = tpu.matmul %111, %113, %cst_115 {dimension_numbers = #tpu.dot_dimension_numbers<[1], [0], [0], [1], [0, 0, 1, 1], [], []>} : vector<8x4xf32>, vector<4x288xf32>, vector<8x288xf32> -> vector<8x288xf32>
    %115 = arith.addf %109, %114 : vector<8x288xf32>
    %cst_116 = arith.constant 0.000000e+00 : f32
    %116 = vector.broadcast %cst_116 : f32 to vector<8x288xf32>
    %117 = arith.maximumf %115, %116 : vector<8x288xf32>
    %c1_117 = arith.constant 1 : index
    %c0_118 = arith.constant 0 : index
    %c0_119 = arith.constant 0 : index
    %118 = vector.load %arg4[%c1_117, %c0_118, %c0_119] : memref<2x8x288xf32, #tpu.memory_space<vmem>>, vector<1x8x288xf32>
    %119 = vector.shape_cast %118 : vector<1x8x288xf32> to vector<8x288xf32>
    %120 = vector.shape_cast %117 : vector<8x288xf32> to vector<1x8x288xf32>
    tpu.vector_store %arg4[%c1_117, %c0_118, %c0_119], %120 {strides = array<i32>} : memref<2x8x288xf32, #tpu.memory_space<vmem>>, vector<1x8x288xf32>,
    return
  }
  func.func @transform_0(%arg0: i32) -> (i32, i32, i32) {
    %c0_i32 = arith.constant 0 : i32
    %c0_i32_0 = arith.constant 0 : i32
    %c0_i32_1 = arith.constant 0 : i32
    return %arg0, %c0_i32, %c0_i32_0 : i32, i32, i32
  }
  func.func @transform_1(%arg0: i32) -> (i32, i32, i32) {
    %c0_i32 = arith.constant 0 : i32
    %c0_i32_0 = arith.constant 0 : i32
    %c0_i32_1 = arith.constant 0 : i32
    %c0_i32_2 = arith.constant 0 : i32
    return %c0_i32, %c0_i32_0, %c0_i32_1 : i32, i32, i32
  }
  func.func @transform_2(%arg0: i32) -> (i32, i32) {
    %c0_i32 = arith.constant 0 : i32
    %c0_i32_0 = arith.constant 0 : i32
    %c0_i32_1 = arith.constant 0 : i32
    return %c0_i32, %c0_i32_0 : i32, i32
  }
  func.func @transform_3(%arg0: i32) -> (i32, i32, i32) {
    %c0_i32 = arith.constant 0 : i32
    %c0_i32_0 = arith.constant 0 : i32
    %c0_i32_1 = arith.constant 0 : i32
    return %arg0, %c0_i32, %c0_i32_0 : i32, i32, i32
  }
}

</mosaic_0001>

<llo_original>
// kernel: tpu_custom_call.1
$region0: #{tpu_custom_call.1}
  #allocation0 [shape = 'u32[]', space=smem, size = 0x4, offset = 0x4, fixed_abs, tag = 'smem constant byte address 0x4 - core index']
  #allocation1 [shape = 'u32[144,128]{1,0:T(1,128)}', space=vmem, size = 0x12000, scoped, tag = 'internal scratch']
  %s0 = inlined_call_operand.vmem [shape: f32[2,4,342], index: 0, kind: input, shape index: {}]
  %s1 = inlined_call_operand.vmem [shape: f32[9,8,4], index: 1, kind: input, shape index: {}]
  %s2 = inlined_call_operand.vmem [shape: f32[8,1], index: 2, kind: input, shape index: {}]
  %s3 = inlined_call_operand.hbm [shape: f32[2,8,288], index: 3, kind: output, shape index: {}]
  %s4 = sld [smem:[#allocation0]]
  $region22: #{tpu_custom_call.1} parent=0
    _
  %s6 = ssub.s32 1, %s4
  %s7 = scalar_select 0, %s6, %s4
  $region1: #{tpu_custom_call.1} parent=0
    #allocation2 [shape = 'u8[24576]{0}', space=vmem, size = 0x6000, scoped, tag = 'output window, operand 0, single buffered']
    #allocation3 [shape = 's32[1]{0}', space=sflag, size = 0x4, scoped, tag = 'scoped memory for tpu_custom_call.1']
    %8 = vsyncpa [#allocation3], 0
    // Predicated region
    $region2: #{tpu_custom_call.1} parent=1 // pred_check
      _
    $region3: #{tpu_custom_call.1} parent=1 // pred_check_branch
      %10 = sbr.rel (0) target = $region5
    $region4: #{tpu_custom_call.1} parent=1 // pred_region
      _
    $region5: #{tpu_custom_call.1} parent=1 // pred_fallthru
      _
    // Predicated region
    $region6: #{tpu_custom_call.1} parent=1 // pred_check
      _
    $region7: #{tpu_custom_call.1} parent=1 // pred_check_branch
      %12 = sbr.rel (0) target = $region9
    $region8: #{tpu_custom_call.1} parent=1 // pred_region
      _
    $region9: #{tpu_custom_call.1} parent=1 // pred_fallthru
      _
    // Predicated region
    $region10: #{tpu_custom_call.1} parent=1 // pred_check
      _
    $region11: #{tpu_custom_call.1} parent=1 // pred_check_branch
      %14 = sbr.rel (0) target = $region13
    $region12: #{tpu_custom_call.1} parent=1 // pred_region
      _
    $region13: #{tpu_custom_call.1} parent=1 // pred_fallthru
      _
    %v15 = vld [vmem:[%s2] sm:$0xff]
    %17 = vset.pattern.permute.xlu0 0
    %18 = vperm.xlu0 %17, %v15
    %v19 = vpop.permute.xlu0 %18
    %v21 = vld [vmem:[%s1] sm:$0xff]
    %v22 = vld [vmem:[%s0] sm:$0xff]
    %v23 = vld [vmem:[%s0 + $0x8] sm:$0xf]
    %v26 = vcombine.high %v22, %v22
    %vm27 = vcmask 31744
    %v29 = vsel %vm27, %v21, 0
    %vm31 = vcmask 1043456
    %v32 = vsel %vm31, %v22, 0
    %v34 = vsel %vm31, %v26, 0
    %v36 = vsel %vm31, %v23, 0
    %38 = vmatprep.subr.mxu0 %v34
    %39 = vmatpush1.msra.mxu0 %v32
    %40 = vmatprep.subr.mxu0 0.0
    %41 = vmatpush1.msra.mxu0 0.0
    %42 = vmatprep.subr.mxu0 0.0
    %43 = vmatpush1.msra.mxu0 0.0
    %44 = vmatprep.subr.mxu0 0.0
    %45 = vmatpush1.msra.mxu0 0.0
    %46 = vmatprep.subr.mxu0 0.0
    %47 = vmatpush1.msra.mxu0 0.0
    %48 = vmatprep.subr.mxu0 0.0
    %49 = vmatpush1.msra.mxu0 0.0
    %50 = vmatprep.subr.mxu0 0.0
    %51 = vmatpush1.msra.mxu0 0.0
    %52 = vmatprep.subr.mxu0 0.0
    %53 = vmatpush1.msra.mxu0 0.0
    %54 = vmatprep.subr.mxu0 0.0
    %55 = vmatpush1.msra.mxu0 0.0
    %56 = vmatprep.subr.mxu0 0.0
    %57 = vmatpush1.msra.mxu0 0.0
    %58 = vmatprep.subr.mxu0 0.0
    %59 = vmatpush1.msra.mxu0 0.0
    %60 = vmatprep.subr.mxu0 0.0
    %61 = vmatpush1.msra.mxu0 0.0
    %62 = vmatprep.subr.mxu0 0.0
    %63 = vmatpush1.msra.mxu0 0.0
    %64 = vmatprep.subr.mxu0 0.0
    %65 = vmatpush1.msra.mxu0 0.0
    %66 = vmatprep.subr.mxu0 0.0
    %67 = vmatpush1.msra.mxu0 0.0
    %68 = vmatprep.subr.mxu0 0.0
    %69 = vmatpush1.msra.mxu0 0.0
    %70 = vmatprep.subr.mxu0 0.0
    %71 = vmatpush1.msra.mxu0 0.0
    %72 = vmatprep.subr.mxu0 0.0
    %73 = vmatpush1.msra.mxu0 0.0
    %74 = vmatprep.subr.mxu0 0.0
    %75 = vmatpush1.msra.mxu0 0.0
    %76 = vmatprep.subr.mxu0 0.0
    %77 = vmatpush1.msra.mxu0 0.0
    %78 = vmatprep.subr.mxu0 0.0
    %79 = vmatpush1.msra.mxu0 0.0
    %80 = vmatprep.subr.mxu0 0.0
    %81 = vmatpush1.msra.mxu0 0.0
    %82 = vmatprep.subr.mxu0 0.0
    %83 = vmatpush1.msra.mxu0 0.0
    %84 = vmatprep.subr.mxu0 0.0
    %85 = vmatpush1.msra.mxu0 0.0
    %86 = vmatprep.subr.mxu0 0.0
    %87 = vmatpush1.msra.mxu0 0.0
    %88 = vmatprep.subr.mxu0 0.0
    %89 = vmatpush1.msra.mxu0 0.0
    %90 = vmatprep.subr.mxu0 0.0
    %91 = vmatpush1.msra.mxu0 0.0
    %92 = vmatprep.subr.mxu0 0.0
    %93 = vmatpush1.msra.mxu0 0.0
    %94 = vmatprep.subr.mxu0 0.0
    %95 = vmatpush1.msra.mxu0 0.0
    %96 = vmatprep.subr.mxu0 0.0
    %97 = vmatpush1.msra.mxu0 0.0
    %98 = vmatprep.subr.mxu0 0.0
    %99 = vmatpush1.msra.mxu0 0.0
    %100 = vmatprep.subr.mxu0 0.0
    %101 = vmatpush1.msra.mxu0 0.0
    %102 = vmatprep.mubr.f32.mxu0 0.0
    %103 = vmatmul.mubr.f32.gmra.mrb[0].mxu0 %v29
    %v104 = vpop.f32.mrb[0].mxu0
    %v105 = vadd.f32 0.0, %v104
    %v106 = vpop.f32.mrb[0].mxu0
    %v107 = vadd.f32 0.0, %v106
    %108 = vdwg.mxu0
    %109 = vmatprep.subr.mxu0 0.0
    %110 = vmatpush1.msra.mxu0 %v36
    %111 = vmatprep.subr.mxu0 0.0
    %112 = vmatpush1.msra.mxu0 0.0
    %113 = vmatprep.subr.mxu0 0.0
    %114 = vmatpush1.msra.mxu0 0.0
    %115 = vmatprep.subr.mxu0 0.0
    %116 = vmatpush1.msra.mxu0 0.0
    %117 = vmatprep.subr.mxu0 0.0
    %118 = vmatpush1.msra.mxu0 0.0
    %119 = vmatprep.subr.mxu0 0.0
    %120 = vmatpush1.msra.mxu0 0.0
    %121 = vmatprep.subr.mxu0 0.0
    %122 = vmatpush1.msra.mxu0 0.0
    %123 = vmatprep.subr.mxu0 0.0
    %124 = vmatpush1.msra.mxu0 0.0
    %125 = vmatprep.subr.mxu0 0.0
    %126 = vmatpush1.msra.mxu0 0.0
    %127 = vmatprep.subr.mxu0 0.0
    %128 = vmatpush1.msra.mxu0 0.0
    %129 = vmatprep.subr.mxu0 0.0
    %130 = vmatpush1.msra.mxu0 0.0
    %131 = vmatprep.subr.mxu0 0.0
    %132 = vmatpush1.msra.mxu0 0.0
    %133 = vmatprep.subr.mxu0 0.0
    %134 = vmatpush1.msra.mxu0 0.0
    %135 = vmatprep.subr.mxu0 0.0
    %136 = vmatpush1.msra.mxu0 0.0
    %137 = vmatprep.subr.mxu0 0.0
    %138 = vmatpush1.msra.mxu0 0.0
    %139 = vmatprep.subr.mxu0 0.0
    %140 = vmatpush1.msra.mxu0 0.0
    %141 = vmatprep.subr.mxu0 0.0
    %142 = vmatpush1.msra.mxu0 0.0
    %143 = vmatprep.subr.mxu0 0.0
    %144 = vmatpush1.msra.mxu0 0.0
    %145 = vmatprep.subr.mxu0 0.0
    %146 = vmatpush1.msra.mxu0 0.0
    %147 = vmatprep.subr.mxu0 0.0
    %148 = vmatpush1.msra.mxu0 0.0
    %149 = vmatprep.subr.mxu0 0.0
    %150 = vmatpush1.msra.mxu0 0.0
    %151 = vmatprep.subr.mxu0 0.0
    %152 = vmatpush1.msra.mxu0 0.0
    %153 = vmatprep.subr.mxu0 0.0
    %154 = vmatpush1.msra.mxu0 0.0
    %155 = vmatprep.subr.mxu0 0.0
    %156 = vmatpush1.msra.mxu0 0.0
    %157 = vmatprep.subr.mxu0 0.0
    %158 = vmatpush1.msra.mxu0 0.0
    %159 = vmatprep.subr.mxu0 0.0
    %160 = vmatpush1.msra.mxu0 0.0
    %161 = vmatprep.subr.mxu0 0.0
    %162 = vmatpush1.msra.mxu0 0.0
    %163 = vmatprep.subr.mxu0 0.0
    %164 = vmatpush1.msra.mxu0 0.0
    %165 = vmatprep.subr.mxu0 0.0
    %166 = vmatpush1.msra.mxu0 0.0
    %167 = vmatprep.subr.mxu0 0.0
    %168 = vmatpush1.msra.mxu0 0.0
    %169 = vmatprep.subr.mxu0 0.0
    %170 = vmatpush1.msra.mxu0 0.0
    %171 = vmatprep.subr.mxu0 0.0
    %172 = vmatpush1.msra.mxu0 0.0
    %173 = vmatprep.mubr.f32.mxu0 0.0
    %174 = vmatmul.mubr.f32.gmra.mrb[0].mxu0 %v29
    %v175 = vpop.f32.mrb[0].mxu0
    %v176 = vadd.f32 0.0, %v175
    %v177 = vpop.f32.mrb[0].mxu0
    %178 = vdwg.mxu0
    %v179 = vadd.f32 %v19, %v105
    %v180 = vadd.f32 %v19, %v107
    %v181 = vadd.f32 %v19, %v176
    %s182 = scalar_lea.vmem %s1, 8
    %v183 = vld [vmem:[%s182] sm:$0xff]
    %v184 = vld [vmem:[%s0] sm:$0xff]
    %v185 = vld [vmem:[%s0 + $0x8] sm:$0xf]
    %v188 = vcombine.high %v184, %v184
    %189 = vrot.lane.b32.xlu0 %v184, 127
    %v190 = vpop.permute.xlu0 %189
    %191 = vrot.lane.b32.xlu0 %v188, 127
    %v192 = vpop.permute.xlu0 %191
    %193 = vrot.lane.b32.xlu0 %v185, 127
    %v194 = vpop.permute.xlu0 %193
    %vm195 = vcmask 1039360
    %v196 = vsel %vm195, %v190, %v192
    %v197 = vsel %vm195, %v192, %v194
    %v199 = vsel %vm27, %v183, 0
    %v201 = vsel %vm31, %v196, 0
    %v203 = vsel %vm31, %v197, 0
    %v205 = vsel %vm31, %v194, 0
    %207 = vmatprep.subr.mxu0 %v203
    %208 = vmatpush1.msra.mxu0 %v201
    %209 = vmatprep.subr.mxu0 0.0
    %210 = vmatpush1.msra.mxu0 0.0
    %211 = vmatprep.subr.mxu0 0.0
    %212 = vmatpush1.msra.mxu0 0.0
    %213 = vmatprep.subr.mxu0 0.0
    %214 = vmatpush1.msra.mxu0 0.0
    %215 = vmatprep.subr.mxu0 0.0
    %216 = vmatpush1.msra.mxu0 0.0
    %217 = vmatprep.subr.mxu0 0.0
    %218 = vmatpush1.msra.mxu0 0.0
    %219 = vmatprep.subr.mxu0 0.0
    %220 = vmatpush1.msra.mxu0 0.0
    %221 = vmatprep.subr.mxu0 0.0
    %222 = vmatpush1.msra.mxu0 0.0
    %223 = vmatprep.subr.mxu0 0.0
    %224 = vmatpush1.msra.mxu0 0.0
    %225 = vmatprep.subr.mxu0 0.0
    %226 = vmatpush1.msra.mxu0 0.0
    %227 = vmatprep.subr.mxu0 0.0
    %228 = vmatpush1.msra.mxu0 0.0
    %229 = vmatprep.subr.mxu0 0.0
    %230 = vmatpush1.msra.mxu0 0.0
    %231 = vmatprep.subr.mxu0 0.0
    %232 = vmatpush1.msra.mxu0 0.0
    %233 = vmatprep.subr.mxu0 0.0
    %234 = vmatpush1.msra.mxu0 0.0
    %235 = vmatprep.subr.mxu0 0.0
    %236 = vmatpush1.msra.mxu0 0.0
    %237 = vmatprep.subr.mxu0 0.0
    %238 = vmatpush1.msra.mxu0 0.0
    %239 = vmatprep.subr.mxu0 0.0
    %240 = vmatpush1.msra.mxu0 0.0
    %241 = vmatprep.subr.mxu0 0.0
    %242 = vmatpush1.msra.mxu0 0.0
    %243 = vmatprep.subr.mxu0 0.0
    %244 = vmatpush1.msra.mxu0 0.0
    %245 = vmatprep.subr.mxu0 0.0
    %246 = vmatpush1.msra.mxu0 0.0
    %247 = vmatprep.subr.mxu0 0.0
    %248 = vmatpush1.msra.mxu0 0.0
    %249 = vmatprep.subr.mxu0 0.0
    %250 = vmatpush1.msra.mxu0 0.0
    %251 = vmatprep.subr.mxu0 0.0
    %252 = vmatpush1.msra.mxu0 0.0
    %253 = vmatprep.subr.mxu0 0.0
    %254 = vmatpush1.msra.mxu0 0.0
    %255 = vmatprep.subr.mxu0 0.0
    %256 = vmatpush1.msra.mxu0 0.0
    %257 = vmatprep.subr.mxu0 0.0
    %258 = vmatpush1.msra.mxu0 0.0
    %259 = vmatprep.subr.mxu0 0.0
    %260 = vmatpush1.msra.mxu0 0.0
    %261 = vmatprep.subr.mxu0 0.0
    %262 = vmatpush1.msra.mxu0 0.0
    %263 = vmatprep.subr.mxu0 0.0
    %264 = vmatpush1.msra.mxu0 0.0
    %265 = vmatprep.subr.mxu0 0.0
    %266 = vmatpush1.msra.mxu0 0.0
    %267 = vmatprep.subr.mxu0 0.0
    %268 = vmatpush1.msra.mxu0 0.0
    %269 = vmatprep.subr.mxu0 0.0
    %270 = vmatpush1.msra.mxu0 0.0
    %271 = vmatprep.mubr.f32.mxu0 0.0
    %272 = vmatmul.mubr.f32.gmra.mrb[0].mxu0 %v199
    %v273 = vpop.f32.mrb[0].mxu0
    %v274 = vadd.f32 0.0, %v273
    %v275 = vpop.f32.mrb[0].mxu0
    %v276 = vadd.f32 0.0, %v275
    %277 = vdwg.mxu0
    %278 = vmatprep.subr.mxu0 0.0
    %279 = vmatpush1.msra.mxu0 %v205
    %280 = vmatprep.subr.mxu0 0.0
    %281 = vmatpush1.msra.mxu0 0.0
    %282 = vmatprep.subr.mxu0 0.0
    %283 = vmatpush1.msra.mxu0 0.0
    %284 = vmatprep.subr.mxu0 0.0
    %285 = vmatpush1.msra.mxu0 0.0
    %286 = vmatprep.subr.mxu0 0.0
    %287 = vmatpush1.msra.mxu0 0.0
    %288 = vmatprep.subr.mxu0 0.0
    %289 = vmatpush1.msra.mxu0 0.0
    %290 = vmatprep.subr.mxu0 0.0
    %291 = vmatpush1.msra.mxu0 0.0
    %292 = vmatprep.subr.mxu0 0.0
    %293 = vmatpush1.msra.mxu0 0.0
    %294 = vmatprep.subr.mxu0 0.0
    %295 = vmatpush1.msra.mxu0 0.0
    %296 = vmatprep.subr.mxu0 0.0
    %297 = vmatpush1.msra.mxu0 0.0
    %298 = vmatprep.subr.mxu0 0.0
    %299 = vmatpush1.msra.mxu0 0.0
    %300 = vmatprep.subr.mxu0 0.0
    %301 = vmatpush1.msra.mxu0 0.0
    %302 = vmatprep.subr.mxu0 0.0
    %303 = vmatpush1.msra.mxu0 0.0
    %304 = vmatprep.subr.mxu0 0.0
    %305 = vmatpush1.msra.mxu0 0.0
    %306 = vmatprep.subr.mxu0 0.0
    %307 = vmatpush1.msra.mxu0 0.0
    %308 = vmatprep.subr.mxu0 0.0
    %309 = vmatpush1.msra.mxu0 0.0
    %310 = vmatprep.subr.mxu0 0.0
    %311 = vmatpush1.msra.mxu0 0.0
    %312 = vmatprep.subr.mxu0 0.0
    %313 = vmatpush1.msra.mxu0 0.0
    %314 = vmatprep.subr.mxu0 0.0
    %315 = vmatpush1.msra.mxu0 0.0
    %316 = vmatprep.subr.mxu0 0.0
    %317 = vmatpush1.msra.mxu0 0.0
    %318 = vmatprep.subr.mxu0 0.0
    %319 = vmatpush1.msra.mxu0 0.0
    %320 = vmatprep.subr.mxu0 0.0
    %321 = vmatpush1.msra.mxu0 0.0
    %322 = vmatprep.subr.mxu0 0.0
    %323 = vmatpush1.msra.mxu0 0.0
    %324 = vmatprep.subr.mxu0 0.0
    %325 = vmatpush1.msra.mxu0 0.0
    %326 = vmatprep.subr.mxu0 0.0
    %327 = vmatpush1.msra.mxu0 0.0
    %328 = vmatprep.subr.mxu0 0.0
    %329 = vmatpush1.msra.mxu0 0.0
    %330 = vmatprep.subr.mxu0 0.0
    %331 = vmatpush1.msra.mxu0 0.0
    %332 = vmatprep.subr.mxu0 0.0
    %333 = vmatpush1.msra.mxu0 0.0
    %334 = vmatprep.subr.mxu0 0.0
    %335 = vmatpush1.msra.mxu0 0.0
    %336 = vmatprep.subr.mxu0 0.0
    %337 = vmatpush1.msra.mxu0 0.0
    %338 = vmatprep.subr.mxu0 0.0
    %339 = vmatpush1.msra.mxu0 0.0
    %340 = vmatprep.subr.mxu0 0.0
    %341 = vmatpush1.msra.mxu0 0.0
    %342 = vmatprep.mubr.f32.mxu0 0.0
    %343 = vmatmul.mubr.f32.gmra.mrb[0].mxu0 %v199
    %v344 = vpop.f32.mrb[0].mxu0
    %v345 = vadd.f32 0.0, %v344
    %v346 = vpop.f32.mrb[0].mxu0
    %347 = vdwg.mxu0
    %v348 = vadd.f32 %v179, %v274
    %v349 = vadd.f32 %v180, %v276
    %v350 = vadd.f32 %v181, %v345
    %s351 = scalar_lea.vmem %s1, 16
    %v352 = vld [vmem:[%s351] sm:$0xff]
    %v353 = vld [vmem:[%s0] sm:$0xff]
    %v354 = vld [vmem:[%s0 + $0x8] sm:$0xf]
    %v357 = vcombine.high %v353, %v353
    %358 = vrot.lane.b32.xlu0 %v353, 126
    %v359 = vpop.permute.xlu0 %358
    %360 = vrot.lane.b32.xlu0 %v357, 126
    %v361 = vpop.permute.xlu0 %360
    %362 = vrot.lane.b32.xlu0 %v354, 126
    %v363 = vpop.permute.xlu0 %362
    %vm364 = vcmask 1031168
    %v365 = vsel %vm364, %v359, %v361
    %v366 = vsel %vm364, %v361, %v363
    %v368 = vsel %vm27, %v352, 0
    %v370 = vsel %vm31, %v365, 0
    %v372 = vsel %vm31, %v366, 0
    %v374 = vsel %vm31, %v363, 0
    %376 = vmatprep.subr.mxu0 %v372
    %377 = vmatpush1.msra.mxu0 %v370
    %378 = vmatprep.subr.mxu0 0.0
    %379 = vmatpush1.msra.mxu0 0.0
    %380 = vmatprep.subr.mxu0 0.0
    %381 = vmatpush1.msra.mxu0 0.0
    %382 = vmatprep.subr.mxu0 0.0
    %383 = vmatpush1.msra.mxu0 0.0
    %384 = vmatprep.subr.mxu0 0.0
    %385 = vmatpush1.msra.mxu0 0.0
    %386 = vmatprep.subr.mxu0 0.0
    %387 = vmatpush1.msra.mxu0 0.0
    %388 = vmatprep.subr.mxu0 0.0
    %389 = vmatpush1.msra.mxu0 0.0
    %390 = vmatprep.subr.mxu0 0.0
    %391 = vmatpush1.msra.mxu0 0.0
    %392 = vmatprep.subr.mxu0 0.0
    %393 = vmatpush1.msra.mxu0 0.0
    %394 = vmatprep.subr.mxu0 0.0
    %395 = vmatpush1.msra.mxu0 0.0
    %396 = vmatprep.subr.mxu0 0.0
    %397 = vmatpush1.msra.mxu0 0.0
    %398 = vmatprep.subr.mxu0 0.0
    %399 = vmatpush1.msra.mxu0 0.0
    %400 = vmatprep.subr.mxu0 0.0
    %401 = vmatpush1.msra.mxu0 0.0
    %402 = vmatprep.subr.mxu0 0.0
    %403 = vmatpush1.msra.mxu0 0.0
    %404 = vmatprep.subr.mxu0 0.0
    %405 = vmatpush1.msra.mxu0 0.0
    %406 = vmatprep.subr.mxu0 0.0
    %407 = vmatpush1.msra.mxu0 0.0
    %408 = vmatprep.subr.mxu0 0.0
    %409 = vmatpush1.msra.mxu0 0.0
    %410 = vmatprep.subr.mxu0 0.0
    %411 = vmatpush1.msra.mxu0 0.0
    %412 = vmatprep.subr.mxu0 0.0
    %413 = vmatpush1.msra.mxu0 0.0
    %414 = vmatprep.subr.mxu0 0.0
    %415 = vmatpush1.msra.mxu0 0.0
    %416 = vmatprep.subr.mxu0 0.0
    %417 = vmatpush1.msra.mxu0 0.0
    %418 = vmatprep.subr.mxu0 0.0
    %419 = vmatpush1.msra.mxu0 0.0
    %420 = vmatprep.subr.mxu0 0.0
    %421 = vmatpush1.msra.mxu0 0.0
    %422 = vmatprep.subr.mxu0 0.0
    %423 = vmatpush1.msra.mxu0 0.0
    %424 = vmatprep.subr.mxu0 0.0
    %425 = vmatpush1.msra.mxu0 0.0
    %426 = vmatprep.subr.mxu0 0.0
    %427 = vmatpush1.msra.mxu0 0.0
    %428 = vmatprep.subr.mxu0 0.0
    %429 = vmatpush1.msra.mxu0 0.0
    %430 = vmatprep.subr.mxu0 0.0
    %431 = vmatpush1.msra.mxu0 0.0
    %432 = vmatprep.subr.mxu0 0.0
    %433 = vmatpush1.msra.mxu0 0.0
    %434 = vmatprep.subr.mxu0 0.0
    %435 = vmatpush1.msra.mxu0 0.0
    %436 = vmatprep.subr.mxu0 0.0
    %437 = vmatpush1.msra.mxu0 0.0
    %438 = vmatprep.subr.mxu0 0.0
    %439 = vmatpush1.msra.mxu0 0.0
    %440 = vmatprep.mubr.f32.mxu0 0.0
    %441 = vmatmul.mubr.f32.gmra.mrb[0].mxu0 %v368
    %v442 = vpop.f32.mrb[0].mxu0
    %v443 = vadd.f32 0.0, %v442
    %v444 = vpop.f32.mrb[0].mxu0
    %v445 = vadd.f32 0.0, %v444
    %446 = vdwg.mxu0
    %447 = vmatprep.subr.mxu0 0.0
    %448 = vmatpush1.msra.mxu0 %v374
    %449 = vmatprep.subr.mxu0 0.0
    %450 = vmatpush1.msra.mxu0 0.0
    %451 = vmatprep.subr.mxu0 0.0
    %452 = vmatpush1.msra.mxu0 0.0
    %453 = vmatprep.subr.mxu0 0.0
    %454 = vmatpush1.msra.mxu0 0.0
    %455 = vmatprep.subr.mxu0 0.0
    %456 = vmatpush1.msra.mxu0 0.0
    %457 = vmatprep.subr.mxu0 0.0
    %458 = vmatpush1.msra.mxu0 0.0
    %459 = vmatprep.subr.mxu0 0.0
    %460 = vmatpush1.msra.mxu0 0.0
    %461 = vmatprep.subr.mxu0 0.0
    %462 = vmatpush1.msra.mxu0 0.0
    %463 = vmatprep.subr.mxu0 0.0
    %464 = vmatpush1.msra.mxu0 0.0
    %465 = vmatprep.subr.mxu0 0.0
    %466 = vmatpush1.msra.mxu0 0.0
    %467 = vmatprep.subr.mxu0 0.0
    %468 = vmatpush1.msra.mxu0 0.0
    %469 = vmatprep.subr.mxu0 0.0
    %470 = vmatpush1.msra.mxu0 0.0
    %471 = vmatprep.subr.mxu0 0.0
    %472 = vmatpush1.msra.mxu0 0.0
    %473 = vmatprep.subr.mxu0 0.0
    %474 = vmatpush1.msra.mxu0 0.0
    %475 = vmatprep.subr.mxu0 0.0
    %476 = vmatpush1.msra.mxu0 0.0
    %477 = vmatprep.subr.mxu0 0.0
    %478 = vmatpush1.msra.mxu0 0.0
    %479 = vmatprep.subr.mxu0 0.0
    %480 = vmatpush1.msra.mxu0 0.0
    %481 = vmatprep.subr.mxu0 0.0
    %482 = vmatpush1.msra.mxu0 0.0
    %483 = vmatprep.subr.mxu0 0.0
    %484 = vmatpush1.msra.mxu0 0.0
    %485 = vmatprep.subr.mxu0 0.0
    %486 = vmatpush1.msra.mxu0 0.0
    %487 = vmatprep.subr.mxu0 0.0
    %488 = vmatpush1.msra.mxu0 0.0
    %489 = vmatprep.subr.mxu0 0.0
    %490 = vmatpush1.msra.mxu0 0.0
    %491 = vmatprep.subr.mxu0 0.0
    %492 = vmatpush1.msra.mxu0 0.0
    %493 = vmatprep.subr.mxu0 0.0
    %494 = vmatpush1.msra.mxu0 0.0
    %495 = vmatprep.subr.mxu0 0.0
    %496 = vmatpush1.msra.mxu0 0.0
    %497 = vmatprep.subr.mxu0 0.0
    %498 = vmatpush1.msra.mxu0 0.0
    %499 = vmatprep.subr.mxu0 0.0
    %500 = vmatpush1.msra.mxu0 0.0
    %501 = vmatprep.subr.mxu0 0.0
    %502 = vmatpush1.msra.mxu0 0.0
    %503 = vmatprep.subr.mxu0 0.0
    %504 = vmatpush1.msra.mxu0 0.0
    %505 = vmatprep.subr.mxu0 0.0
    %506 = vmatpush1.msra.mxu0 0.0
    %507 = vmatprep.subr.mxu0 0.0
    %508 = vmatpush1.msra.mxu0 0.0
    %509 = vmatprep.subr.mxu0 0.0
    %510 = vmatpush1.msra.mxu0 0.0
    %511 = vmatprep.mubr.f32.mxu0 0.0
    %512 = vmatmul.mubr.f32.gmra.mrb[0].mxu0 %v368
    %v513 = vpop.f32.mrb[0].mxu0
    %v514 = vadd.f32 0.0, %v513
    %v515 = vpop.f32.mrb[0].mxu0
    %516 = vdwg.mxu0
    %v517 = vadd.f32 %v348, %v443
    %v518 = vadd.f32 %v349, %v445
    %v519 = vadd.f32 %v350, %v514
    %s520 = scalar_lea.vmem %s1, 24
    %v521 = vld [vmem:[%s520] sm:$0xff]
    %v522 = vld [vmem:[%s0] sm:$0xff]
    %v523 = vld [vmem:[%s0 + $0x8] sm:$0xf]
    %v526 = vcombine.high %v522, %v522
    %527 = vrot.lane.b32.xlu0 %v522, 110
    %v528 = vpop.permute.xlu0 %527
    %529 = vrot.lane.b32.xlu0 %v526, 110
    %v530 = vpop.permute.xlu0 %529
    %531 = vrot.lane.b32.xlu0 %v523, 110
    %v532 = vpop.permute.xlu0 %531
    %vm533 = vcmask 900096
    %v534 = vsel %vm533, %v528, %v530
    %v535 = vsel %vm533, %v530, %v532
    %v537 = vsel %vm27, %v521, 0
    %v539 = vsel %vm31, %v534, 0
    %v541 = vsel %vm31, %v535, 0
    %v543 = vsel %vm31, %v532, 0
    %545 = vmatprep.subr.mxu0 %v541
    %546 = vmatpush1.msra.mxu0 %v539
    %547 = vmatprep.subr.mxu0 0.0
    %548 = vmatpush1.msra.mxu0 0.0
    %549 = vmatprep.subr.mxu0 0.0
    %550 = vmatpush1.msra.mxu0 0.0
    %551 = vmatprep.subr.mxu0 0.0
    %552 = vmatpush1.msra.mxu0 0.0
    %553 = vmatprep.subr.mxu0 0.0
    %554 = vmatpush1.msra.mxu0 0.0
    %555 = vmatprep.subr.mxu0 0.0
    %556 = vmatpush1.msra.mxu0 0.0
    %557 = vmatprep.subr.mxu0 0.0
    %558 = vmatpush1.msra.mxu0 0.0
    %559 = vmatprep.subr.mxu0 0.0
    %560 = vmatpush1.msra.mxu0 0.0
    %561 = vmatprep.subr.mxu0 0.0
    %562 = vmatpush1.msra.mxu0 0.0
    %563 = vmatprep.subr.mxu0 0.0
    %564 = vmatpush1.msra.mxu0 0.0
    %565 = vmatprep.subr.mxu0 0.0
    %566 = vmatpush1.msra.mxu0 0.0
    %567 = vmatprep.subr.mxu0 0.0
    %568 = vmatpush1.msra.mxu0 0.0
    %569 = vmatprep.subr.mxu0 0.0
    %570 = vmatpush1.msra.mxu0 0.0
    %571 = vmatprep.subr.mxu0 0.0
    %572 = vmatpush1.msra.mxu0 0.0
    %573 = vmatprep.subr.mxu0 0.0
    %574 = vmatpush1.msra.mxu0 0.0
    %575 = vmatprep.subr.mxu0 0.0
    %576 = vmatpush1.msra.mxu0 0.0
    %577 = vmatprep.subr.mxu0 0.0
    %578 = vmatpush1.msra.mxu0 0.0
    %579 = vmatprep.subr.mxu0 0.0
    %580 = vmatpush1.msra.mxu0 0.0
    %581 = vmatprep.subr.mxu0 0.0
    %582 = vmatpush1.msra.mxu0 0.0
    %583 = vmatprep.subr.mxu0 0.0
    %584 = vmatpush1.msra.mxu0 0.0
    %585 = vmatprep.subr.mxu0 0.0
    %586 = vmatpush1.msra.mxu0 0.0
    %587 = vmatprep.subr.mxu0 0.0
    %588 = vmatpush1.msra.mxu0 0.0
    %589 = vmatprep.subr.mxu0 0.0
    %590 = vmatpush1.msra.mxu0 0.0
    %591 = vmatprep.subr.mxu0 0.0
    %592 = vmatpush1.msra.mxu0 0.0
    %593 = vmatprep.subr.mxu0 0.0
    %594 = vmatpush1.msra.mxu0 0.0
    %595 = vmatprep.subr.mxu0 0.0
    %596 = vmatpush1.msra.mxu0 0.0
    %597 = vmatprep.subr.mxu0 0.0
    %598 = vmatpush1.msra.mxu0 0.0
    %599 = vmatprep.subr.mxu0 0.0
    %600 = vmatpush1.msra.mxu0 0.0
    %601 = vmatprep.subr.mxu0 0.0
    %602 = vmatpush1.msra.mxu0 0.0
    %603 = vmatprep.subr.mxu0 0.0
    %604 = vmatpush1.msra.mxu0 0.0
    %605 = vmatprep.subr.mxu0 0.0
    %606 = vmatpush1.msra.mxu0 0.0
    %607 = vmatprep.subr.mxu0 0.0
    %608 = vmatpush1.msra.mxu0 0.0
    %609 = vmatprep.mubr.f32.mxu0 0.0
    %610 = vmatmul.mubr.f32.gmra.mrb[0].mxu0 %v537
    %v611 = vpop.f32.mrb[0].mxu0
    %v612 = vadd.f32 0.0, %v611
    %v613 = vpop.f32.mrb[0].mxu0
    %v614 = vadd.f32 0.0, %v613
    %615 = vdwg.mxu0
    %616 = vmatprep.subr.mxu0 0.0
    %617 = vmatpush1.msra.mxu0 %v543
    %618 = vmatprep.subr.mxu0 0.0
    %619 = vmatpush1.msra.mxu0 0.0
    %620 = vmatprep.subr.mxu0 0.0
    %621 = vmatpush1.msra.mxu0 0.0
    %622 = vmatprep.subr.mxu0 0.0
    %623 = vmatpush1.msra.mxu0 0.0
    %624 = vmatprep.subr.mxu0 0.0
    %625 = vmatpush1.msra.mxu0 0.0
    %626 = vmatprep.subr.mxu0 0.0
    %627 = vmatpush1.msra.mxu0 0.0
    %628 = vmatprep.subr.mxu0 0.0
    %629 = vmatpush1.msra.mxu0 0.0
    %630 = vmatprep.subr.mxu0 0.0
    %631 = vmatpush1.msra.mxu0 0.0
    %632 = vmatprep.subr.mxu0 0.0
    %633 = vmatpush1.msra.mxu0 0.0
    %634 = vmatprep.subr.mxu0 0.0
    %635 = vmatpush1.msra.mxu0 0.0
    %636 = vmatprep.subr.mxu0 0.0
    %637 = vmatpush1.msra.mxu0 0.0
    %638 = vmatprep.subr.mxu0 0.0
    %639 = vmatpush1.msra.mxu0 0.0
    %640 = vmatprep.subr.mxu0 0.0
    %641 = vmatpush1.msra.mxu0 0.0
    %642 = vmatprep.subr.mxu0 0.0
    %643 = vmatpush1.msra.mxu0 0.0
    %644 = vmatprep.subr.mxu0 0.0
    %645 = vmatpush1.msra.mxu0 0.0
    %646 = vmatprep.subr.mxu0 0.0
    %647 = vmatpush1.msra.mxu0 0.0
    %648 = vmatprep.subr.mxu0 0.0
    %649 = vmatpush1.msra.mxu0 0.0
    %650 = vmatprep.subr.mxu0 0.0
    %651 = vmatpush1.msra.mxu0 0.0
    %652 = vmatprep.subr.mxu0 0.0
    %653 = vmatpush1.msra.mxu0 0.0
    %654 = vmatprep.subr.mxu0 0.0
    %655 = vmatpush1.msra.mxu0 0.0
    %656 = vmatprep.subr.mxu0 0.0
    %657 = vmatpush1.msra.mxu0 0.0
    %658 = vmatprep.subr.mxu0 0.0
    %659 = vmatpush1.msra.mxu0 0.0
    %660 = vmatprep.subr.mxu0 0.0
    %661 = vmatpush1.msra.mxu0 0.0
    %662 = vmatprep.subr.mxu0 0.0
    %663 = vmatpush1.msra.mxu0 0.0
    %664 = vmatprep.subr.mxu0 0.0
    %665 = vmatpush1.msra.mxu0 0.0
    %666 = vmatprep.subr.mxu0 0.0
    %667 = vmatpush1.msra.mxu0 0.0
    %668 = vmatprep.subr.mxu0 0.0
    %669 = vmatpush1.msra.mxu0 0.0
    %670 = vmatprep.subr.mxu0 0.0
    %671 = vmatpush1.msra.mxu0 0.0
    %672 = vmatprep.subr.mxu0 0.0
    %673 = vmatpush1.msra.mxu0 0.0
    %674 = vmatprep.subr.mxu0 0.0
    %675 = vmatpush1.msra.mxu0 0.0
    %676 = vmatprep.subr.mxu0 0.0
    %677 = vmatpush1.msra.mxu0 0.0
    %678 = vmatprep.subr.mxu0 0.0
    %679 = vmatpush1.msra.mxu0 0.0
    %680 = vmatprep.mubr.f32.mxu0 0.0
    %681 = vmatmul.mubr.f32.gmra.mrb[0].mxu0 %v537
    %v682 = vpop.f32.mrb[0].mxu0
    %v683 = vadd.f32 0.0, %v682
    %v684 = vpop.f32.mrb[0].mxu0
    %685 = vdwg.mxu0
    %v686 = vadd.f32 %v517, %v612
    %v687 = vadd.f32 %v518, %v614
    %v688 = vadd.f32 %v519, %v683
    %s689 = scalar_lea.vmem %s1, 32
    %v690 = vld [vmem:[%s689] sm:$0xff]
    %v691 = vld [vmem:[%s0] sm:$0xff]
    %v692 = vld [vmem:[%s0 + $0x8] sm:$0xf]
    %v695 = vcombine.high %v691, %v691
    %696 = vrot.lane.b32.xlu0 %v691, 109
    %v697 = vpop.permute.xlu0 %696
    %698 = vrot.lane.b32.xlu0 %v695, 109
    %v699 = vpop.permute.xlu0 %698
    %700 = vrot.lane.b32.xlu0 %v692, 109
    %v701 = vpop.permute.xlu0 %700
    %vm702 = vcmask 891904
    %v703 = vsel %vm702, %v697, %v699
    %v704 = vsel %vm702, %v699, %v701
    %v706 = vsel %vm27, %v690, 0
    %v708 = vsel %vm31, %v703, 0
    %v710 = vsel %vm31, %v704, 0
    %v712 = vsel %vm31, %v701, 0
    %714 = vmatprep.subr.mxu0 %v710
    %715 = vmatpush1.msra.mxu0 %v708
    %716 = vmatprep.subr.mxu0 0.0
    %717 = vmatpush1.msra.mxu0 0.0
    %718 = vmatprep.subr.mxu0 0.0
    %719 = vmatpush1.msra.mxu0 0.0
    %720 = vmatprep.subr.mxu0 0.0
    %721 = vmatpush1.msra.mxu0 0.0
    %722 = vmatprep.subr.mxu0 0.0
    %723 = vmatpush1.msra.mxu0 0.0
    %724 = vmatprep.subr.mxu0 0.0
    %725 = vmatpush1.msra.mxu0 0.0
    %726 = vmatprep.subr.mxu0 0.0
    %727 = vmatpush1.msra.mxu0 0.0
    %728 = vmatprep.subr.mxu0 0.0
    %729 = vmatpush1.msra.mxu0 0.0
    %730 = vmatprep.subr.mxu0 0.0
    %731 = vmatpush1.msra.mxu0 0.0
    %732 = vmatprep.subr.mxu0 0.0
    %733 = vmatpush1.msra.mxu0 0.0
    %734 = vmatprep.subr.mxu0 0.0
    %735 = vmatpush1.msra.mxu0 0.0
    %736 = vmatprep.subr.mxu0 0.0
    %737 = vmatpush1.msra.mxu0 0.0
    %738 = vmatprep.subr.mxu0 0.0
    %739 = vmatpush1.msra.mxu0 0.0
    %740 = vmatprep.subr.mxu0 0.0
    %741 = vmatpush1.msra.mxu0 0.0
    %742 = vmatprep.subr.mxu0 0.0
    %743 = vmatpush1.msra.mxu0 0.0
    %744 = vmatprep.subr.mxu0 0.0
    %745 = vmatpush1.msra.mxu0 0.0
    %746 = vmatprep.subr.mxu0 0.0
    %747 = vmatpush1.msra.mxu0 0.0
    %748 = vmatprep.subr.mxu0 0.0
    %749 = vmatpush1.msra.mxu0 0.0
    %750 = vmatprep.subr.mxu0 0.0
    %751 = vmatpush1.msra.mxu0 0.0
    %752 = vmatprep.subr.mxu0 0.0
    %753 = vmatpush1.msra.mxu0 0.0
    %754 = vmatprep.subr.mxu0 0.0
    %755 = vmatpush1.msra.mxu0 0.0
    %756 = vmatprep.subr.mxu0 0.0
    %757 = vmatpush1.msra.mxu0 0.0
    %758 = vmatprep.subr.mxu0 0.0
    %759 = vmatpush1.msra.mxu0 0.0
    %760 = vmatprep.subr.mxu0 0.0
    %761 = vmatpush1.msra.mxu0 0.0
    %762 = vmatprep.subr.mxu0 0.0
    %763 = vmatpush1.msra.mxu0 0.0
    %764 = vmatprep.subr.mxu0 0.0
    %765 = vmatpush1.msra.mxu0 0.0
    %766 = vmatprep.subr.mxu0 0.0
    %767 = vmatpush1.msra.mxu0 0.0
    %768 = vmatprep.subr.mxu0 0.0
    %769 = vmatpush1.msra.mxu0 0.0
    %770 = vmatprep.subr.mxu0 0.0
    %771 = vmatpush1.msra.mxu0 0.0
    %772 = vmatprep.subr.mxu0 0.0
    %773 = vmatpush1.msra.mxu0 0.0
    %774 = vmatprep.subr.mxu0 0.0
    %775 = vmatpush1.msra.mxu0 0.0
    %776 = vmatprep.subr.mxu0 0.0
    %777 = vmatpush1.msra.mxu0 0.0
    %778 = vmatprep.mubr.f32.mxu0 0.0
    %779 = vmatmul.mubr.f32.gmra.mrb[0].mxu0 %v706
    %v780 = vpop.f32.mrb[0].mxu0
    %v781 = vadd.f32 0.0, %v780
    %v782 = vpop.f32.mrb[0].mxu0
    %v783 = vadd.f32 0.0, %v782
    %784 = vdwg.mxu0
    %785 = vmatprep.subr.mxu0 0.0
    %786 = vmatpush1.msra.mxu0 %v712
    %787 = vmatprep.subr.mxu0 0.0
    %788 = vmatpush1.msra.mxu0 0.0
    %789 = vmatprep.subr.mxu0 0.0
    %790 = vmatpush1.msra.mxu0 0.0
    %791 = vmatprep.subr.mxu0 0.0
    %792 = vmatpush1.msra.mxu0 0.0
    %793 = vmatprep.subr.mxu0 0.0
    %794 = vmatpush1.msra.mxu0 0.0
    %795 = vmatprep.subr.mxu0 0.0
    %796 = vmatpush1.msra.mxu0 0.0
    %797 = vmatprep.subr.mxu0 0.0
    %798 = vmatpush1.msra.mxu0 0.0
    %799 = vmatprep.subr.mxu0 0.0
    %800 = vmatpush1.msra.mxu0 0.0
    %801 = vmatprep.subr.mxu0 0.0
    %802 = vmatpush1.msra.mxu0 0.0
    %803 = vmatprep.subr.mxu0 0.0
    %804 = vmatpush1.msra.mxu0 0.0
    %805 = vmatprep.subr.mxu0 0.0
    %806 = vmatpush1.msra.mxu0 0.0
    %807 = vmatprep.subr.mxu0 0.0
    %808 = vmatpush1.msra.mxu0 0.0
    %809 = vmatprep.subr.mxu0 0.0
    %810 = vmatpush1.msra.mxu0 0.0
    %811 = vmatprep.subr.mxu0 0.0
    %812 = vmatpush1.msra.mxu0 0.0
    %813 = vmatprep.subr.mxu0 0.0
    %814 = vmatpush1.msra.mxu0 0.0
    %815 = vmatprep.subr.mxu0 0.0
    %816 = vmatpush1.msra.mxu0 0.0
    %817 = vmatprep.subr.mxu0 0.0
    %818 = vmatpush1.msra.mxu0 0.0
    %819 = vmatprep.subr.mxu0 0.0
    %820 = vmatpush1.msra.mxu0 0.0
    %821 = vmatprep.subr.mxu0 0.0
    %822 = vmatpush1.msra.mxu0 0.0
    %823 = vmatprep.subr.mxu0 0.0
    %824 = vmatpush1.msra.mxu0 0.0
    %825 = vmatprep.subr.mxu0 0.0
    %826 = vmatpush1.msra.mxu0 0.0
    %827 = vmatprep.subr.mxu0 0.0
    %828 = vmatpush1.msra.mxu0 0.0
    %829 = vmatprep.subr.mxu0 0.0
    %830 = vmatpush1.msra.mxu0 0.0
    %831 = vmatprep.subr.mxu0 0.0
    %832 = vmatpush1.msra.mxu0 0.0
    %833 = vmatprep.subr.mxu0 0.0
    %834 = vmatpush1.msra.mxu0 0.0
    %835 = vmatprep.subr.mxu0 0.0
    %836 = vmatpush1.msra.mxu0 0.0
    %837 = vmatprep.subr.mxu0 0.0
    %838 = vmatpush1.msra.mxu0 0.0
    %839 = vmatprep.subr.mxu0 0.0
    %840 = vmatpush1.msra.mxu0 0.0
    %841 = vmatprep.subr.mxu0 0.0
    %842 = vmatpush1.msra.mxu0 0.0
    %843 = vmatprep.subr.mxu0 0.0
    %844 = vmatpush1.msra.mxu0 0.0
    %845 = vmatprep.subr.mxu0 0.0
    %846 = vmatpush1.msra.mxu0 0.0
    %847 = vmatprep.subr.mxu0 0.0
    %848 = vmatpush1.msra.mxu0 0.0
    %849 = vmatprep.mubr.f32.mxu0 0.0
    %850 = vmatmul.mubr.f32.gmra.mrb[0].mxu0 %v706
    %v851 = vpop.f32.mrb[0].mxu0
    %v852 = vadd.f32 0.0, %v851
    %v853 = vpop.f32.mrb[0].mxu0
    %854 = vdwg.mxu0
    %v855 = vadd.f32 %v686, %v781
    %v856 = vadd.f32 %v687, %v783
    %v857 = vadd.f32 %v688, %v852
    %s858 = scalar_lea.vmem %s1, 40
    %v859 = vld [vmem:[%s858] sm:$0xff]
    %v860 = vld [vmem:[%s0] sm:$0xff]
    %v861 = vld [vmem:[%s0 + $0x8] sm:$0xf]
    %v864 = vcombine.high %v860, %v860
    %865 = vrot.lane.b32.xlu0 %v860, 108
    %v866 = vpop.permute.xlu0 %865
    %867 = vrot.lane.b32.xlu0 %v864, 108
    %v868 = vpop.permute.xlu0 %867
    %869 = vrot.lane.b32.xlu0 %v861, 108
    %v870 = vpop.permute.xlu0 %869
    %vm871 = vcmask 883712
    %v872 = vsel %vm871, %v866, %v868
    %v873 = vsel %vm871, %v868, %v870
    %v875 = vsel %vm27, %v859, 0
    %v877 = vsel %vm31, %v872, 0
    %v879 = vsel %vm31, %v873, 0
    %v881 = vsel %vm31, %v870, 0
    %883 = vmatprep.subr.mxu0 %v879
    %884 = vmatpush1.msra.mxu0 %v877
    %885 = vmatprep.subr.mxu0 0.0
    %886 = vmatpush1.msra.mxu0 0.0
    %887 = vmatprep.subr.mxu0 0.0
    %888 = vmatpush1.msra.mxu0 0.0
    %889 = vmatprep.subr.mxu0 0.0
    %890 = vmatpush1.msra.mxu0 0.0
    %891 = vmatprep.subr.mxu0 0.0
    %892 = vmatpush1.msra.mxu0 0.0
    %893 = vmatprep.subr.mxu0 0.0
    %894 = vmatpush1.msra.mxu0 0.0
    %895 = vmatprep.subr.mxu0 0.0
    %896 = vmatpush1.msra.mxu0 0.0
    %897 = vmatprep.subr.mxu0 0.0
    %898 = vmatpush1.msra.mxu0 0.0
    %899 = vmatprep.subr.mxu0 0.0
    %900 = vmatpush1.msra.mxu0 0.0
    %901 = vmatprep.subr.mxu0 0.0
    %902 = vmatpush1.msra.mxu0 0.0
    %903 = vmatprep.subr.mxu0 0.0
    %904 = vmatpush1.msra.mxu0 0.0
    %905 = vmatprep.subr.mxu0 0.0
    %906 = vmatpush1.msra.mxu0 0.0
    %907 = vmatprep.subr.mxu0 0.0
    %908 = vmatpush1.msra.mxu0 0.0
    %909 = vmatprep.subr.mxu0 0.0
    %910 = vmatpush1.msra.mxu0 0.0
    %911 = vmatprep.subr.mxu0 0.0
    %912 = vmatpush1.msra.mxu0 0.0
    %913 = vmatprep.subr.mxu0 0.0
    %914 = vmatpush1.msra.mxu0 0.0
    %915 = vmatprep.subr.mxu0 0.0
    %916 = vmatpush1.msra.mxu0 0.0
    %917 = vmatprep.subr.mxu0 0.0
    %918 = vmatpush1.msra.mxu0 0.0
    %919 = vmatprep.subr.mxu0 0.0
    %920 = vmatpush1.msra.mxu0 0.0
    %921 = vmatprep.subr.mxu0 0.0
    %922 = vmatpush1.msra.mxu0 0.0
    %923 = vmatprep.subr.mxu0 0.0
    %924 = vmatpush1.msra.mxu0 0.0
    %925 = vmatprep.subr.mxu0 0.0
    %926 = vmatpush1.msra.mxu0 0.0
    %927 = vmatprep.subr.mxu0 0.0
    %928 = vmatpush1.msra.mxu0 0.0
    %929 = vmatprep.subr.mxu0 0.0
    %930 = vmatpush1.msra.mxu0 0.0
    %931 = vmatprep.subr.mxu0 0.0
    %932 = vmatpush1.msra.mxu0 0.0
    %933 = vmatprep.subr.mxu0 0.0
    %934 = vmatpush1.msra.mxu0 0.0
    %935 = vmatprep.subr.mxu0 0.0
    %936 = vmatpush1.msra.mxu0 0.0
    %937 = vmatprep.subr.mxu0 0.0
    %938 = vmatpush1.msra.mxu0 0.0
    %939 = vmatprep.subr.mxu0 0.0
    %940 = vmatpush1.msra.mxu0 0.0
    %941 = vmatprep.subr.mxu0 0.0
    %942 = vmatpush1.msra.mxu0 0.0
    %943 = vmatprep.subr.mxu0 0.0
    %944 = vmatpush1.msra.mxu0 0.0
    %945 = vmatprep.subr.mxu0 0.0
    %946 = vmatpush1.msra.mxu0 0.0
    %947 = vmatprep.mubr.f32.mxu0 0.0
    %948 = vmatmul.mubr.f32.gmra.mrb[0].mxu0 %v875
    %v949 = vpop.f32.mrb[0].mxu0
    %v950 = vadd.f32 0.0, %v949
    %v951 = vpop.f32.mrb[0].mxu0
    %v952 = vadd.f32 0.0, %v951
    %953 = vdwg.mxu0
    %954 = vmatprep.subr.mxu0 0.0
    %955 = vmatpush1.msra.mxu0 %v881
    %956 = vmatprep.subr.mxu0 0.0
    %957 = vmatpush1.msra.mxu0 0.0
    %958 = vmatprep.subr.mxu0 0.0
    %959 = vmatpush1.msra.mxu0 0.0
    %960 = vmatprep.subr.mxu0 0.0
    %961 = vmatpush1.msra.mxu0 0.0
    %962 = vmatprep.subr.mxu0 0.0
    %963 = vmatpush1.msra.mxu0 0.0
    %964 = vmatprep.subr.mxu0 0.0
    %965 = vmatpush1.msra.mxu0 0.0
    %966 = vmatprep.subr.mxu0 0.0
    %967 = vmatpush1.msra.mxu0 0.0
    %968 = vmatprep.subr.mxu0 0.0
    %969 = vmatpush1.msra.mxu0 0.0
    %970 = vmatprep.subr.mxu0 0.0
    %971 = vmatpush1.msra.mxu0 0.0
    %972 = vmatprep.subr.mxu0 0.0
    %973 = vmatpush1.msra.mxu0 0.0
    %974 = vmatprep.subr.mxu0 0.0
    %975 = vmatpush1.msra.mxu0 0.0
    %976 = vmatprep.subr.mxu0 0.0
    %977 = vmatpush1.msra.mxu0 0.0
    %978 = vmatprep.subr.mxu0 0.0
    %979 = vmatpush1.msra.mxu0 0.0
    %980 = vmatprep.subr.mxu0 0.0
    %981 = vmatpush1.msra.mxu0 0.0
    %982 = vmatprep.subr.mxu0 0.0
    %983 = vmatpush1.msra.mxu0 0.0
    %984 = vmatprep.subr.mxu0 0.0
    %985 = vmatpush1.msra.mxu0 0.0
    %986 = vmatprep.subr.mxu0 0.0
    %987 = vmatpush1.msra.mxu0 0.0
    %988 = vmatprep.subr.mxu0 0.0
    %989 = vmatpush1.msra.mxu0 0.0
    %990 = vmatprep.subr.mxu0 0.0
    %991 = vmatpush1.msra.mxu0 0.0
    %992 = vmatprep.subr.mxu0 0.0
    %993 = vmatpush1.msra.mxu0 0.0
    %994 = vmatprep.subr.mxu0 0.0
    %995 = vmatpush1.msra.mxu0 0.0
    %996 = vmatprep.subr.mxu0 0.0
    %997 = vmatpush1.msra.mxu0 0.0
    %998 = vmatprep.subr.mxu0 0.0
    %999 = vmatpush1.msra.mxu0 0.0
    %1000 = vmatprep.subr.mxu0 0.0
    %1001 = vmatpush1.msra.mxu0 0.0
    %1002 = vmatprep.subr.mxu0 0.0
    %1003 = vmatpush1.msra.mxu0 0.0
    %1004 = vmatprep.subr.mxu0 0.0
    %1005 = vmatpush1.msra.mxu0 0.0
    %1006 = vmatprep.subr.mxu0 0.0
    %1007 = vmatpush1.msra.mxu0 0.0
    %1008 = vmatprep.subr.mxu0 0.0
    %1009 = vmatpush1.msra.mxu0 0.0
    %1010 = vmatprep.subr.mxu0 0.0
    %1011 = vmatpush1.msra.mxu0 0.0
    %1012 = vmatprep.subr.mxu0 0.0
    %1013 = vmatpush1.msra.mxu0 0.0
    %1014 = vmatprep.subr.mxu0 0.0
    %1015 = vmatpush1.msra.mxu0 0.0
    %1016 = vmatprep.subr.mxu0 0.0
    %1017 = vmatpush1.msra.mxu0 0.0
    %1018 = vmatprep.mubr.f32.mxu0 0.0
    %1019 = vmatmul.mubr.f32.gmra.mrb[0].mxu0 %v875
    %v1020 = vpop.f32.mrb[0].mxu0
    %v1021 = vadd.f32 0.0, %v1020
    %v1022 = vpop.f32.mrb[0].mxu0
    %1023 = vdwg.mxu0
    %v1024 = vadd.f32 %v855, %v950
    %v1025 = vadd.f32 %v856, %v952
    %v1026 = vadd.f32 %v857, %v1021
    %s1027 = scalar_lea.vmem %s1, 48
    %v1028 = vld [vmem:[%s1027] sm:$0xff]
    %v1029 = vld [vmem:[%s0] sm:$0xff]
    %v1030 = vld [vmem:[%s0 + $0x8] sm:$0xf]
    %v1033 = vcombine.high %v1029, %v1029
    %1034 = vrot.lane.b32.xlu0 %v1029, 92
    %v1035 = vpop.permute.xlu0 %1034
    %1036 = vrot.lane.b32.xlu0 %v1033, 92
    %v1037 = vpop.permute.xlu0 %1036
    %1038 = vrot.lane.b32.xlu0 %v1030, 92
    %v1039 = vpop.permute.xlu0 %1038
    %vm1040 = vcmask 752640
    %v1041 = vsel %vm1040, %v1035, %v1037
    %v1042 = vsel %vm1040, %v1037, %v1039
    %v1044 = vsel %vm27, %v1028, 0
    %v1046 = vsel %vm31, %v1041, 0
    %v1048 = vsel %vm31, %v1042, 0
    %v1050 = vsel %vm31, %v1039, 0
    %1052 = vmatprep.subr.mxu0 %v1048
    %1053 = vmatpush1.msra.mxu0 %v1046
    %1054 = vmatprep.subr.mxu0 0.0
    %1055 = vmatpush1.msra.mxu0 0.0
    %1056 = vmatprep.subr.mxu0 0.0
    %1057 = vmatpush1.msra.mxu0 0.0
    %1058 = vmatprep.subr.mxu0 0.0
    %1059 = vmatpush1.msra.mxu0 0.0
    %1060 = vmatprep.subr.mxu0 0.0
    %1061 = vmatpush1.msra.mxu0 0.0
    %1062 = vmatprep.subr.mxu0 0.0
    %1063 = vmatpush1.msra.mxu0 0.0
    %1064 = vmatprep.subr.mxu0 0.0
    %1065 = vmatpush1.msra.mxu0 0.0
    %1066 = vmatprep.subr.mxu0 0.0
    %1067 = vmatpush1.msra.mxu0 0.0
    %1068 = vmatprep.subr.mxu0 0.0
    %1069 = vmatpush1.msra.mxu0 0.0
    %1070 = vmatprep.subr.mxu0 0.0
    %1071 = vmatpush1.msra.mxu0 0.0
    %1072 = vmatprep.subr.mxu0 0.0
    %1073 = vmatpush1.msra.mxu0 0.0
    %1074 = vmatprep.subr.mxu0 0.0
    %1075 = vmatpush1.msra.mxu0 0.0
    %1076 = vmatprep.subr.mxu0 0.0
    %1077 = vmatpush1.msra.mxu0 0.0
    %1078 = vmatprep.subr.mxu0 0.0
    %1079 = vmatpush1.msra.mxu0 0.0
    %1080 = vmatprep.subr.mxu0 0.0
    %1081 = vmatpush1.msra.mxu0 0.0
    %1082 = vmatprep.subr.mxu0 0.0
    %1083 = vmatpush1.msra.mxu0 0.0
    %1084 = vmatprep.subr.mxu0 0.0
    %1085 = vmatpush1.msra.mxu0 0.0
    %1086 = vmatprep.subr.mxu0 0.0
    %1087 = vmatpush1.msra.mxu0 0.0
    %1088 = vmatprep.subr.mxu0 0.0
    %1089 = vmatpush1.msra.mxu0 0.0
    %1090 = vmatprep.subr.mxu0 0.0
    %1091 = vmatpush1.msra.mxu0 0.0
    %1092 = vmatprep.subr.mxu0 0.0
    %1093 = vmatpush1.msra.mxu0 0.0
    %1094 = vmatprep.subr.mxu0 0.0
    %1095 = vmatpush1.msra.mxu0 0.0
    %1096 = vmatprep.subr.mxu0 0.0
    %1097 = vmatpush1.msra.mxu0 0.0
    %1098 = vmatprep.subr.mxu0 0.0
    %1099 = vmatpush1.msra.mxu0 0.0
    %1100 = vmatprep.subr.mxu0 0.0
    %1101 = vmatpush1.msra.mxu0 0.0
    %1102 = vmatprep.subr.mxu0 0.0
    %1103 = vmatpush1.msra.mxu0 0.0
    %1104 = vmatprep.subr.mxu0 0.0
    %1105 = vmatpush1.msra.mxu0 0.0
    %1106 = vmatprep.subr.mxu0 0.0
    %1107 = vmatpush1.msra.mxu0 0.0
    %1108 = vmatprep.subr.mxu0 0.0
    %1109 = vmatpush1.msra.mxu0 0.0
    %1110 = vmatprep.subr.mxu0 0.0
    %1111 = vmatpush1.msra.mxu0 0.0
    %1112 = vmatprep.subr.mxu0 0.0
    %1113 = vmatpush1.msra.mxu0 0.0
    %1114 = vmatprep.subr.mxu0 0.0
    %1115 = vmatpush1.msra.mxu0 0.0
    %1116 = vmatprep.mubr.f32.mxu0 0.0
    %1117 = vmatmul.mubr.f32.gmra.mrb[0].mxu0 %v1044
    %v1118 = vpop.f32.mrb[0].mxu0
    %v1119 = vadd.f32 0.0, %v1118
    %v1120 = vpop.f32.mrb[0].mxu0
    %v1121 = vadd.f32 0.0, %v1120
    %1122 = vdwg.mxu0
    %1123 = vmatprep.subr.mxu0 0.0
    %1124 = vmatpush1.msra.mxu0 %v1050
    %1125 = vmatprep.subr.mxu0 0.0
    %1126 = vmatpush1.msra.mxu0 0.0
    %1127 = vmatprep.subr.mxu0 0.0
    %1128 = vmatpush1.msra.mxu0 0.0
    %1129 = vmatprep.subr.mxu0 0.0
    %1130 = vmatpush1.msra.mxu0 0.0
    %1131 = vmatprep.subr.mxu0 0.0
    %1132 = vmatpush1.msra.mxu0 0.0
    %1133 = vmatprep.subr.mxu0 0.0
    %1134 = vmatpush1.msra.mxu0 0.0
    %1135 = vmatprep.subr.mxu0 0.0
    %1136 = vmatpush1.msra.mxu0 0.0
    %1137 = vmatprep.subr.mxu0 0.0
    %1138 = vmatpush1.msra.mxu0 0.0
    %1139 = vmatprep.subr.mxu0 0.0
    %1140 = vmatpush1.msra.mxu0 0.0
    %1141 = vmatprep.subr.mxu0 0.0
    %1142 = vmatpush1.msra.mxu0 0.0
    %1143 = vmatprep.subr.mxu0 0.0
    %1144 = vmatpush1.msra.mxu0 0.0
    %1145 = vmatprep.subr.mxu0 0.0
    %1146 = vmatpush1.msra.mxu0 0.0
    %1147 = vmatprep.subr.mxu0 0.0
    %1148 = vmatpush1.msra.mxu0 0.0
    %1149 = vmatprep.subr.mxu0 0.0
    %1150 = vmatpush1.msra.mxu0 0.0
    %1151 = vmatprep.subr.mxu0 0.0
    %1152 = vmatpush1.msra.mxu0 0.0
    %1153 = vmatprep.subr.mxu0 0.0
    %1154 = vmatpush1.msra.mxu0 0.0
    %1155 = vmatprep.subr.mxu0 0.0
    %1156 = vmatpush1.msra.mxu0 0.0
    %1157 = vmatprep.subr.mxu0 0.0
    %1158 = vmatpush1.msra.mxu0 0.0
    %1159 = vmatprep.subr.mxu0 0.0
    %1160 = vmatpush1.msra.mxu0 0.0
    %1161 = vmatprep.subr.mxu0 0.0
    %1162 = vmatpush1.msra.mxu0 0.0
    %1163 = vmatprep.subr.mxu0 0.0
    %1164 = vmatpush1.msra.mxu0 0.0
    %1165 = vmatprep.subr.mxu0 0.0
    %1166 = vmatpush1.msra.mxu0 0.0
    %1167 = vmatprep.subr.mxu0 0.0
    %1168 = vmatpush1.msra.mxu0 0.0
    %1169 = vmatprep.subr.mxu0 0.0
    %1170 = vmatpush1.msra.mxu0 0.0
    %1171 = vmatprep.subr.mxu0 0.0
    %1172 = vmatpush1.msra.mxu0 0.0
    %1173 = vmatprep.subr.mxu0 0.0
    %1174 = vmatpush1.msra.mxu0 0.0
    %1175 = vmatprep.subr.mxu0 0.0
    %1176 = vmatpush1.msra.mxu0 0.0
    %1177 = vmatprep.subr.mxu0 0.0
    %1178 = vmatpush1.msra.mxu0 0.0
    %1179 = vmatprep.subr.mxu0 0.0
    %1180 = vmatpush1.msra.mxu0 0.0
    %1181 = vmatprep.subr.mxu0 0.0
    %1182 = vmatpush1.msra.mxu0 0.0
    %1183 = vmatprep.subr.mxu0 0.0
    %1184 = vmatpush1.msra.mxu0 0.0
    %1185 = vmatprep.subr.mxu0 0.0
    %1186 = vmatpush1.msra.mxu0 0.0
    %1187 = vmatprep.mubr.f32.mxu0 0.0
    %1188 = vmatmul.mubr.f32.gmra.mrb[0].mxu0 %v1044
    %v1189 = vpop.f32.mrb[0].mxu0
    %v1190 = vadd.f32 0.0, %v1189
    %v1191 = vpop.f32.mrb[0].mxu0
    %1192 = vdwg.mxu0
    %v1193 = vadd.f32 %v1024, %v1119
    %v1194 = vadd.f32 %v1025, %v1121
    %v1195 = vadd.f32 %v1026, %v1190
    %s1196 = scalar_lea.vmem %s1, 56
    %v1197 = vld [vmem:[%s1196] sm:$0xff]
    %v1198 = vld [vmem:[%s0] sm:$0xff]
    %v1199 = vld [vmem:[%s0 + $0x8] sm:$0xf]
    %v1202 = vcombine.high %v1198, %v1198
    %1203 = vrot.lane.b32.xlu0 %v1198, 91
    %v1204 = vpop.permute.xlu0 %1203
    %1205 = vrot.lane.b32.xlu0 %v1202, 91
    %v1206 = vpop.permute.xlu0 %1205
    %1207 = vrot.lane.b32.xlu0 %v1199, 91
    %v1208 = vpop.permute.xlu0 %1207
    %vm1209 = vcmask 744448
    %v1210 = vsel %vm1209, %v1204, %v1206
    %v1211 = vsel %vm1209, %v1206, %v1208
    %v1213 = vsel %vm27, %v1197, 0
    %v1215 = vsel %vm31, %v1210, 0
    %v1217 = vsel %vm31, %v1211, 0
    %v1219 = vsel %vm31, %v1208, 0
    %1221 = vmatprep.subr.mxu0 %v1217
    %1222 = vmatpush1.msra.mxu0 %v1215
    %1223 = vmatprep.subr.mxu0 0.0
    %1224 = vmatpush1.msra.mxu0 0.0
    %1225 = vmatprep.subr.mxu0 0.0
    %1226 = vmatpush1.msra.mxu0 0.0
    %1227 = vmatprep.subr.mxu0 0.0
    %1228 = vmatpush1.msra.mxu0 0.0
    %1229 = vmatprep.subr.mxu0 0.0
    %1230 = vmatpush1.msra.mxu0 0.0
    %1231 = vmatprep.subr.mxu0 0.0
    %1232 = vmatpush1.msra.mxu0 0.0
    %1233 = vmatprep.subr.mxu0 0.0
    %1234 = vmatpush1.msra.mxu0 0.0
    %1235 = vmatprep.subr.mxu0 0.0
    %1236 = vmatpush1.msra.mxu0 0.0
    %1237 = vmatprep.subr.mxu0 0.0
    %1238 = vmatpush1.msra.mxu0 0.0
    %1239 = vmatprep.subr.mxu0 0.0
    %1240 = vmatpush1.msra.mxu0 0.0
    %1241 = vmatprep.subr.mxu0 0.0
    %1242 = vmatpush1.msra.mxu0 0.0
    %1243 = vmatprep.subr.mxu0 0.0
    %1244 = vmatpush1.msra.mxu0 0.0
    %1245 = vmatprep.subr.mxu0 0.0
    %1246 = vmatpush1.msra.mxu0 0.0
    %1247 = vmatprep.subr.mxu0 0.0
    %1248 = vmatpush1.msra.mxu0 0.0
    %1249 = vmatprep.subr.mxu0 0.0
    %1250 = vmatpush1.msra.mxu0 0.0
    %1251 = vmatprep.subr.mxu0 0.0
    %1252 = vmatpush1.msra.mxu0 0.0
    %1253 = vmatprep.subr.mxu0 0.0
    %1254 = vmatpush1.msra.mxu0 0.0
    %1255 = vmatprep.subr.mxu0 0.0
    %1256 = vmatpush1.msra.mxu0 0.0
    %1257 = vmatprep.subr.mxu0 0.0
    %1258 = vmatpush1.msra.mxu0 0.0
    %1259 = vmatprep.subr.mxu0 0.0
    %1260 = vmatpush1.msra.mxu0 0.0
    %1261 = vmatprep.subr.mxu0 0.0
    %1262 = vmatpush1.msra.mxu0 0.0
    %1263 = vmatprep.subr.mxu0 0.0
    %1264 = vmatpush1.msra.mxu0 0.0
    %1265 = vmatprep.subr.mxu0 0.0
    %1266 = vmatpush1.msra.mxu0 0.0
    %1267 = vmatprep.subr.mxu0 0.0
    %1268 = vmatpush1.msra.mxu0 0.0
    %1269 = vmatprep.subr.mxu0 0.0
    %1270 = vmatpush1.msra.mxu0 0.0
    %1271 = vmatprep.subr.mxu0 0.0
    %1272 = vmatpush1.msra.mxu0 0.0
    %1273 = vmatprep.subr.mxu0 0.0
    %1274 = vmatpush1.msra.mxu0 0.0
    %1275 = vmatprep.subr.mxu0 0.0
    %1276 = vmatpush1.msra.mxu0 0.0
    %1277 = vmatprep.subr.mxu0 0.0
    %1278 = vmatpush1.msra.mxu0 0.0
    %1279 = vmatprep.subr.mxu0 0.0
    %1280 = vmatpush1.msra.mxu0 0.0
    %1281 = vmatprep.subr.mxu0 0.0
    %1282 = vmatpush1.msra.mxu0 0.0
    %1283 = vmatprep.subr.mxu0 0.0
    %1284 = vmatpush1.msra.mxu0 0.0
    %1285 = vmatprep.mubr.f32.mxu0 0.0
    %1286 = vmatmul.mubr.f32.gmra.mrb[0].mxu0 %v1213
    %v1287 = vpop.f32.mrb[0].mxu0
    %v1288 = vadd.f32 0.0, %v1287
    %v1289 = vpop.f32.mrb[0].mxu0
    %v1290 = vadd.f32 0.0, %v1289
    %1291 = vdwg.mxu0
    %1292 = vmatprep.subr.mxu0 0.0
    %1293 = vmatpush1.msra.mxu0 %v1219
    %1294 = vmatprep.subr.mxu0 0.0
    %1295 = vmatpush1.msra.mxu0 0.0
    %1296 = vmatprep.subr.mxu0 0.0
    %1297 = vmatpush1.msra.mxu0 0.0
    %1298 = vmatprep.subr.mxu0 0.0
    %1299 = vmatpush1.msra.mxu0 0.0
    %1300 = vmatprep.subr.mxu0 0.0
    %1301 = vmatpush1.msra.mxu0 0.0
    %1302 = vmatprep.subr.mxu0 0.0
    %1303 = vmatpush1.msra.mxu0 0.0
    %1304 = vmatprep.subr.mxu0 0.0
    %1305 = vmatpush1.msra.mxu0 0.0
    %1306 = vmatprep.subr.mxu0 0.0
    %1307 = vmatpush1.msra.mxu0 0.0
    %1308 = vmatprep.subr.mxu0 0.0
    %1309 = vmatpush1.msra.mxu0 0.0
    %1310 = vmatprep.subr.mxu0 0.0
    %1311 = vmatpush1.msra.mxu0 0.0
    %1312 = vmatprep.subr.mxu0 0.0
    %1313 = vmatpush1.msra.mxu0 0.0
    %1314 = vmatprep.subr.mxu0 0.0
    %1315 = vmatpush1.msra.mxu0 0.0
    %1316 = vmatprep.subr.mxu0 0.0
    %1317 = vmatpush1.msra.mxu0 0.0
    %1318 = vmatprep.subr.mxu0 0.0
    %1319 = vmatpush1.msra.mxu0 0.0
    %1320 = vmatprep.subr.mxu0 0.0
    %1321 = vmatpush1.msra.mxu0 0.0
    %1322 = vmatprep.subr.mxu0 0.0
    %1323 = vmatpush1.msra.mxu0 0.0
    %1324 = vmatprep.subr.mxu0 0.0
    %1325 = vmatpush1.msra.mxu0 0.0
    %1326 = vmatprep.subr.mxu0 0.0
    %1327 = vmatpush1.msra.mxu0 0.0
    %1328 = vmatprep.subr.mxu0 0.0
    %1329 = vmatpush1.msra.mxu0 0.0
    %1330 = vmatprep.subr.mxu0 0.0
    %1331 = vmatpush1.msra.mxu0 0.0
    %1332 = vmatprep.subr.mxu0 0.0
    %1333 = vmatpush1.msra.mxu0 0.0
    %1334 = vmatprep.subr.mxu0 0.0
    %1335 = vmatpush1.msra.mxu0 0.0
    %1336 = vmatprep.subr.mxu0 0.0
    %1337 = vmatpush1.msra.mxu0 0.0
    %1338 = vmatprep.subr.mxu0 0.0
    %1339 = vmatpush1.msra.mxu0 0.0
    %1340 = vmatprep.subr.mxu0 0.0
    %1341 = vmatpush1.msra.mxu0 0.0
    %1342 = vmatprep.subr.mxu0 0.0
    %1343 = vmatpush1.msra.mxu0 0.0
    %1344 = vmatprep.subr.mxu0 0.0
    %1345 = vmatpush1.msra.mxu0 0.0
    %1346 = vmatprep.subr.mxu0 0.0
    %1347 = vmatpush1.msra.mxu0 0.0
    %1348 = vmatprep.subr.mxu0 0.0
    %1349 = vmatpush1.msra.mxu0 0.0
    %1350 = vmatprep.subr.mxu0 0.0
    %1351 = vmatpush1.msra.mxu0 0.0
    %1352 = vmatprep.subr.mxu0 0.0
    %1353 = vmatpush1.msra.mxu0 0.0
    %1354 = vmatprep.subr.mxu0 0.0
    %1355 = vmatpush1.msra.mxu0 0.0
    %1356 = vmatprep.mubr.f32.mxu0 0.0
    %1357 = vmatmul.mubr.f32.gmra.mrb[0].mxu0 %v1213
    %v1358 = vpop.f32.mrb[0].mxu0
    %v1359 = vadd.f32 0.0, %v1358
    %v1360 = vpop.f32.mrb[0].mxu0
    %1361 = vdwg.mxu0
    %v1362 = vadd.f32 %v1193, %v1288
    %v1363 = vadd.f32 %v1194, %v1290
    %v1364 = vadd.f32 %v1195, %v1359
    %s1365 = scalar_lea.vmem %s1, 64
    %v1366 = vld [vmem:[%s1365] sm:$0xff]
    %v1367 = vld [vmem:[%s0] sm:$0xff]
    %v1368 = vld [vmem:[%s0 + $0x8] sm:$0xf]
    %v1371 = vcombine.high %v1367, %v1367
    %1372 = vrot.lane.b32.xlu0 %v1367, 90
    %v1373 = vpop.permute.xlu0 %1372
    %1374 = vrot.lane.b32.xlu0 %v1371, 90
    %v1375 = vpop.permute.xlu0 %1374
    %1376 = vrot.lane.b32.xlu0 %v1368, 90
    %v1377 = vpop.permute.xlu0 %1376
    %vm1378 = vcmask 736256
    %v1379 = vsel %vm1378, %v1373, %v1375
    %v1380 = vsel %vm1378, %v1375, %v1377
    %v1382 = vsel %vm27, %v1366, 0
    %v1384 = vsel %vm31, %v1379, 0
    %v1386 = vsel %vm31, %v1380, 0
    %v1388 = vsel %vm31, %v1377, 0
    %1390 = vmatprep.subr.mxu0 %v1386
    %1391 = vmatpush1.msra.mxu0 %v1384
    %1392 = vmatprep.subr.mxu0 0.0
    %1393 = vmatpush1.msra.mxu0 0.0
    %1394 = vmatprep.subr.mxu0 0.0
    %1395 = vmatpush1.msra.mxu0 0.0
    %1396 = vmatprep.subr.mxu0 0.0
    %1397 = vmatpush1.msra.mxu0 0.0
    %1398 = vmatprep.subr.mxu0 0.0
    %1399 = vmatpush1.msra.mxu0 0.0
    %1400 = vmatprep.subr.mxu0 0.0
    %1401 = vmatpush1.msra.mxu0 0.0
    %1402 = vmatprep.subr.mxu0 0.0
    %1403 = vmatpush1.msra.mxu0 0.0
    %1404 = vmatprep.subr.mxu0 0.0
    %1405 = vmatpush1.msra.mxu0 0.0
    %1406 = vmatprep.subr.mxu0 0.0
    %1407 = vmatpush1.msra.mxu0 0.0
    %1408 = vmatprep.subr.mxu0 0.0
    %1409 = vmatpush1.msra.mxu0 0.0
    %1410 = vmatprep.subr.mxu0 0.0
    %1411 = vmatpush1.msra.mxu0 0.0
    %1412 = vmatprep.subr.mxu0 0.0
    %1413 = vmatpush1.msra.mxu0 0.0
    %1414 = vmatprep.subr.mxu0 0.0
    %1415 = vmatpush1.msra.mxu0 0.0
    %1416 = vmatprep.subr.mxu0 0.0
    %1417 = vmatpush1.msra.mxu0 0.0
    %1418 = vmatprep.subr.mxu0 0.0
    %1419 = vmatpush1.msra.mxu0 0.0
    %1420 = vmatprep.subr.mxu0 0.0
    %1421 = vmatpush1.msra.mxu0 0.0
    %1422 = vmatprep.subr.mxu0 0.0
    %1423 = vmatpush1.msra.mxu0 0.0
    %1424 = vmatprep.subr.mxu0 0.0
    %1425 = vmatpush1.msra.mxu0 0.0
    %1426 = vmatprep.subr.mxu0 0.0
    %1427 = vmatpush1.msra.mxu0 0.0
    %1428 = vmatprep.subr.mxu0 0.0
    %1429 = vmatpush1.msra.mxu0 0.0
    %1430 = vmatprep.subr.mxu0 0.0
    %1431 = vmatpush1.msra.mxu0 0.0
    %1432 = vmatprep.subr.mxu0 0.0
    %1433 = vmatpush1.msra.mxu0 0.0
    %1434 = vmatprep.subr.mxu0 0.0
    %1435 = vmatpush1.msra.mxu0 0.0
    %1436 = vmatprep.subr.mxu0 0.0
    %1437 = vmatpush1.msra.mxu0 0.0
    %1438 = vmatprep.subr.mxu0 0.0
    %1439 = vmatpush1.msra.mxu0 0.0
    %1440 = vmatprep.subr.mxu0 0.0
    %1441 = vmatpush1.msra.mxu0 0.0
    %1442 = vmatprep.subr.mxu0 0.0
    %1443 = vmatpush1.msra.mxu0 0.0
    %1444 = vmatprep.subr.mxu0 0.0
    %1445 = vmatpush1.msra.mxu0 0.0
    %1446 = vmatprep.subr.mxu0 0.0
    %1447 = vmatpush1.msra.mxu0 0.0
    %1448 = vmatprep.subr.mxu0 0.0
    %1449 = vmatpush1.msra.mxu0 0.0
    %1450 = vmatprep.subr.mxu0 0.0
    %1451 = vmatpush1.msra.mxu0 0.0
    %1452 = vmatprep.subr.mxu0 0.0
    %1453 = vmatpush1.msra.mxu0 0.0
    %1454 = vmatprep.mubr.f32.mxu0 0.0
    %1455 = vmatmul.mubr.f32.gmra.mrb[0].mxu0 %v1382
    %v1456 = vpop.f32.mrb[0].mxu0
    %v1457 = vadd.f32 0.0, %v1456
    %v1458 = vpop.f32.mrb[0].mxu0
    %v1459 = vadd.f32 0.0, %v1458
    %1460 = vdwg.mxu0
    %1461 = vmatprep.subr.mxu0 0.0
    %1462 = vmatpush1.msra.mxu0 %v1388
    %1463 = vmatprep.subr.mxu0 0.0
    %1464 = vmatpush1.msra.mxu0 0.0
    %1465 = vmatprep.subr.mxu0 0.0
    %1466 = vmatpush1.msra.mxu0 0.0
    %1467 = vmatprep.subr.mxu0 0.0
    %1468 = vmatpush1.msra.mxu0 0.0
    %1469 = vmatprep.subr.mxu0 0.0
    %1470 = vmatpush1.msra.mxu0 0.0
    %1471 = vmatprep.subr.mxu0 0.0
    %1472 = vmatpush1.msra.mxu0 0.0
    %1473 = vmatprep.subr.mxu0 0.0
    %1474 = vmatpush1.msra.mxu0 0.0
    %1475 = vmatprep.subr.mxu0 0.0
    %1476 = vmatpush1.msra.mxu0 0.0
    %1477 = vmatprep.subr.mxu0 0.0
    %1478 = vmatpush1.msra.mxu0 0.0
    %1479 = vmatprep.subr.mxu0 0.0
    %1480 = vmatpush1.msra.mxu0 0.0
    %1481 = vmatprep.subr.mxu0 0.0
    %1482 = vmatpush1.msra.mxu0 0.0
    %1483 = vmatprep.subr.mxu0 0.0
    %1484 = vmatpush1.msra.mxu0 0.0
    %1485 = vmatprep.subr.mxu0 0.0
    %1486 = vmatpush1.msra.mxu0 0.0
    %1487 = vmatprep.subr.mxu0 0.0
    %1488 = vmatpush1.msra.mxu0 0.0
    %1489 = vmatprep.subr.mxu0 0.0
    %1490 = vmatpush1.msra.mxu0 0.0
    %1491 = vmatprep.subr.mxu0 0.0
    %1492 = vmatpush1.msra.mxu0 0.0
    %1493 = vmatprep.subr.mxu0 0.0
    %1494 = vmatpush1.msra.mxu0 0.0
    %1495 = vmatprep.subr.mxu0 0.0
    %1496 = vmatpush1.msra.mxu0 0.0
    %1497 = vmatprep.subr.mxu0 0.0
    %1498 = vmatpush1.msra.mxu0 0.0
    %1499 = vmatprep.subr.mxu0 0.0
    %1500 = vmatpush1.msra.mxu0 0.0
    %1501 = vmatprep.subr.mxu0 0.0
    %1502 = vmatpush1.msra.mxu0 0.0
    %1503 = vmatprep.subr.mxu0 0.0
    %1504 = vmatpush1.msra.mxu0 0.0
    %1505 = vmatprep.subr.mxu0 0.0
    %1506 = vmatpush1.msra.mxu0 0.0
    %1507 = vmatprep.subr.mxu0 0.0
    %1508 = vmatpush1.msra.mxu0 0.0
    %1509 = vmatprep.subr.mxu0 0.0
    %1510 = vmatpush1.msra.mxu0 0.0
    %1511 = vmatprep.subr.mxu0 0.0
    %1512 = vmatpush1.msra.mxu0 0.0
    %1513 = vmatprep.subr.mxu0 0.0
    %1514 = vmatpush1.msra.mxu0 0.0
    %1515 = vmatprep.subr.mxu0 0.0
    %1516 = vmatpush1.msra.mxu0 0.0
    %1517 = vmatprep.subr.mxu0 0.0
    %1518 = vmatpush1.msra.mxu0 0.0
    %1519 = vmatprep.subr.mxu0 0.0
    %1520 = vmatpush1.msra.mxu0 0.0
    %1521 = vmatprep.subr.mxu0 0.0
    %1522 = vmatpush1.msra.mxu0 0.0
    %1523 = vmatprep.subr.mxu0 0.0
    %1524 = vmatpush1.msra.mxu0 0.0
    %1525 = vmatprep.mubr.f32.mxu0 0.0
    %1526 = vmatmul.mubr.f32.gmra.mrb[0].mxu0 %v1382
    %v1527 = vpop.f32.mrb[0].mxu0
    %v1528 = vadd.f32 0.0, %v1527
    %v1529 = vpop.f32.mrb[0].mxu0
    %1530 = vdwg.mxu0
    %v1531 = vadd.f32 %v1362, %v1457
    %v1532 = vadd.f32 %v1363, %v1459
    %v1533 = vadd.f32 %v1364, %v1528
    %v1534 = vmax.f32 %v1531, 0.0
    %v1535 = vmax.f32 %v1532, 0.0
    %v1536 = vmax.f32 %v1533, 0.0
    %1537 = vst [vmem:[#allocation2] sm:$0xff] %v1534
    %1538 = vst [vmem:[#allocation2 + $0x8] sm:$0xff] %v1535
    %vm1539 = vcmask 261120
    %1540 = vst.msk [vmem:[#allocation2 + $0x10] sm:$0xff] %vm1539, %v1536
    %v1541 = vld [vmem:[%s1] sm:$0xff]
    %s1542 = scalar_lea.vmem %s0, 12
    %v1543 = vld [vmem:[%s1542] sm:$0xff]
    %v1544 = vld [vmem:[%s1542 + $0x8] sm:$0xf]
    %v1547 = vcombine.high %v1543, %v1543
    %v1549 = vsel %vm27, %v1541, 0
    %v1551 = vsel %vm31, %v1543, 0
    %v1553 = vsel %vm31, %v1547, 0
    %v1555 = vsel %vm31, %v1544, 0
    %1557 = vmatprep.subr.mxu0 %v1553
    %1558 = vmatpush1.msra.mxu0 %v1551
    %1559 = vmatprep.subr.mxu0 0.0
    %1560 = vmatpush1.msra.mxu0 0.0
    %1561 = vmatprep.subr.mxu0 0.0
    %1562 = vmatpush1.msra.mxu0 0.0
    %1563 = vmatprep.subr.mxu0 0.0
    %1564 = vmatpush1.msra.mxu0 0.0
    %1565 = vmatprep.subr.mxu0 0.0
    %1566 = vmatpush1.msra.mxu0 0.0
    %1567 = vmatprep.subr.mxu0 0.0
    %1568 = vmatpush1.msra.mxu0 0.0
    %1569 = vmatprep.subr.mxu0 0.0
    %1570 = vmatpush1.msra.mxu0 0.0
    %1571 = vmatprep.subr.mxu0 0.0
    %1572 = vmatpush1.msra.mxu0 0.0
    %1573 = vmatprep.subr.mxu0 0.0
    %1574 = vmatpush1.msra.mxu0 0.0
    %1575 = vmatprep.subr.mxu0 0.0
    %1576 = vmatpush1.msra.mxu0 0.0
    %1577 = vmatprep.subr.mxu0 0.0
    %1578 = vmatpush1.msra.mxu0 0.0
    %1579 = vmatprep.subr.mxu0 0.0
    %1580 = vmatpush1.msra.mxu0 0.0
    %1581 = vmatprep.subr.mxu0 0.0
    %1582 = vmatpush1.msra.mxu0 0.0
    %1583 = vmatprep.subr.mxu0 0.0
    %1584 = vmatpush1.msra.mxu0 0.0
    %1585 = vmatprep.subr.mxu0 0.0
    %1586 = vmatpush1.msra.mxu0 0.0
    %1587 = vmatprep.subr.mxu0 0.0
    %1588 = vmatpush1.msra.mxu0 0.0
    %1589 = vmatprep.subr.mxu0 0.0
    %1590 = vmatpush1.msra.mxu0 0.0
    %1591 = vmatprep.subr.mxu0 0.0
    %1592 = vmatpush1.msra.mxu0 0.0
    %1593 = vmatprep.subr.mxu0 0.0
    %1594 = vmatpush1.msra.mxu0 0.0
    %1595 = vmatprep.subr.mxu0 0.0
    %1596 = vmatpush1.msra.mxu0 0.0
    %1597 = vmatprep.subr.mxu0 0.0
    %1598 = vmatpush1.msra.mxu0 0.0
    %1599 = vmatprep.subr.mxu0 0.0
    %1600 = vmatpush1.msra.mxu0 0.0
    %1601 = vmatprep.subr.mxu0 0.0
    %1602 = vmatpush1.msra.mxu0 0.0
    %1603 = vmatprep.subr.mxu0 0.0
    %1604 = vmatpush1.msra.mxu0 0.0
    %1605 = vmatprep.subr.mxu0 0.0
    %1606 = vmatpush1.msra.mxu0 0.0
    %1607 = vmatprep.subr.mxu0 0.0
    %1608 = vmatpush1.msra.mxu0 0.0
    %1609 = vmatprep.subr.mxu0 0.0
    %1610 = vmatpush1.msra.mxu0 0.0
    %1611 = vmatprep.subr.mxu0 0.0
    %1612 = vmatpush1.msra.mxu0 0.0
    %1613 = vmatprep.subr.mxu0 0.0
    %1614 = vmatpush1.msra.mxu0 0.0
    %1615 = vmatprep.subr.mxu0 0.0
    %1616 = vmatpush1.msra.mxu0 0.0
    %1617 = vmatprep.subr.mxu0 0.0
    %1618 = vmatpush1.msra.mxu0 0.0
    %1619 = vmatprep.subr.mxu0 0.0
    %1620 = vmatpush1.msra.mxu0 0.0
    %1621 = vmatprep.mubr.f32.mxu0 0.0
    %1622 = vmatmul.mubr.f32.gmra.mrb[0].mxu0 %v1549
    %v1623 = vpop.f32.mrb[0].mxu0
    %v1624 = vadd.f32 0.0, %v1623
    %v1625 = vpop.f32.mrb[0].mxu0
    %v1626 = vadd.f32 0.0, %v1625
    %1627 = vdwg.mxu0
    %1628 = vmatprep.subr.mxu0 0.0
    %1629 = vmatpush1.msra.mxu0 %v1555
    %1630 = vmatprep.subr.mxu0 0.0
    %1631 = vmatpush1.msra.mxu0 0.0
    %1632 = vmatprep.subr.mxu0 0.0
    %1633 = vmatpush1.msra.mxu0 0.0
    %1634 = vmatprep.subr.mxu0 0.0
    %1635 = vmatpush1.msra.mxu0 0.0
    %1636 = vmatprep.subr.mxu0 0.0
    %1637 = vmatpush1.msra.mxu0 0.0
    %1638 = vmatprep.subr.mxu0 0.0
    %1639 = vmatpush1.msra.mxu0 0.0
    %1640 = vmatprep.subr.mxu0 0.0
    %1641 = vmatpush1.msra.mxu0 0.0
    %1642 = vmatprep.subr.mxu0 0.0
    %1643 = vmatpush1.msra.mxu0 0.0
    %1644 = vmatprep.subr.mxu0 0.0
    %1645 = vmatpush1.msra.mxu0 0.0
    %1646 = vmatprep.subr.mxu0 0.0
    %1647 = vmatpush1.msra.mxu0 0.0
    %1648 = vmatprep.subr.mxu0 0.0
    %1649 = vmatpush1.msra.mxu0 0.0
    %1650 = vmatprep.subr.mxu0 0.0
    %1651 = vmatpush1.msra.mxu0 0.0
    %1652 = vmatprep.subr.mxu0 0.0
    %1653 = vmatpush1.msra.mxu0 0.0
    %1654 = vmatprep.subr.mxu0 0.0
    %1655 = vmatpush1.msra.mxu0 0.0
    %1656 = vmatprep.subr.mxu0 0.0
    %1657 = vmatpush1.msra.mxu0 0.0
    %1658 = vmatprep.subr.mxu0 0.0
    %1659 = vmatpush1.msra.mxu0 0.0
    %1660 = vmatprep.subr.mxu0 0.0
    %1661 = vmatpush1.msra.mxu0 0.0
    %1662 = vmatprep.subr.mxu0 0.0
    %1663 = vmatpush1.msra.mxu0 0.0
    %1664 = vmatprep.subr.mxu0 0.0
    %1665 = vmatpush1.msra.mxu0 0.0
    %1666 = vmatprep.subr.mxu0 0.0
    %1667 = vmatpush1.msra.mxu0 0.0
    %1668 = vmatprep.subr.mxu0 0.0
    %1669 = vmatpush1.msra.mxu0 0.0
    %1670 = vmatprep.subr.mxu0 0.0
    %1671 = vmatpush1.msra.mxu0 0.0
    %1672 = vmatprep.subr.mxu0 0.0
    %1673 = vmatpush1.msra.mxu0 0.0
    %1674 = vmatprep.subr.mxu0 0.0
    %1675 = vmatpush1.msra.mxu0 0.0
    %1676 = vmatprep.subr.mxu0 0.0
    %1677 = vmatpush1.msra.mxu0 0.0
    %1678 = vmatprep.subr.mxu0 0.0
    %1679 = vmatpush1.msra.mxu0 0.0
    %1680 = vmatprep.subr.mxu0 0.0
    %1681 = vmatpush1.msra.mxu0 0.0
    %1682 = vmatprep.subr.mxu0 0.0
    %1683 = vmatpush1.msra.mxu0 0.0
    %1684 = vmatprep.subr.mxu0 0.0
    %1685 = vmatpush1.msra.mxu0 0.0
    %1686 = vmatprep.subr.mxu0 0.0
    %1687 = vmatpush1.msra.mxu0 0.0
    %1688 = vmatprep.subr.mxu0 0.0
    %1689 = vmatpush1.msra.mxu0 0.0
    %1690 = vmatprep.subr.mxu0 0.0
    %1691 = vmatpush1.msra.mxu0 0.0
    %1692 = vmatprep.mubr.f32.mxu0 0.0
    %1693 = vmatmul.mubr.f32.gmra.mrb[0].mxu0 %v1549
    %v1694 = vpop.f32.mrb[0].mxu0
    %v1695 = vadd.f32 0.0, %v1694
    %v1696 = vpop.f32.mrb[0].mxu0
    %1697 = vdwg.mxu0
    %v1698 = vadd.f32 %v19, %v1624
    %v1699 = vadd.f32 %v19, %v1626
    %v1700 = vadd.f32 %v19, %v1695
    %v1701 = vld [vmem:[%s182] sm:$0xff]
    %v1702 = vld [vmem:[%s1542] sm:$0xff]
    %v1703 = vld [vmem:[%s1542 + $0x8] sm:$0xf]
    %v1706 = vcombine.high %v1702, %v1702
    %1707 = vrot.lane.b32.xlu0 %v1702, 127
    %v1708 = vpop.permute.xlu0 %1707
    %1709 = vrot.lane.b32.xlu0 %v1706, 127
    %v1710 = vpop.permute.xlu0 %1709
    %1711 = vrot.lane.b32.xlu0 %v1703, 127
    %v1712 = vpop.permute.xlu0 %1711
    %v1713 = vsel %vm195, %v1708, %v1710
    %v1714 = vsel %vm195, %v1710, %v1712
    %v1716 = vsel %vm27, %v1701, 0
    %v1718 = vsel %vm31, %v1713, 0
    %v1720 = vsel %vm31, %v1714, 0
    %v1722 = vsel %vm31, %v1712, 0
    %1724 = vmatprep.subr.mxu0 %v1720
    %1725 = vmatpush1.msra.mxu0 %v1718
    %1726 = vmatprep.subr.mxu0 0.0
    %1727 = vmatpush1.msra.mxu0 0.0
    %1728 = vmatprep.subr.mxu0 0.0
    %1729 = vmatpush1.msra.mxu0 0.0
    %1730 = vmatprep.subr.mxu0 0.0
    %1731 = vmatpush1.msra.mxu0 0.0
    %1732 = vmatprep.subr.mxu0 0.0
    %1733 = vmatpush1.msra.mxu0 0.0
    %1734 = vmatprep.subr.mxu0 0.0
    %1735 = vmatpush1.msra.mxu0 0.0
    %1736 = vmatprep.subr.mxu0 0.0
    %1737 = vmatpush1.msra.mxu0 0.0
    %1738 = vmatprep.subr.mxu0 0.0
    %1739 = vmatpush1.msra.mxu0 0.0
    %1740 = vmatprep.subr.mxu0 0.0
    %1741 = vmatpush1.msra.mxu0 0.0
    %1742 = vmatprep.subr.mxu0 0.0
    %1743 = vmatpush1.msra.mxu0 0.0
    %1744 = vmatprep.subr.mxu0 0.0
    %1745 = vmatpush1.msra.mxu0 0.0
    %1746 = vmatprep.subr.mxu0 0.0
    %1747 = vmatpush1.msra.mxu0 0.0
    %1748 = vmatprep.subr.mxu0 0.0
    %1749 = vmatpush1.msra.mxu0 0.0
    %1750 = vmatprep.subr.mxu0 0.0
    %1751 = vmatpush1.msra.mxu0 0.0
    %1752 = vmatprep.subr.mxu0 0.0
    %1753 = vmatpush1.msra.mxu0 0.0
    %1754 = vmatprep.subr.mxu0 0.0
    %1755 = vmatpush1.msra.mxu0 0.0
    %1756 = vmatprep.subr.mxu0 0.0
    %1757 = vmatpush1.msra.mxu0 0.0
    %1758 = vmatprep.subr.mxu0 0.0
    %1759 = vmatpush1.msra.mxu0 0.0
    %1760 = vmatprep.subr.mxu0 0.0
    %1761 = vmatpush1.msra.mxu0 0.0
    %1762 = vmatprep.subr.mxu0 0.0
    %1763 = vmatpush1.msra.mxu0 0.0
    %1764 = vmatprep.subr.mxu0 0.0
    %1765 = vmatpush1.msra.mxu0 0.0
    %1766 = vmatprep.subr.mxu0 0.0
    %1767 = vmatpush1.msra.mxu0 0.0
    %1768 = vmatprep.subr.mxu0 0.0
    %1769 = vmatpush1.msra.mxu0 0.0
    %1770 = vmatprep.subr.mxu0 0.0
    %1771 = vmatpush1.msra.mxu0 0.0
    %1772 = vmatprep.subr.mxu0 0.0
    %1773 = vmatpush1.msra.mxu0 0.0
    %1774 = vmatprep.subr.mxu0 0.0
    %1775 = vmatpush1.msra.mxu0 0.0
    %1776 = vmatprep.subr.mxu0 0.0
    %1777 = vmatpush1.msra.mxu0 0.0
    %1778 = vmatprep.subr.mxu0 0.0
    %1779 = vmatpush1.msra.mxu0 0.0
    %1780 = vmatprep.subr.mxu0 0.0
    %1781 = vmatpush1.msra.mxu0 0.0
    %1782 = vmatprep.subr.mxu0 0.0
    %1783 = vmatpush1.msra.mxu0 0.0
    %1784 = vmatprep.subr.mxu0 0.0
    %1785 = vmatpush1.msra.mxu0 0.0
    %1786 = vmatprep.subr.mxu0 0.0
    %1787 = vmatpush1.msra.mxu0 0.0
    %1788 = vmatprep.mubr.f32.mxu0 0.0
    %1789 = vmatmul.mubr.f32.gmra.mrb[0].mxu0 %v1716
    %v1790 = vpop.f32.mrb[0].mxu0
    %v1791 = vadd.f32 0.0, %v1790
    %v1792 = vpop.f32.mrb[0].mxu0
    %v1793 = vadd.f32 0.0, %v1792
    %1794 = vdwg.mxu0
    %1795 = vmatprep.subr.mxu0 0.0
    %1796 = vmatpush1.msra.mxu0 %v1722
    %1797 = vmatprep.subr.mxu0 0.0
    %1798 = vmatpush1.msra.mxu0 0.0
    %1799 = vmatprep.subr.mxu0 0.0
    %1800 = vmatpush1.msra.mxu0 0.0
    %1801 = vmatprep.subr.mxu0 0.0
    %1802 = vmatpush1.msra.mxu0 0.0
    %1803 = vmatprep.subr.mxu0 0.0
    %1804 = vmatpush1.msra.mxu0 0.0
    %1805 = vmatprep.subr.mxu0 0.0
    %1806 = vmatpush1.msra.mxu0 0.0
    %1807 = vmatprep.subr.mxu0 0.0
    %1808 = vmatpush1.msra.mxu0 0.0
    %1809 = vmatprep.subr.mxu0 0.0
    %1810 = vmatpush1.msra.mxu0 0.0
    %1811 = vmatprep.subr.mxu0 0.0
    %1812 = vmatpush1.msra.mxu0 0.0
    %1813 = vmatprep.subr.mxu0 0.0
    %1814 = vmatpush1.msra.mxu0 0.0
    %1815 = vmatprep.subr.mxu0 0.0
    %1816 = vmatpush1.msra.mxu0 0.0
    %1817 = vmatprep.subr.mxu0 0.0
    %1818 = vmatpush1.msra.mxu0 0.0
    %1819 = vmatprep.subr.mxu0 0.0
    %1820 = vmatpush1.msra.mxu0 0.0
    %1821 = vmatprep.subr.mxu0 0.0
    %1822 = vmatpush1.msra.mxu0 0.0
    %1823 = vmatprep.subr.mxu0 0.0
    %1824 = vmatpush1.msra.mxu0 0.0
    %1825 = vmatprep.subr.mxu0 0.0
    %1826 = vmatpush1.msra.mxu0 0.0
    %1827 = vmatprep.subr.mxu0 0.0
    %1828 = vmatpush1.msra.mxu0 0.0
    %1829 = vmatprep.subr.mxu0 0.0
    %1830 = vmatpush1.msra.mxu0 0.0
    %1831 = vmatprep.subr.mxu0 0.0
    %1832 = vmatpush1.msra.mxu0 0.0
    %1833 = vmatprep.subr.mxu0 0.0
    %1834 = vmatpush1.msra.mxu0 0.0
    %1835 = vmatprep.subr.mxu0 0.0
    %1836 = vmatpush1.msra.mxu0 0.0
    %1837 = vmatprep.subr.mxu0 0.0
    %1838 = vmatpush1.msra.mxu0 0.0
    %1839 = vmatprep.subr.mxu0 0.0
    %1840 = vmatpush1.msra.mxu0 0.0
    %1841 = vmatprep.subr.mxu0 0.0
    %1842 = vmatpush1.msra.mxu0 0.0
    %1843 = vmatprep.subr.mxu0 0.0
    %1844 = vmatpush1.msra.mxu0 0.0
    %1845 = vmatprep.subr.mxu0 0.0
    %1846 = vmatpush1.msra.mxu0 0.0
    %1847 = vmatprep.subr.mxu0 0.0
    %1848 = vmatpush1.msra.mxu0 0.0
    %1849 = vmatprep.subr.mxu0 0.0
    %1850 = vmatpush1.msra.mxu0 0.0
    %1851 = vmatprep.subr.mxu0 0.0
    %1852 = vmatpush1.msra.mxu0 0.0
    %1853 = vmatprep.subr.mxu0 0.0
    %1854 = vmatpush1.msra.mxu0 0.0
    %1855 = vmatprep.subr.mxu0 0.0
    %1856 = vmatpush1.msra.mxu0 0.0
    %1857 = vmatprep.subr.mxu0 0.0
    %1858 = vmatpush1.msra.mxu0 0.0
    %1859 = vmatprep.mubr.f32.mxu0 0.0
    %1860 = vmatmul.mubr.f32.gmra.mrb[0].mxu0 %v1716
    %v1861 = vpop.f32.mrb[0].mxu0
    %v1862 = vadd.f32 0.0, %v1861
    %v1863 = vpop.f32.mrb[0].mxu0
    %1864 = vdwg.mxu0
    %v1865 = vadd.f32 %v1698, %v1791
    %v1866 = vadd.f32 %v1699, %v1793
    %v1867 = vadd.f32 %v1700, %v1862
    %v1868 = vld [vmem:[%s351] sm:$0xff]
    %v1869 = vld [vmem:[%s1542] sm:$0xff]
    %v1870 = vld [vmem:[%s1542 + $0x8] sm:$0xf]
    %v1873 = vcombine.high %v1869, %v1869
    %1874 = vrot.lane.b32.xlu0 %v1869, 126
    %v1875 = vpop.permute.xlu0 %1874
    %1876 = vrot.lane.b32.xlu0 %v1873, 126
    %v1877 = vpop.permute.xlu0 %1876
    %1878 = vrot.lane.b32.xlu0 %v1870, 126
    %v1879 = vpop.permute.xlu0 %1878
    %v1880 = vsel %vm364, %v1875, %v1877
    %v1881 = vsel %vm364, %v1877, %v1879
    %v1883 = vsel %vm27, %v1868, 0
    %v1885 = vsel %vm31, %v1880, 0
    %v1887 = vsel %vm31, %v1881, 0
    %v1889 = vsel %vm31, %v1879, 0
    %1891 = vmatprep.subr.mxu0 %v1887
    %1892 = vmatpush1.msra.mxu0 %v1885
    %1893 = vmatprep.subr.mxu0 0.0
    %1894 = vmatpush1.msra.mxu0 0.0
    %1895 = vmatprep.subr.mxu0 0.0
    %1896 = vmatpush1.msra.mxu0 0.0
    %1897 = vmatprep.subr.mxu0 0.0
    %1898 = vmatpush1.msra.mxu0 0.0
    %1899 = vmatprep.subr.mxu0 0.0
    %1900 = vmatpush1.msra.mxu0 0.0
    %1901 = vmatprep.subr.mxu0 0.0
    %1902 = vmatpush1.msra.mxu0 0.0
    %1903 = vmatprep.subr.mxu0 0.0
    %1904 = vmatpush1.msra.mxu0 0.0
    %1905 = vmatprep.subr.mxu0 0.0
    %1906 = vmatpush1.msra.mxu0 0.0
    %1907 = vmatprep.subr.mxu0 0.0
    %1908 = vmatpush1.msra.mxu0 0.0
    %1909 = vmatprep.subr.mxu0 0.0
    %1910 = vmatpush1.msra.mxu0 0.0
    %1911 = vmatprep.subr.mxu0 0.0
    %1912 = vmatpush1.msra.mxu0 0.0
    %1913 = vmatprep.subr.mxu0 0.0
    %1914 = vmatpush1.msra.mxu0 0.0
    %1915 = vmatprep.subr.mxu0 0.0
    %1916 = vmatpush1.msra.mxu0 0.0
    %1917 = vmatprep.subr.mxu0 0.0
    %1918 = vmatpush1.msra.mxu0 0.0
    %1919 = vmatprep.subr.mxu0 0.0
    %1920 = vmatpush1.msra.mxu0 0.0
    %1921 = vmatprep.subr.mxu0 0.0
    %1922 = vmatpush1.msra.mxu0 0.0
    %1923 = vmatprep.subr.mxu0 0.0
    %1924 = vmatpush1.msra.mxu0 0.0
    %1925 = vmatprep.subr.mxu0 0.0
    %1926 = vmatpush1.msra.mxu0 0.0
    %1927 = vmatprep.subr.mxu0 0.0
    %1928 = vmatpush1.msra.mxu0 0.0
    %1929 = vmatprep.subr.mxu0 0.0
    %1930 = vmatpush1.msra.mxu0 0.0
    %1931 = vmatprep.subr.mxu0 0.0
    %1932 = vmatpush1.msra.mxu0 0.0
    %1933 = vmatprep.subr.mxu0 0.0
    %1934 = vmatpush1.msra.mxu0 0.0
    %1935 = vmatprep.subr.mxu0 0.0
    %1936 = vmatpush1.msra.mxu0 0.0
    %1937 = vmatprep.subr.mxu0 0.0
    %1938 = vmatpush1.msra.mxu0 0.0
    %1939 = vmatprep.subr.mxu0 0.0
    %1940 = vmatpush1.msra.mxu0 0.0
    %1941 = vmatprep.subr.mxu0 0.0
    %1942 = vmatpush1.msra.mxu0 0.0
    %1943 = vmatprep.subr.mxu0 0.0
    %1944 = vmatpush1.msra.mxu0 0.0
    %1945 = vmatprep.subr.mxu0 0.0
    %1946 = vmatpush1.msra.mxu0 0.0
    %1947 = vmatprep.subr.mxu0 0.0
    %1948 = vmatpush1.msra.mxu0 0.0
    %1949 = vmatprep.subr.mxu0 0.0
    %1950 = vmatpush1.msra.mxu0 0.0
    %1951 = vmatprep.subr.mxu0 0.0
    %1952 = vmatpush1.msra.mxu0 0.0
    %1953 = vmatprep.subr.mxu0 0.0
    %1954 = vmatpush1.msra.mxu0 0.0
    %1955 = vmatprep.mubr.f32.mxu0 0.0
    %1956 = vmatmul.mubr.f32.gmra.mrb[0].mxu0 %v1883
    %v1957 = vpop.f32.mrb[0].mxu0
    %v1958 = vadd.f32 0.0, %v1957
    %v1959 = vpop.f32.mrb[0].mxu0
    %v1960 = vadd.f32 0.0, %v1959
    %1961 = vdwg.mxu0
    %1962 = vmatprep.subr.mxu0 0.0
    %1963 = vmatpush1.msra.mxu0 %v1889
    %1964 = vmatprep.subr.mxu0 0.0
    %1965 = vmatpush1.msra.mxu0 0.0
    %1966 = vmatprep.subr.mxu0 0.0
    %1967 = vmatpush1.msra.mxu0 0.0
    %1968 = vmatprep.subr.mxu0 0.0
    %1969 = vmatpush1.msra.mxu0 0.0
    %1970 = vmatprep.subr.mxu0 0.0
    %1971 = vmatpush1.msra.mxu0 0.0
    %1972 = vmatprep.subr.mxu0 0.0
    %1973 = vmatpush1.msra.mxu0 0.0
    %1974 = vmatprep.subr.mxu0 0.0
    %1975 = vmatpush1.msra.mxu0 0.0
    %1976 = vmatprep.subr.mxu0 0.0
    %1977 = vmatpush1.msra.mxu0 0.0
    %1978 = vmatprep.subr.mxu0 0.0
    %1979 = vmatpush1.msra.mxu0 0.0
    %1980 = vmatprep.subr.mxu0 0.0
    %1981 = vmatpush1.msra.mxu0 0.0
    %1982 = vmatprep.subr.mxu0 0.0
    %1983 = vmatpush1.msra.mxu0 0.0
    %1984 = vmatprep.subr.mxu0 0.0
    %1985 = vmatpush1.msra.mxu0 0.0
    %1986 = vmatprep.subr.mxu0 0.0
    %1987 = vmatpush1.msra.mxu0 0.0
    %1988 = vmatprep.subr.mxu0 0.0
    %1989 = vmatpush1.msra.mxu0 0.0
    %1990 = vmatprep.subr.mxu0 0.0
    %1991 = vmatpush1.msra.mxu0 0.0
    %1992 = vmatprep.subr.mxu0 0.0
    %1993 = vmatpush1.msra.mxu0 0.0
    %1994 = vmatprep.subr.mxu0 0.0
    %1995 = vmatpush1.msra.mxu0 0.0
    %1996 = vmatprep.subr.mxu0 0.0
    %1997 = vmatpush1.msra.mxu0 0.0
    %1998 = vmatprep.subr.mxu0 0.0
    %1999 = vmatpush1.msra.mxu0 0.0
    %2000 = vmatprep.subr.mxu0 0.0
    %2001 = vmatpush1.msra.mxu0 0.0
    %2002 = vmatprep.subr.mxu0 0.0
    %2003 = vmatpush1.msra.mxu0 0.0
    %2004 = vmatprep.subr.mxu0 0.0
    %2005 = vmatpush1.msra.mxu0 0.0
    %2006 = vmatprep.subr.mxu0 0.0
    %2007 = vmatpush1.msra.mxu0 0.0
    %2008 = vmatprep.subr.mxu0 0.0
    %2009 = vmatpush1.msra.mxu0 0.0
    %2010 = vmatprep.subr.mxu0 0.0
    %2011 = vmatpush1.msra.mxu0 0.0
    %2012 = vmatprep.subr.mxu0 0.0
    %2013 = vmatpush1.msra.mxu0 0.0
    %2014 = vmatprep.subr.mxu0 0.0
    %2015 = vmatpush1.msra.mxu0 0.0
    %2016 = vmatprep.subr.mxu0 0.0
    %2017 = vmatpush1.msra.mxu0 0.0
    %2018 = vmatprep.subr.mxu0 0.0
    %2019 = vmatpush1.msra.mxu0 0.0
    %2020 = vmatprep.subr.mxu0 0.0
    %2021 = vmatpush1.msra.mxu0 0.0
    %2022 = vmatprep.subr.mxu0 0.0
    %2023 = vmatpush1.msra.mxu0 0.0
    %2024 = vmatprep.subr.mxu0 0.0
    %2025 = vmatpush1.msra.mxu0 0.0
    %2026 = vmatprep.mubr.f32.mxu0 0.0
    %2027 = vmatmul.mubr.f32.gmra.mrb[0].mxu0 %v1883
    %v2028 = vpop.f32.mrb[0].mxu0
    %v2029 = vadd.f32 0.0, %v2028
    %v2030 = vpop.f32.mrb[0].mxu0
    %2031 = vdwg.mxu0
    %v2032 = vadd.f32 %v1865, %v1958
    %v2033 = vadd.f32 %v1866, %v1960
    %v2034 = vadd.f32 %v1867, %v2029
    %v2035 = vld [vmem:[%s520] sm:$0xff]
    %v2036 = vld [vmem:[%s1542] sm:$0xff]
    %v2037 = vld [vmem:[%s1542 + $0x8] sm:$0xf]
    %v2040 = vcombine.high %v2036, %v2036
    %2041 = vrot.lane.b32.xlu0 %v2036, 110
    %v2042 = vpop.permute.xlu0 %2041
    %2043 = vrot.lane.b32.xlu0 %v2040, 110
    %v2044 = vpop.permute.xlu0 %2043
    %2045 = vrot.lane.b32.xlu0 %v2037, 110
    %v2046 = vpop.permute.xlu0 %2045
    %v2047 = vsel %vm533, %v2042, %v2044
    %v2048 = vsel %vm533, %v2044, %v2046
    %v2050 = vsel %vm27, %v2035, 0
    %v2052 = vsel %vm31, %v2047, 0
    %v2054 = vsel %vm31, %v2048, 0
    %v2056 = vsel %vm31, %v2046, 0
    %2058 = vmatprep.subr.mxu0 %v2054
    %2059 = vmatpush1.msra.mxu0 %v2052
    %2060 = vmatprep.subr.mxu0 0.0
    %2061 = vmatpush1.msra.mxu0 0.0
    %2062 = vmatprep.subr.mxu0 0.0
    %2063 = vmatpush1.msra.mxu0 0.0
    %2064 = vmatprep.subr.mxu0 0.0
    %2065 = vmatpush1.msra.mxu0 0.0
    %2066 = vmatprep.subr.mxu0 0.0
    %2067 = vmatpush1.msra.mxu0 0.0
    %2068 = vmatprep.subr.mxu0 0.0
    %2069 = vmatpush1.msra.mxu0 0.0
    %2070 = vmatprep.subr.mxu0 0.0
    %2071 = vmatpush1.msra.mxu0 0.0
    %2072 = vmatprep.subr.mxu0 0.0
    %2073 = vmatpush1.msra.mxu0 0.0
    %2074 = vmatprep.subr.mxu0 0.0
    %2075 = vmatpush1.msra.mxu0 0.0
    %2076 = vmatprep.subr.mxu0 0.0
    %2077 = vmatpush1.msra.mxu0 0.0
    %2078 = vmatprep.subr.mxu0 0.0
    %2079 = vmatpush1.msra.mxu0 0.0
    %2080 = vmatprep.subr.mxu0 0.0
    %2081 = vmatpush1.msra.mxu0 0.0
    %2082 = vmatprep.subr.mxu0 0.0
    %2083 = vmatpush1.msra.mxu0 0.0
    %2084 = vmatprep.subr.mxu0 0.0
    %2085 = vmatpush1.msra.mxu0 0.0
    %2086 = vmatprep.subr.mxu0 0.0
    %2087 = vmatpush1.msra.mxu0 0.0
    %2088 = vmatprep.subr.mxu0 0.0
    %2089 = vmatpush1.msra.mxu0 0.0
    %2090 = vmatprep.subr.mxu0 0.0
    %2091 = vmatpush1.msra.mxu0 0.0
    %2092 = vmatprep.subr.mxu0 0.0
    %2093 = vmatpush1.msra.mxu0 0.0
    %2094 = vmatprep.subr.mxu0 0.0
    %2095 = vmatpush1.msra.mxu0 0.0
    %2096 = vmatprep.subr.mxu0 0.0
    %2097 = vmatpush1.msra.mxu0 0.0
    %2098 = vmatprep.subr.mxu0 0.0
    %2099 = vmatpush1.msra.mxu0 0.0
    %2100 = vmatprep.subr.mxu0 0.0
    %2101 = vmatpush1.msra.mxu0 0.0
    %2102 = vmatprep.subr.mxu0 0.0
    %2103 = vmatpush1.msra.mxu0 0.0
    %2104 = vmatprep.subr.mxu0 0.0
    %2105 = vmatpush1.msra.mxu0 0.0
    %2106 = vmatprep.subr.mxu0 0.0
    %2107 = vmatpush1.msra.mxu0 0.0
    %2108 = vmatprep.subr.mxu0 0.0
    %2109 = vmatpush1.msra.mxu0 0.0
    %2110 = vmatprep.subr.mxu0 0.0
    %2111 = vmatpush1.msra.mxu0 0.0
    %2112 = vmatprep.subr.mxu0 0.0
    %2113 = vmatpush1.msra.mxu0 0.0
    %2114 = vmatprep.subr.mxu0 0.0
    %2115 = vmatpush1.msra.mxu0 0.0
    %2116 = vmatprep.subr.mxu0 0.0
    %2117 = vmatpush1.msra.mxu0 0.0
    %2118 = vmatprep.subr.mxu0 0.0
    %2119 = vmatpush1.msra.mxu0 0.0
    %2120 = vmatprep.subr.mxu0 0.0
    %2121 = vmatpush1.msra.mxu0 0.0
    %2122 = vmatprep.mubr.f32.mxu0 0.0
    %2123 = vmatmul.mubr.f32.gmra.mrb[0].mxu0 %v2050
    %v2124 = vpop.f32.mrb[0].mxu0
    %v2125 = vadd.f32 0.0, %v2124
    %v2126 = vpop.f32.mrb[0].mxu0
    %v2127 = vadd.f32 0.0, %v2126
    %2128 = vdwg.mxu0
    %2129 = vmatprep.subr.mxu0 0.0
    %2130 = vmatpush1.msra.mxu0 %v2056
    %2131 = vmatprep.subr.mxu0 0.0
    %2132 = vmatpush1.msra.mxu0 0.0
    %2133 = vmatprep.subr.mxu0 0.0
    %2134 = vmatpush1.msra.mxu0 0.0
    %2135 = vmatprep.subr.mxu0 0.0
    %2136 = vmatpush1.msra.mxu0 0.0
    %2137 = vmatprep.subr.mxu0 0.0
    %2138 = vmatpush1.msra.mxu0 0.0
    %2139 = vmatprep.subr.mxu0 0.0
    %2140 = vmatpush1.msra.mxu0 0.0
    %2141 = vmatprep.subr.mxu0 0.0
    %2142 = vmatpush1.msra.mxu0 0.0
    %2143 = vmatprep.subr.mxu0 0.0
    %2144 = vmatpush1.msra.mxu0 0.0
    %2145 = vmatprep.subr.mxu0 0.0
    %2146 = vmatpush1.msra.mxu0 0.0
    %2147 = vmatprep.subr.mxu0 0.0
    %2148 = vmatpush1.msra.mxu0 0.0
    %2149 = vmatprep.subr.mxu0 0.0
    %2150 = vmatpush1.msra.mxu0 0.0
    %2151 = vmatprep.subr.mxu0 0.0
    %2152 = vmatpush1.msra.mxu0 0.0
    %2153 = vmatprep.subr.mxu0 0.0
    %2154 = vmatpush1.msra.mxu0 0.0
    %2155 = vmatprep.subr.mxu0 0.0
    %2156 = vmatpush1.msra.mxu0 0.0
    %2157 = vmatprep.subr.mxu0 0.0
    %2158 = vmatpush1.msra.mxu0 0.0
    %2159 = vmatprep.subr.mxu0 0.0
    %2160 = vmatpush1.msra.mxu0 0.0
    %2161 = vmatprep.subr.mxu0 0.0
    %2162 = vmatpush1.msra.mxu0 0.0
    %2163 = vmatprep.subr.mxu0 0.0
    %2164 = vmatpush1.msra.mxu0 0.0
    %2165 = vmatprep.subr.mxu0 0.0
    %2166 = vmatpush1.msra.mxu0 0.0
    %2167 = vmatprep.subr.mxu0 0.0
    %2168 = vmatpush1.msra.mxu0 0.0
    %2169 = vmatprep.subr.mxu0 0.0
    %2170 = vmatpush1.msra.mxu0 0.0
    %2171 = vmatprep.subr.mxu0 0.0
    %2172 = vmatpush1.msra.mxu0 0.0
    %2173 = vmatprep.subr.mxu0 0.0
    %2174 = vmatpush1.msra.mxu0 0.0
    %2175 = vmatprep.subr.mxu0 0.0
    %2176 = vmatpush1.msra.mxu0 0.0
    %2177 = vmatprep.subr.mxu0 0.0
    %2178 = vmatpush1.msra.mxu0 0.0
    %2179 = vmatprep.subr.mxu0 0.0
    %2180 = vmatpush1.msra.mxu0 0.0
    %2181 = vmatprep.subr.mxu0 0.0
    %2182 = vmatpush1.msra.mxu0 0.0
    %2183 = vmatprep.subr.mxu0 0.0
    %2184 = vmatpush1.msra.mxu0 0.0
    %2185 = vmatprep.subr.mxu0 0.0
    %2186 = vmatpush1.msra.mxu0 0.0
    %2187 = vmatprep.subr.mxu0 0.0
    %2188 = vmatpush1.msra.mxu0 0.0
    %2189 = vmatprep.subr.mxu0 0.0
    %2190 = vmatpush1.msra.mxu0 0.0
    %2191 = vmatprep.subr.mxu0 0.0
    %2192 = vmatpush1.msra.mxu0 0.0
    %2193 = vmatprep.mubr.f32.mxu0 0.0
    %2194 = vmatmul.mubr.f32.gmra.mrb[0].mxu0 %v2050
    %v2195 = vpop.f32.mrb[0].mxu0
    %v2196 = vadd.f32 0.0, %v2195
    %v2197 = vpop.f32.mrb[0].mxu0
    %2198 = vdwg.mxu0
    %v2199 = vadd.f32 %v2032, %v2125
    %v2200 = vadd.f32 %v2033, %v2127
    %v2201 = vadd.f32 %v2034, %v2196
    %v2202 = vld [vmem:[%s689] sm:$0xff]
    %v2203 = vld [vmem:[%s1542] sm:$0xff]
    %v2204 = vld [vmem:[%s1542 + $0x8] sm:$0xf]
    %v2207 = vcombine.high %v2203, %v2203
    %2208 = vrot.lane.b32.xlu0 %v2203, 109
    %v2209 = vpop.permute.xlu0 %2208
    %2210 = vrot.lane.b32.xlu0 %v2207, 109
    %v2211 = vpop.permute.xlu0 %2210
    %2212 = vrot.lane.b32.xlu0 %v2204, 109
    %v2213 = vpop.permute.xlu0 %2212
    %v2214 = vsel %vm702, %v2209, %v2211
    %v2215 = vsel %vm702, %v2211, %v2213
    %v2217 = vsel %vm27, %v2202, 0
    %v2219 = vsel %vm31, %v2214, 0
    %v2221 = vsel %vm31, %v2215, 0
    %v2223 = vsel %vm31, %v2213, 0
    %2225 = vmatprep.subr.mxu0 %v2221
    %2226 = vmatpush1.msra.mxu0 %v2219
    %2227 = vmatprep.subr.mxu0 0.0
    %2228 = vmatpush1.msra.mxu0 0.0
    %2229 = vmatprep.subr.mxu0 0.0
    %2230 = vmatpush1.msra.mxu0 0.0
    %2231 = vmatprep.subr.mxu0 0.0
    %2232 = vmatpush1.msra.mxu0 0.0
    %2233 = vmatprep.subr.mxu0 0.0
    %2234 = vmatpush1.msra.mxu0 0.0
    %2235 = vmatprep.subr.mxu0 0.0
    %2236 = vmatpush1.msra.mxu0 0.0
    %2237 = vmatprep.subr.mxu0 0.0
    %2238 = vmatpush1.msra.mxu0 0.0
    %2239 = vmatprep.subr.mxu0 0.0
    %2240 = vmatpush1.msra.mxu0 0.0
    %2241 = vmatprep.subr.mxu0 0.0
    %2242 = vmatpush1.msra.mxu0 0.0
    %2243 = vmatprep.subr.mxu0 0.0
    %2244 = vmatpush1.msra.mxu0 0.0
    %2245 = vmatprep.subr.mxu0 0.0
    %2246 = vmatpush1.msra.mxu0 0.0
    %2247 = vmatprep.subr.mxu0 0.0
    %2248 = vmatpush1.msra.mxu0 0.0
    %2249 = vmatprep.subr.mxu0 0.0
    %2250 = vmatpush1.msra.mxu0 0.0
    %2251 = vmatprep.subr.mxu0 0.0
    %2252 = vmatpush1.msra.mxu0 0.0
    %2253 = vmatprep.subr.mxu0 0.0
    %2254 = vmatpush1.msra.mxu0 0.0
    %2255 = vmatprep.subr.mxu0 0.0
    %2256 = vmatpush1.msra.mxu0 0.0
    %2257 = vmatprep.subr.mxu0 0.0
    %2258 = vmatpush1.msra.mxu0 0.0
    %2259 = vmatprep.subr.mxu0 0.0
    %2260 = vmatpush1.msra.mxu0 0.0
    %2261 = vmatprep.subr.mxu0 0.0
    %2262 = vmatpush1.msra.mxu0 0.0
    %2263 = vmatprep.subr.mxu0 0.0
    %2264 = vmatpush1.msra.mxu0 0.0
    %2265 = vmatprep.subr.mxu0 0.0
    %2266 = vmatpush1.msra.mxu0 0.0
    %2267 = vmatprep.subr.mxu0 0.0
    %2268 = vmatpush1.msra.mxu0 0.0
    %2269 = vmatprep.subr.mxu0 0.0
    %2270 = vmatpush1.msra.mxu0 0.0
    %2271 = vmatprep.subr.mxu0 0.0
    %2272 = vmatpush1.msra.mxu0 0.0
    %2273 = vmatprep.subr.mxu0 0.0
    %2274 = vmatpush1.msra.mxu0 0.0
    %2275 = vmatprep.subr.mxu0 0.0
    %2276 = vmatpush1.msra.mxu0 0.0
    %2277 = vmatprep.subr.mxu0 0.0
    %2278 = vmatpush1.msra.mxu0 0.0
    %2279 = vmatprep.subr.mxu0 0.0
    %2280 = vmatpush1.msra.mxu0 0.0
    %2281 = vmatprep.subr.mxu0 0.0
    %2282 = vmatpush1.msra.mxu0 0.0
    %2283 = vmatprep.subr.mxu0 0.0
    %2284 = vmatpush1.msra.mxu0 0.0
    %2285 = vmatprep.subr.mxu0 0.0
    %2286 = vmatpush1.msra.mxu0 0.0
    %2287 = vmatprep.subr.mxu0 0.0
    %2288 = vmatpush1.msra.mxu0 0.0
    %2289 = vmatprep.mubr.f32.mxu0 0.0
    %2290 = vmatmul.mubr.f32.gmra.mrb[0].mxu0 %v2217
    %v2291 = vpop.f32.mrb[0].mxu0
    %v2292 = vadd.f32 0.0, %v2291
    %v2293 = vpop.f32.mrb[0].mxu0
    %v2294 = vadd.f32 0.0, %v2293
    %2295 = vdwg.mxu0
    %2296 = vmatprep.subr.mxu0 0.0
    %2297 = vmatpush1.msra.mxu0 %v2223
    %2298 = vmatprep.subr.mxu0 0.0
    %2299 = vmatpush1.msra.mxu0 0.0
    %2300 = vmatprep.subr.mxu0 0.0
    %2301 = vmatpush1.msra.mxu0 0.0
    %2302 = vmatprep.subr.mxu0 0.0
    %2303 = vmatpush1.msra.mxu0 0.0
    %2304 = vmatprep.subr.mxu0 0.0
    %2305 = vmatpush1.msra.mxu0 0.0
    %2306 = vmatprep.subr.mxu0 0.0
    %2307 = vmatpush1.msra.mxu0 0.0
    %2308 = vmatprep.subr.mxu0 0.0
    %2309 = vmatpush1.msra.mxu0 0.0
    %2310 = vmatprep.subr.mxu0 0.0
    %2311 = vmatpush1.msra.mxu0 0.0
    %2312 = vmatprep.subr.mxu0 0.0
    %2313 = vmatpush1.msra.mxu0 0.0
    %2314 = vmatprep.subr.mxu0 0.0
    %2315 = vmatpush1.msra.mxu0 0.0
    %2316 = vmatprep.subr.mxu0 0.0
    %2317 = vmatpush1.msra.mxu0 0.0
    %2318 = vmatprep.subr.mxu0 0.0
    %2319 = vmatpush1.msra.mxu0 0.0
    %2320 = vmatprep.subr.mxu0 0.0
    %2321 = vmatpush1.msra.mxu0 0.0
    %2322 = vmatprep.subr.mxu0 0.0
    %2323 = vmatpush1.msra.mxu0 0.0
    %2324 = vmatprep.subr.mxu0 0.0
    %2325 = vmatpush1.msra.mxu0 0.0
    %2326 = vmatprep.subr.mxu0 0.0
    %2327 = vmatpush1.msra.mxu0 0.0
    %2328 = vmatprep.subr.mxu0 0.0
    %2329 = vmatpush1.msra.mxu0 0.0
    %2330 = vmatprep.subr.mxu0 0.0
    %2331 = vmatpush1.msra.mxu0 0.0
    %2332 = vmatprep.subr.mxu0 0.0
    %2333 = vmatpush1.msra.mxu0 0.0
    %2334 = vmatprep.subr.mxu0 0.0
    %2335 = vmatpush1.msra.mxu0 0.0
    %2336 = vmatprep.subr.mxu0 0.0
    %2337 = vmatpush1.msra.mxu0 0.0
    %2338 = vmatprep.subr.mxu0 0.0
    %2339 = vmatpush1.msra.mxu0 0.0
    %2340 = vmatprep.subr.mxu0 0.0
    %2341 = vmatpush1.msra.mxu0 0.0
    %2342 = vmatprep.subr.mxu0 0.0
    %2343 = vmatpush1.msra.mxu0 0.0
    %2344 = vmatprep.subr.mxu0 0.0
    %2345 = vmatpush1.msra.mxu0 0.0
    %2346 = vmatprep.subr.mxu0 0.0
    %2347 = vmatpush1.msra.mxu0 0.0
    %2348 = vmatprep.subr.mxu0 0.0
    %2349 = vmatpush1.msra.mxu0 0.0
    %2350 = vmatprep.subr.mxu0 0.0
    %2351 = vmatpush1.msra.mxu0 0.0
    %2352 = vmatprep.subr.mxu0 0.0
    %2353 = vmatpush1.msra.mxu0 0.0
    %2354 = vmatprep.subr.mxu0 0.0
    %2355 = vmatpush1.msra.mxu0 0.0
    %2356 = vmatprep.subr.mxu0 0.0
    %2357 = vmatpush1.msra.mxu0 0.0
    %2358 = vmatprep.subr.mxu0 0.0
    %2359 = vmatpush1.msra.mxu0 0.0
    %2360 = vmatprep.mubr.f32.mxu0 0.0
    %2361 = vmatmul.mubr.f32.gmra.mrb[0].mxu0 %v2217
    %v2362 = vpop.f32.mrb[0].mxu0
    %v2363 = vadd.f32 0.0, %v2362
    %v2364 = vpop.f32.mrb[0].mxu0
    %2365 = vdwg.mxu0
    %v2366 = vadd.f32 %v2199, %v2292
    %v2367 = vadd.f32 %v2200, %v2294
    %v2368 = vadd.f32 %v2201, %v2363
    %v2369 = vld [vmem:[%s858] sm:$0xff]
    %v2370 = vld [vmem:[%s1542] sm:$0xff]
    %v2371 = vld [vmem:[%s1542 + $0x8] sm:$0xf]
    %v2374 = vcombine.high %v2370, %v2370
    %2375 = vrot.lane.b32.xlu0 %v2370, 108
    %v2376 = vpop.permute.xlu0 %2375
    %2377 = vrot.lane.b32.xlu0 %v2374, 108
    %v2378 = vpop.permute.xlu0 %2377
    %2379 = vrot.lane.b32.xlu0 %v2371, 108
    %v2380 = vpop.permute.xlu0 %2379
    %v2381 = vsel %vm871, %v2376, %v2378
    %v2382 = vsel %vm871, %v2378, %v2380
    %v2384 = vsel %vm27, %v2369, 0
    %v2386 = vsel %vm31, %v2381, 0
    %v2388 = vsel %vm31, %v2382, 0
    %v2390 = vsel %vm31, %v2380, 0
    %2392 = vmatprep.subr.mxu0 %v2388
    %2393 = vmatpush1.msra.mxu0 %v2386
    %2394 = vmatprep.subr.mxu0 0.0
    %2395 = vmatpush1.msra.mxu0 0.0
    %2396 = vmatprep.subr.mxu0 0.0
    %2397 = vmatpush1.msra.mxu0 0.0
    %2398 = vmatprep.subr.mxu0 0.0
    %2399 = vmatpush1.msra.mxu0 0.0
    %2400 = vmatprep.subr.mxu0 0.0
    %2401 = vmatpush1.msra.mxu0 0.0
    %2402 = vmatprep.subr.mxu0 0.0
    %2403 = vmatpush1.msra.mxu0 0.0
    %2404 = vmatprep.subr.mxu0 0.0
    %2405 = vmatpush1.msra.mxu0 0.0
    %2406 = vmatprep.subr.mxu0 0.0
    %2407 = vmatpush1.msra.mxu0 0.0
    %2408 = vmatprep.subr.mxu0 0.0
    %2409 = vmatpush1.msra.mxu0 0.0
    %2410 = vmatprep.subr.mxu0 0.0
    %2411 = vmatpush1.msra.mxu0 0.0
    %2412 = vmatprep.subr.mxu0 0.0
    %2413 = vmatpush1.msra.mxu0 0.0
    %2414 = vmatprep.subr.mxu0 0.0
    %2415 = vmatpush1.msra.mxu0 0.0
    %2416 = vmatprep.subr.mxu0 0.0
    %2417 = vmatpush1.msra.mxu0 0.0
    %2418 = vmatprep.subr.mxu0 0.0
    %2419 = vmatpush1.msra.mxu0 0.0
    %2420 = vmatprep.subr.mxu0 0.0
    %2421 = vmatpush1.msra.mxu0 0.0
    %2422 = vmatprep.subr.mxu0 0.0
    %2423 = vmatpush1.msra.mxu0 0.0
    %2424 = vmatprep.subr.mxu0 0.0
    %2425 = vmatpush1.msra.mxu0 0.0
    %2426 = vmatprep.subr.mxu0 0.0
    %2427 = vmatpush1.msra.mxu0 0.0
    %2428 = vmatprep.subr.mxu0 0.0
    %2429 = vmatpush1.msra.mxu0 0.0
    %2430 = vmatprep.subr.mxu0 0.0
    %2431 = vmatpush1.msra.mxu0 0.0
    %2432 = vmatprep.subr.mxu0 0.0
    %2433 = vmatpush1.msra.mxu0 0.0
    %2434 = vmatprep.subr.mxu0 0.0
    %2435 = vmatpush1.msra.mxu0 0.0
    %2436 = vmatprep.subr.mxu0 0.0
    %2437 = vmatpush1.msra.mxu0 0.0
    %2438 = vmatprep.subr.mxu0 0.0
    %2439 = vmatpush1.msra.mxu0 0.0
    %2440 = vmatprep.subr.mxu0 0.0
    %2441 = vmatpush1.msra.mxu0 0.0
    %2442 = vmatprep.subr.mxu0 0.0
    %2443 = vmatpush1.msra.mxu0 0.0
    %2444 = vmatprep.subr.mxu0 0.0
    %2445 = vmatpush1.msra.mxu0 0.0
    %2446 = vmatprep.subr.mxu0 0.0
    %2447 = vmatpush1.msra.mxu0 0.0
    %2448 = vmatprep.subr.mxu0 0.0
    %2449 = vmatpush1.msra.mxu0 0.0
    %2450 = vmatprep.subr.mxu0 0.0
    %2451 = vmatpush1.msra.mxu0 0.0
    %2452 = vmatprep.subr.mxu0 0.0
    %2453 = vmatpush1.msra.mxu0 0.0
    %2454 = vmatprep.subr.mxu0 0.0
    %2455 = vmatpush1.msra.mxu0 0.0
    %2456 = vmatprep.mubr.f32.mxu0 0.0
    %2457 = vmatmul.mubr.f32.gmra.mrb[0].mxu0 %v2384
    %v2458 = vpop.f32.mrb[0].mxu0
    %v2459 = vadd.f32 0.0, %v2458
    %v2460 = vpop.f32.mrb[0].mxu0
    %v2461 = vadd.f32 0.0, %v2460
    %2462 = vdwg.mxu0
    %2463 = vmatprep.subr.mxu0 0.0
    %2464 = vmatpush1.msra.mxu0 %v2390
    %2465 = vmatprep.subr.mxu0 0.0
    %2466 = vmatpush1.msra.mxu0 0.0
    %2467 = vmatprep.subr.mxu0 0.0
    %2468 = vmatpush1.msra.mxu0 0.0
    %2469 = vmatprep.subr.mxu0 0.0
    %2470 = vmatpush1.msra.mxu0 0.0
    %2471 = vmatprep.subr.mxu0 0.0
    %2472 = vmatpush1.msra.mxu0 0.0
    %2473 = vmatprep.subr.mxu0 0.0
    %2474 = vmatpush1.msra.mxu0 0.0
    %2475 = vmatprep.subr.mxu0 0.0
    %2476 = vmatpush1.msra.mxu0 0.0
    %2477 = vmatprep.subr.mxu0 0.0
    %2478 = vmatpush1.msra.mxu0 0.0
    %2479 = vmatprep.subr.mxu0 0.0
    %2480 = vmatpush1.msra.mxu0 0.0
    %2481 = vmatprep.subr.mxu0 0.0
    %2482 = vmatpush1.msra.mxu0 0.0
    %2483 = vmatprep.subr.mxu0 0.0
    %2484 = vmatpush1.msra.mxu0 0.0
    %2485 = vmatprep.subr.mxu0 0.0
    %2486 = vmatpush1.msra.mxu0 0.0
    %2487 = vmatprep.subr.mxu0 0.0
    %2488 = vmatpush1.msra.mxu0 0.0
    %2489 = vmatprep.subr.mxu0 0.0
    %2490 = vmatpush1.msra.mxu0 0.0
    %2491 = vmatprep.subr.mxu0 0.0
    %2492 = vmatpush1.msra.mxu0 0.0
    %2493 = vmatprep.subr.mxu0 0.0
    %2494 = vmatpush1.msra.mxu0 0.0
    %2495 = vmatprep.subr.mxu0 0.0
    %2496 = vmatpush1.msra.mxu0 0.0
    %2497 = vmatprep.subr.mxu0 0.0
    %2498 = vmatpush1.msra.mxu0 0.0
    %2499 = vmatprep.subr.mxu0 0.0
    %2500 = vmatpush1.msra.mxu0 0.0
    %2501 = vmatprep.subr.mxu0 0.0
    %2502 = vmatpush1.msra.mxu0 0.0
    %2503 = vmatprep.subr.mxu0 0.0
    %2504 = vmatpush1.msra.mxu0 0.0
    %2505 = vmatprep.subr.mxu0 0.0
    %2506 = vmatpush1.msra.mxu0 0.0
    %2507 = vmatprep.subr.mxu0 0.0
    %2508 = vmatpush1.msra.mxu0 0.0
    %2509 = vmatprep.subr.mxu0 0.0
    %2510 = vmatpush1.msra.mxu0 0.0
    %2511 = vmatprep.subr.mxu0 0.0
    %2512 = vmatpush1.msra.mxu0 0.0
    %2513 = vmatprep.subr.mxu0 0.0
    %2514 = vmatpush1.msra.mxu0 0.0
    %2515 = vmatprep.subr.mxu0 0.0
    %2516 = vmatpush1.msra.mxu0 0.0
    %2517 = vmatprep.subr.mxu0 0.0
    %2518 = vmatpush1.msra.mxu0 0.0
    %2519 = vmatprep.subr.mxu0 0.0
    %2520 = vmatpush1.msra.mxu0 0.0
    %2521 = vmatprep.subr.mxu0 0.0
    %2522 = vmatpush1.msra.mxu0 0.0
    %2523 = vmatprep.subr.mxu0 0.0
    %2524 = vmatpush1.msra.mxu0 0.0
    %2525 = vmatprep.subr.mxu0 0.0
    %2526 = vmatpush1.msra.mxu0 0.0
    %2527 = vmatprep.mubr.f32.mxu0 0.0
    %2528 = vmatmul.mubr.f32.gmra.mrb[0].mxu0 %v2384
    %v2529 = vpop.f32.mrb[0].mxu0
    %v2530 = vadd.f32 0.0, %v2529
    %v2531 = vpop.f32.mrb[0].mxu0
    %2532 = vdwg.mxu0
    %v2533 = vadd.f32 %v2366, %v2459
    %v2534 = vadd.f32 %v2367, %v2461
    %v2535 = vadd.f32 %v2368, %v2530
    %v2536 = vld [vmem:[%s1027] sm:$0xff]
    %v2537 = vld [vmem:[%s1542] sm:$0xff]
    %v2538 = vld [vmem:[%s1542 + $0x8] sm:$0xf]
    %v2541 = vcombine.high %v2537, %v2537
    %2542 = vrot.lane.b32.xlu0 %v2537, 92
    %v2543 = vpop.permute.xlu0 %2542
    %2544 = vrot.lane.b32.xlu0 %v2541, 92
    %v2545 = vpop.permute.xlu0 %2544
    %2546 = vrot.lane.b32.xlu0 %v2538, 92
    %v2547 = vpop.permute.xlu0 %2546
    %v2548 = vsel %vm1040, %v2543, %v2545
    %v2549 = vsel %vm1040, %v2545, %v2547
    %v2551 = vsel %vm27, %v2536, 0
    %v2553 = vsel %vm31, %v2548, 0
    %v2555 = vsel %vm31, %v2549, 0
    %v2557 = vsel %vm31, %v2547, 0
    %2559 = vmatprep.subr.mxu0 %v2555
    %2560 = vmatpush1.msra.mxu0 %v2553
    %2561 = vmatprep.subr.mxu0 0.0
    %2562 = vmatpush1.msra.mxu0 0.0
    %2563 = vmatprep.subr.mxu0 0.0
    %2564 = vmatpush1.msra.mxu0 0.0
    %2565 = vmatprep.subr.mxu0 0.0
    %2566 = vmatpush1.msra.mxu0 0.0
    %2567 = vmatprep.subr.mxu0 0.0
    %2568 = vmatpush1.msra.mxu0 0.0
    %2569 = vmatprep.subr.mxu0 0.0
    %2570 = vmatpush1.msra.mxu0 0.0
    %2571 = vmatprep.subr.mxu0 0.0
    %2572 = vmatpush1.msra.mxu0 0.0
    %2573 = vmatprep.subr.mxu0 0.0
    %2574 = vmatpush1.msra.mxu0 0.0
    %2575 = vmatprep.subr.mxu0 0.0
    %2576 = vmatpush1.msra.mxu0 0.0
    %2577 = vmatprep.subr.mxu0 0.0
    %2578 = vmatpush1.msra.mxu0 0.0
    %2579 = vmatprep.subr.mxu0 0.0
    %2580 = vmatpush1.msra.mxu0 0.0
    %2581 = vmatprep.subr.mxu0 0.0
    %2582 = vmatpush1.msra.mxu0 0.0
    %2583 = vmatprep.subr.mxu0 0.0
    %2584 = vmatpush1.msra.mxu0 0.0
    %2585 = vmatprep.subr.mxu0 0.0
    %2586 = vmatpush1.msra.mxu0 0.0
    %2587 = vmatprep.subr.mxu0 0.0
    %2588 = vmatpush1.msra.mxu0 0.0
    %2589 = vmatprep.subr.mxu0 0.0
    %2590 = vmatpush1.msra.mxu0 0.0
    %2591 = vmatprep.subr.mxu0 0.0
    %2592 = vmatpush1.msra.mxu0 0.0
    %2593 = vmatprep.subr.mxu0 0.0
    %2594 = vmatpush1.msra.mxu0 0.0
    %2595 = vmatprep.subr.mxu0 0.0
    %2596 = vmatpush1.msra.mxu0 0.0
    %2597 = vmatprep.subr.mxu0 0.0
    %2598 = vmatpush1.msra.mxu0 0.0
    %2599 = vmatprep.subr.mxu0 0.0
    %2600 = vmatpush1.msra.mxu0 0.0
    %2601 = vmatprep.subr.mxu0 0.0
    %2602 = vmatpush1.msra.mxu0 0.0
    %2603 = vmatprep.subr.mxu0 0.0
    %2604 = vmatpush1.msra.mxu0 0.0
    %2605 = vmatprep.subr.mxu0 0.0
    %2606 = vmatpush1.msra.mxu0 0.0
    %2607 = vmatprep.subr.mxu0 0.0
    %2608 = vmatpush1.msra.mxu0 0.0
    %2609 = vmatprep.subr.mxu0 0.0
    %2610 = vmatpush1.msra.mxu0 0.0
    %2611 = vmatprep.subr.mxu0 0.0
    %2612 = vmatpush1.msra.mxu0 0.0
    %2613 = vmatprep.subr.mxu0 0.0
    %2614 = vmatpush1.msra.mxu0 0.0
    %2615 = vmatprep.subr.mxu0 0.0
    %2616 = vmatpush1.msra.mxu0 0.0
    %2617 = vmatprep.subr.mxu0 0.0
    %2618 = vmatpush1.msra.mxu0 0.0
    %2619 = vmatprep.subr.mxu0 0.0
    %2620 = vmatpush1.msra.mxu0 0.0
    %2621 = vmatprep.subr.mxu0 0.0
    %2622 = vmatpush1.msra.mxu0 0.0
    %2623 = vmatprep.mubr.f32.mxu0 0.0
    %2624 = vmatmul.mubr.f32.gmra.mrb[0].mxu0 %v2551
    %v2625 = vpop.f32.mrb[0].mxu0
    %v2626 = vadd.f32 0.0, %v2625
    %v2627 = vpop.f32.mrb[0].mxu0
    %v2628 = vadd.f32 0.0, %v2627
    %2629 = vdwg.mxu0
    %2630 = vmatprep.subr.mxu0 0.0
    %2631 = vmatpush1.msra.mxu0 %v2557
    %2632 = vmatprep.subr.mxu0 0.0
    %2633 = vmatpush1.msra.mxu0 0.0
    %2634 = vmatprep.subr.mxu0 0.0
    %2635 = vmatpush1.msra.mxu0 0.0
    %2636 = vmatprep.subr.mxu0 0.0
    %2637 = vmatpush1.msra.mxu0 0.0
    %2638 = vmatprep.subr.mxu0 0.0
    %2639 = vmatpush1.msra.mxu0 0.0
    %2640 = vmatprep.subr.mxu0 0.0
    %2641 = vmatpush1.msra.mxu0 0.0
    %2642 = vmatprep.subr.mxu0 0.0
    %2643 = vmatpush1.msra.mxu0 0.0
    %2644 = vmatprep.subr.mxu0 0.0
    %2645 = vmatpush1.msra.mxu0 0.0
    %2646 = vmatprep.subr.mxu0 0.0
    %2647 = vmatpush1.msra.mxu0 0.0
    %2648 = vmatprep.subr.mxu0 0.0
    %2649 = vmatpush1.msra.mxu0 0.0
    %2650 = vmatprep.subr.mxu0 0.0
    %2651 = vmatpush1.msra.mxu0 0.0
    %2652 = vmatprep.subr.mxu0 0.0
    %2653 = vmatpush1.msra.mxu0 0.0
    %2654 = vmatprep.subr.mxu0 0.0
    %2655 = vmatpush1.msra.mxu0 0.0
    %2656 = vmatprep.subr.mxu0 0.0
    %2657 = vmatpush1.msra.mxu0 0.0
    %2658 = vmatprep.subr.mxu0 0.0
    %2659 = vmatpush1.msra.mxu0 0.0
    %2660 = vmatprep.subr.mxu0 0.0
    %2661 = vmatpush1.msra.mxu0 0.0
    %2662 = vmatprep.subr.mxu0 0.0
    %2663 = vmatpush1.msra.mxu0 0.0
    %2664 = vmatprep.subr.mxu0 0.0
    %2665 = vmatpush1.msra.mxu0 0.0
    %2666 = vmatprep.subr.mxu0 0.0
    %2667 = vmatpush1.msra.mxu0 0.0
    %2668 = vmatprep.subr.mxu0 0.0
    %2669 = vmatpush1.msra.mxu0 0.0
    %2670 = vmatprep.subr.mxu0 0.0
    %2671 = vmatpush1.msra.mxu0 0.0
    %2672 = vmatprep.subr.mxu0 0.0
    %2673 = vmatpush1.msra.mxu0 0.0
    %2674 = vmatprep.subr.mxu0 0.0
    %2675 = vmatpush1.msra.mxu0 0.0
    %2676 = vmatprep.subr.mxu0 0.0
    %2677 = vmatpush1.msra.mxu0 0.0
    %2678 = vmatprep.subr.mxu0 0.0
    %2679 = vmatpush1.msra.mxu0 0.0
    %2680 = vmatprep.subr.mxu0 0.0
    %2681 = vmatpush1.msra.mxu0 0.0
    %2682 = vmatprep.subr.mxu0 0.0
    %2683 = vmatpush1.msra.mxu0 0.0
    %2684 = vmatprep.subr.mxu0 0.0
    %2685 = vmatpush1.msra.mxu0 0.0
    %2686 = vmatprep.subr.mxu0 0.0
    %2687 = vmatpush1.msra.mxu0 0.0
    %2688 = vmatprep.subr.mxu0 0.0
    %2689 = vmatpush1.msra.mxu0 0.0
    %2690 = vmatprep.subr.mxu0 0.0
    %2691 = vmatpush1.msra.mxu0 0.0
    %2692 = vmatprep.subr.mxu0 0.0
    %2693 = vmatpush1.msra.mxu0 0.0
    %2694 = vmatprep.mubr.f32.mxu0 0.0
    %2695 = vmatmul.mubr.f32.gmra.mrb[0].mxu0 %v2551
    %v2696 = vpop.f32.mrb[0].mxu0
    %v2697 = vadd.f32 0.0, %v2696
    %v2698 = vpop.f32.mrb[0].mxu0
    %2699 = vdwg.mxu0
    %v2700 = vadd.f32 %v2533, %v2626
    %v2701 = vadd.f32 %v2534, %v2628
    %v2702 = vadd.f32 %v2535, %v2697
    %v2703 = vld [vmem:[%s1196] sm:$0xff]
    %v2704 = vld [vmem:[%s1542] sm:$0xff]
    %v2705 = vld [vmem:[%s1542 + $0x8] sm:$0xf]
    %v2708 = vcombine.high %v2704, %v2704
    %2709 = vrot.lane.b32.xlu0 %v2704, 91
    %v2710 = vpop.permute.xlu0 %2709
    %2711 = vrot.lane.b32.xlu0 %v2708, 91
    %v2712 = vpop.permute.xlu0 %2711
    %2713 = vrot.lane.b32.xlu0 %v2705, 91
    %v2714 = vpop.permute.xlu0 %2713
    %v2715 = vsel %vm1209, %v2710, %v2712
    %v2716 = vsel %vm1209, %v2712, %v2714
    %v2718 = vsel %vm27, %v2703, 0
    %v2720 = vsel %vm31, %v2715, 0
    %v2722 = vsel %vm31, %v2716, 0
    %v2724 = vsel %vm31, %v2714, 0
    %2726 = vmatprep.subr.mxu0 %v2722
    %2727 = vmatpush1.msra.mxu0 %v2720
    %2728 = vmatprep.subr.mxu0 0.0
    %2729 = vmatpush1.msra.mxu0 0.0
    %2730 = vmatprep.subr.mxu0 0.0
    %2731 = vmatpush1.msra.mxu0 0.0
    %2732 = vmatprep.subr.mxu0 0.0
    %2733 = vmatpush1.msra.mxu0 0.0
    %2734 = vmatprep.subr.mxu0 0.0
    %2735 = vmatpush1.msra.mxu0 0.0
    %2736 = vmatprep.subr.mxu0 0.0
    %2737 = vmatpush1.msra.mxu0 0.0
    %2738 = vmatprep.subr.mxu0 0.0
    %2739 = vmatpush1.msra.mxu0 0.0
    %2740 = vmatprep.subr.mxu0 0.0
    %2741 = vmatpush1.msra.mxu0 0.0
    %2742 = vmatprep.subr.mxu0 0.0
    %2743 = vmatpush1.msra.mxu0 0.0
    %2744 = vmatprep.subr.mxu0 0.0
    %2745 = vmatpush1.msra.mxu0 0.0
    %2746 = vmatprep.subr.mxu0 0.0
    %2747 = vmatpush1.msra.mxu0 0.0
    %2748 = vmatprep.subr.mxu0 0.0
    %2749 = vmatpush1.msra.mxu0 0.0
    %2750 = vmatprep.subr.mxu0 0.0
    %2751 = vmatpush1.msra.mxu0 0.0
    %2752 = vmatprep.subr.mxu0 0.0
    %2753 = vmatpush1.msra.mxu0 0.0
    %2754 = vmatprep.subr.mxu0 0.0
    %2755 = vmatpush1.msra.mxu0 0.0
    %2756 = vmatprep.subr.mxu0 0.0
    %2757 = vmatpush1.msra.mxu0 0.0
    %2758 = vmatprep.subr.mxu0 0.0
    %2759 = vmatpush1.msra.mxu0 0.0
    %2760 = vmatprep.subr.mxu0 0.0
    %2761 = vmatpush1.msra.mxu0 0.0
    %2762 = vmatprep.subr.mxu0 0.0
    %2763 = vmatpush1.msra.mxu0 0.0
    %2764 = vmatprep.subr.mxu0 0.0
    %2765 = vmatpush1.msra.mxu0 0.0
    %2766 = vmatprep.subr.mxu0 0.0
    %2767 = vmatpush1.msra.mxu0 0.0
    %2768 = vmatprep.subr.mxu0 0.0
    %2769 = vmatpush1.msra.mxu0 0.0
    %2770 = vmatprep.subr.mxu0 0.0
    %2771 = vmatpush1.msra.mxu0 0.0
    %2772 = vmatprep.subr.mxu0 0.0
    %2773 = vmatpush1.msra.mxu0 0.0
    %2774 = vmatprep.subr.mxu0 0.0
    %2775 = vmatpush1.msra.mxu0 0.0
    %2776 = vmatprep.subr.mxu0 0.0
    %2777 = vmatpush1.msra.mxu0 0.0
    %2778 = vmatprep.subr.mxu0 0.0
    %2779 = vmatpush1.msra.mxu0 0.0
    %2780 = vmatprep.subr.mxu0 0.0
    %2781 = vmatpush1.msra.mxu0 0.0
    %2782 = vmatprep.subr.mxu0 0.0
    %2783 = vmatpush1.msra.mxu0 0.0
    %2784 = vmatprep.subr.mxu0 0.0
    %2785 = vmatpush1.msra.mxu0 0.0
    %2786 = vmatprep.subr.mxu0 0.0
    %2787 = vmatpush1.msra.mxu0 0.0
    %2788 = vmatprep.subr.mxu0 0.0
    %2789 = vmatpush1.msra.mxu0 0.0
    %2790 = vmatprep.mubr.f32.mxu0 0.0
    %2791 = vmatmul.mubr.f32.gmra.mrb[0].mxu0 %v2718
    %v2792 = vpop.f32.mrb[0].mxu0
    %v2793 = vadd.f32 0.0, %v2792
    %v2794 = vpop.f32.mrb[0].mxu0
    %v2795 = vadd.f32 0.0, %v2794
    %2796 = vdwg.mxu0
    %2797 = vmatprep.subr.mxu0 0.0
    %2798 = vmatpush1.msra.mxu0 %v2724
    %2799 = vmatprep.subr.mxu0 0.0
    %2800 = vmatpush1.msra.mxu0 0.0
    %2801 = vmatprep.subr.mxu0 0.0
    %2802 = vmatpush1.msra.mxu0 0.0
    %2803 = vmatprep.subr.mxu0 0.0
    %2804 = vmatpush1.msra.mxu0 0.0
    %2805 = vmatprep.subr.mxu0 0.0
    %2806 = vmatpush1.msra.mxu0 0.0
    %2807 = vmatprep.subr.mxu0 0.0
    %2808 = vmatpush1.msra.mxu0 0.0
    %2809 = vmatprep.subr.mxu0 0.0
    %2810 = vmatpush1.msra.mxu0 0.0
    %2811 = vmatprep.subr.mxu0 0.0
    %2812 = vmatpush1.msra.mxu0 0.0
    %2813 = vmatprep.subr.mxu0 0.0
    %2814 = vmatpush1.msra.mxu0 0.0
    %2815 = vmatprep.subr.mxu0 0.0
    %2816 = vmatpush1.msra.mxu0 0.0
    %2817 = vmatprep.subr.mxu0 0.0
    %2818 = vmatpush1.msra.mxu0 0.0
    %2819 = vmatprep.subr.mxu0 0.0
    %2820 = vmatpush1.msra.mxu0 0.0
    %2821 = vmatprep.subr.mxu0 0.0
    %2822 = vmatpush1.msra.mxu0 0.0
    %2823 = vmatprep.subr.mxu0 0.0
    %2824 = vmatpush1.msra.mxu0 0.0
    %2825 = vmatprep.subr.mxu0 0.0
    %2826 = vmatpush1.msra.mxu0 0.0
    %2827 = vmatprep.subr.mxu0 0.0
    %2828 = vmatpush1.msra.mxu0 0.0
    %2829 = vmatprep.subr.mxu0 0.0
    %2830 = vmatpush1.msra.mxu0 0.0
    %2831 = vmatprep.subr.mxu0 0.0
    %2832 = vmatpush1.msra.mxu0 0.0
    %2833 = vmatprep.subr.mxu0 0.0
    %2834 = vmatpush1.msra.mxu0 0.0
    %2835 = vmatprep.subr.mxu0 0.0
    %2836 = vmatpush1.msra.mxu0 0.0
    %2837 = vmatprep.subr.mxu0 0.0
    %2838 = vmatpush1.msra.mxu0 0.0
    %2839 = vmatprep.subr.mxu0 0.0
    %2840 = vmatpush1.msra.mxu0 0.0
    %2841 = vmatprep.subr.mxu0 0.0
    %2842 = vmatpush1.msra.mxu0 0.0
    %2843 = vmatprep.subr.mxu0 0.0
    %2844 = vmatpush1.msra.mxu0 0.0
    %2845 = vmatprep.subr.mxu0 0.0
    %2846 = vmatpush1.msra.mxu0 0.0
    %2847 = vmatprep.subr.mxu0 0.0
    %2848 = vmatpush1.msra.mxu0 0.0
    %2849 = vmatprep.subr.mxu0 0.0
    %2850 = vmatpush1.msra.mxu0 0.0
    %2851 = vmatprep.subr.mxu0 0.0
    %2852 = vmatpush1.msra.mxu0 0.0
    %2853 = vmatprep.subr.mxu0 0.0
    %2854 = vmatpush1.msra.mxu0 0.0
    %2855 = vmatprep.subr.mxu0 0.0
    %2856 = vmatpush1.msra.mxu0 0.0
    %2857 = vmatprep.subr.mxu0 0.0
    %2858 = vmatpush1.msra.mxu0 0.0
    %2859 = vmatprep.subr.mxu0 0.0
    %2860 = vmatpush1.msra.mxu0 0.0
    %2861 = vmatprep.mubr.f32.mxu0 0.0
    %2862 = vmatmul.mubr.f32.gmra.mrb[0].mxu0 %v2718
    %v2863 = vpop.f32.mrb[0].mxu0
    %v2864 = vadd.f32 0.0, %v2863
    %v2865 = vpop.f32.mrb[0].mxu0
    %2866 = vdwg.mxu0
    %v2867 = vadd.f32 %v2700, %v2793
    %v2868 = vadd.f32 %v2701, %v2795
    %v2869 = vadd.f32 %v2702, %v2864
    %v2870 = vld [vmem:[%s1365] sm:$0xff]
    %v2871 = vld [vmem:[%s1542] sm:$0xff]
    %v2872 = vld [vmem:[%s1542 + $0x8] sm:$0xf]
    %v2875 = vcombine.high %v2871, %v2871
    %2876 = vrot.lane.b32.xlu0 %v2871, 90
    %v2877 = vpop.permute.xlu0 %2876
    %2878 = vrot.lane.b32.xlu0 %v2875, 90
    %v2879 = vpop.permute.xlu0 %2878
    %2880 = vrot.lane.b32.xlu0 %v2872, 90
    %v2881 = vpop.permute.xlu0 %2880
    %v2882 = vsel %vm1378, %v2877, %v2879
    %v2883 = vsel %vm1378, %v2879, %v2881
    %v2885 = vsel %vm27, %v2870, 0
    %v2887 = vsel %vm31, %v2882, 0
    %v2889 = vsel %vm31, %v2883, 0
    %v2891 = vsel %vm31, %v2881, 0
    %2893 = vmatprep.subr.mxu0 %v2889
    %2894 = vmatpush1.msra.mxu0 %v2887
    %2895 = vmatprep.subr.mxu0 0.0
    %2896 = vmatpush1.msra.mxu0 0.0
    %2897 = vmatprep.subr.mxu0 0.0
    %2898 = vmatpush1.msra.mxu0 0.0
    %2899 = vmatprep.subr.mxu0 0.0
    %2900 = vmatpush1.msra.mxu0 0.0
    %2901 = vmatprep.subr.mxu0 0.0
    %2902 = vmatpush1.msra.mxu0 0.0
    %2903 = vmatprep.subr.mxu0 0.0
    %2904 = vmatpush1.msra.mxu0 0.0
    %2905 = vmatprep.subr.mxu0 0.0
    %2906 = vmatpush1.msra.mxu0 0.0
    %2907 = vmatprep.subr.mxu0 0.0
    %2908 = vmatpush1.msra.mxu0 0.0
    %2909 = vmatprep.subr.mxu0 0.0
    %2910 = vmatpush1.msra.mxu0 0.0
    %2911 = vmatprep.subr.mxu0 0.0
    %2912 = vmatpush1.msra.mxu0 0.0
    %2913 = vmatprep.subr.mxu0 0.0
    %2914 = vmatpush1.msra.mxu0 0.0
    %2915 = vmatprep.subr.mxu0 0.0
    %2916 = vmatpush1.msra.mxu0 0.0
    %2917 = vmatprep.subr.mxu0 0.0
    %2918 = vmatpush1.msra.mxu0 0.0
    %2919 = vmatprep.subr.mxu0 0.0
    %2920 = vmatpush1.msra.mxu0 0.0
    %2921 = vmatprep.subr.mxu0 0.0
    %2922 = vmatpush1.msra.mxu0 0.0
    %2923 = vmatprep.subr.mxu0 0.0
    %2924 = vmatpush1.msra.mxu0 0.0
    %2925 = vmatprep.subr.mxu0 0.0
    %2926 = vmatpush1.msra.mxu0 0.0
    %2927 = vmatprep.subr.mxu0 0.0
    %2928 = vmatpush1.msra.mxu0 0.0
    %2929 = vmatprep.subr.mxu0 0.0
    %2930 = vmatpush1.msra.mxu0 0.0
    %2931 = vmatprep.subr.mxu0 0.0
    %2932 = vmatpush1.msra.mxu0 0.0
    %2933 = vmatprep.subr.mxu0 0.0
    %2934 = vmatpush1.msra.mxu0 0.0
    %2935 = vmatprep.subr.mxu0 0.0
    %2936 = vmatpush1.msra.mxu0 0.0
    %2937 = vmatprep.subr.mxu0 0.0
    %2938 = vmatpush1.msra.mxu0 0.0
    %2939 = vmatprep.subr.mxu0 0.0
    %2940 = vmatpush1.msra.mxu0 0.0
    %2941 = vmatprep.subr.mxu0 0.0
    %2942 = vmatpush1.msra.mxu0 0.0
    %2943 = vmatprep.subr.mxu0 0.0
    %2944 = vmatpush1.msra.mxu0 0.0
    %2945 = vmatprep.subr.mxu0 0.0
    %2946 = vmatpush1.msra.mxu0 0.0
    %2947 = vmatprep.subr.mxu0 0.0
    %2948 = vmatpush1.msra.mxu0 0.0
    %2949 = vmatprep.subr.mxu0 0.0
    %2950 = vmatpush1.msra.mxu0 0.0
    %2951 = vmatprep.subr.mxu0 0.0
    %2952 = vmatpush1.msra.mxu0 0.0
    %2953 = vmatprep.subr.mxu0 0.0
    %2954 = vmatpush1.msra.mxu0 0.0
    %2955 = vmatprep.subr.mxu0 0.0
    %2956 = vmatpush1.msra.mxu0 0.0
    %2957 = vmatprep.mubr.f32.mxu0 0.0
    %2958 = vmatmul.mubr.f32.gmra.mrb[0].mxu0 %v2885
    %v2959 = vpop.f32.mrb[0].mxu0
    %v2960 = vadd.f32 0.0, %v2959
    %v2961 = vpop.f32.mrb[0].mxu0
    %v2962 = vadd.f32 0.0, %v2961
    %2963 = vdwg.mxu0
    %2964 = vmatprep.subr.mxu0 0.0
    %2965 = vmatpush1.msra.mxu0 %v2891
    %2966 = vmatprep.subr.mxu0 0.0
    %2967 = vmatpush1.msra.mxu0 0.0
    %2968 = vmatprep.subr.mxu0 0.0
    %2969 = vmatpush1.msra.mxu0 0.0
    %2970 = vmatprep.subr.mxu0 0.0
    %2971 = vmatpush1.msra.mxu0 0.0
    %2972 = vmatprep.subr.mxu0 0.0
    %2973 = vmatpush1.msra.mxu0 0.0
    %2974 = vmatprep.subr.mxu0 0.0
    %2975 = vmatpush1.msra.mxu0 0.0
    %2976 = vmatprep.subr.mxu0 0.0
    %2977 = vmatpush1.msra.mxu0 0.0
    %2978 = vmatprep.subr.mxu0 0.0
    %2979 = vmatpush1.msra.mxu0 0.0
    %2980 = vmatprep.subr.mxu0 0.0
    %2981 = vmatpush1.msra.mxu0 0.0
    %2982 = vmatprep.subr.mxu0 0.0
    %2983 = vmatpush1.msra.mxu0 0.0
    %2984 = vmatprep.subr.mxu0 0.0
    %2985 = vmatpush1.msra.mxu0 0.0
    %2986 = vmatprep.subr.mxu0 0.0
    %2987 = vmatpush1.msra.mxu0 0.0
    %2988 = vmatprep.subr.mxu0 0.0
    %2989 = vmatpush1.msra.mxu0 0.0
    %2990 = vmatprep.subr.mxu0 0.0
    %2991 = vmatpush1.msra.mxu0 0.0
    %2992 = vmatprep.subr.mxu0 0.0
    %2993 = vmatpush1.msra.mxu0 0.0
    %2994 = vmatprep.subr.mxu0 0.0
    %2995 = vmatpush1.msra.mxu0 0.0
    %2996 = vmatprep.subr.mxu0 0.0
    %2997 = vmatpush1.msra.mxu0 0.0
    %2998 = vmatprep.subr.mxu0 0.0
    %2999 = vmatpush1.msra.mxu0 0.0
    %3000 = vmatprep.subr.mxu0 0.0
    %3001 = vmatpush1.msra.mxu0 0.0
    %3002 = vmatprep.subr.mxu0 0.0
    %3003 = vmatpush1.msra.mxu0 0.0
    %3004 = vmatprep.subr.mxu0 0.0
    %3005 = vmatpush1.msra.mxu0 0.0
    %3006 = vmatprep.subr.mxu0 0.0
    %3007 = vmatpush1.msra.mxu0 0.0
    %3008 = vmatprep.subr.mxu0 0.0
    %3009 = vmatpush1.msra.mxu0 0.0
    %3010 = vmatprep.subr.mxu0 0.0
    %3011 = vmatpush1.msra.mxu0 0.0
    %3012 = vmatprep.subr.mxu0 0.0
    %3013 = vmatpush1.msra.mxu0 0.0
    %3014 = vmatprep.subr.mxu0 0.0
    %3015 = vmatpush1.msra.mxu0 0.0
    %3016 = vmatprep.subr.mxu0 0.0
    %3017 = vmatpush1.msra.mxu0 0.0
    %3018 = vmatprep.subr.mxu0 0.0
    %3019 = vmatpush1.msra.mxu0 0.0
    %3020 = vmatprep.subr.mxu0 0.0
    %3021 = vmatpush1.msra.mxu0 0.0
    %3022 = vmatprep.subr.mxu0 0.0
    %3023 = vmatpush1.msra.mxu0 0.0
    %3024 = vmatprep.subr.mxu0 0.0
    %3025 = vmatpush1.msra.mxu0 0.0
    %3026 = vmatprep.subr.mxu0 0.0
    %3027 = vmatpush1.msra.mxu0 0.0
    %3028 = vmatprep.mubr.f32.mxu0 0.0
    %3029 = vmatmul.mubr.f32.gmra.mrb[0].mxu0 %v2885
    %v3030 = vpop.f32.mrb[0].mxu0
    %v3031 = vadd.f32 0.0, %v3030
    %v3032 = vpop.f32.mrb[0].mxu0
    %3033 = vdwg.mxu0
    %v3034 = vadd.f32 %v2867, %v2960
    %v3035 = vadd.f32 %v2868, %v2962
    %v3036 = vadd.f32 %v2869, %v3031
    %v3037 = vmax.f32 %v3034, 0.0
    %v3038 = vmax.f32 %v3035, 0.0
    %v3039 = vmax.f32 %v3036, 0.0
    %s3040 = scalar_lea.vmem [#allocation2], 24
    %3041 = vst [vmem:[%s3040] sm:$0xff] %v3037
    %3042 = vst [vmem:[%s3040 + $0x8] sm:$0xff] %v3038
    %3043 = vst.msk [vmem:[%s3040 + $0x10] sm:$0xff] %vm1539, %v3039
    // Predicated region
    $region14: #{tpu_custom_call.1} parent=1 // pred_check
      _
    $region15: #{tpu_custom_call.1} parent=1 // pred_check_branch
      %3045 = sbr.rel (0) target = $region17
    $region16: #{tpu_custom_call.1} parent=1 // pred_region
      %s3047 = ssub.s32 768, 768
      %3048 = vsyncadd [#allocation3], %s3047
      %s3049 = sshll.u32 [#allocation2], 4
      %s3050 = int_to_ptr.vmem [resolvable:$true] %s3049
      %3055 = dma.vmem_to_hbm [thread:$0]  %s3050, 768, %s3, [#allocation3], 384, 384, 24
    $region17: #{tpu_custom_call.1} parent=1 // pred_fallthru
      _
    // Predicated region
    $region18: #{tpu_custom_call.1} parent=1 // pred_check
      _
    $region19: #{tpu_custom_call.1} parent=1 // pred_check_branch
      %3057 = sbr.rel (0) target = $region21
    $region20: #{tpu_custom_call.1} parent=1 // pred_region
      %3058 = dma.done [#allocation3], 768
    $region21: #{tpu_custom_call.1} parent=1 // pred_fallthru
      _
    %3059 = vsyncpa [#allocation3], 1

</llo_original>
